<compile_context>
chip_gen: v6e
topology: v6e:2x2x1
jax: 0.10.0
libtpu: 0.0.40
codegen_flags: <defaults>
</compile_context>

<pallas_src>
import functools
import math

import jax
import jax.numpy as jnp
from jax.experimental import pallas as pl
from jax.experimental.pallas import tpu as pltpu


# ---------------------------------------------------------------------------
# helpers
# ---------------------------------------------------------------------------
def _row_tile(n: int, target: int = 512) -> int:
    """Largest multiple-of-8 row tile <= target that divides n AND leaves >=2
    grid steps (so v7x's two TensorCores both get work); falls back to n."""
    for t in (target, 256, 128, 64, 32, 16, 8):
        if t < n and n % t == 0:
            return t
    return n


# ---------------------------------------------------------------------------
# Fused decoder-layer kernel: one grid step == one batch element.
# ---------------------------------------------------------------------------
def _decoder_layer_kernel(x_ref, mem_ref, tt_ref, ts_ref,
                          ln0_ref, ln1_ref, ln2_ref,
                          wqkv_ref, bqkv_ref, wo0_ref, bo0_ref,
                          wq1_ref, bq1_ref, wkv1_ref, bkv1_ref, wo1_ref, bo1_ref,
                          w1_ref, b1_ref, w2_ref, b2_ref,
                          o_ref, *, num_heads):
    f32 = jnp.float32
    d = x_ref.shape[-1]
    dk = d // num_heads
    scale = 1.0 / math.sqrt(dk)
    wdt = wqkv_ref.dtype                     # MXU operand dtype (bf16 or f32)

    def ln(v, p_ref):                        # p_ref: (2, D) = [gamma; beta], f32
        mu = jnp.mean(v, axis=-1, keepdims=True)
        vc = v - mu
        var = jnp.mean(vc * vc, axis=-1, keepdims=True)
        return vc * jax.lax.rsqrt(var + 1e-5) * p_ref[0:1, :] + p_ref[1:2, :]

    def mm(a, w_ref, b_ref=None):            # MXU matmul, f32 accumulation
        y = jnp.dot(a.astype(wdt), w_ref[...], preferred_element_type=f32)
        if b_ref is not None:
            y = y + b_ref[...]
        return y

    def attn_proj(q, k, v, bias, wo_ref, bo_ref):
        # Heads sliced on the lane axis; the head merge is fused into Wo:
        #   concat_h(O_h) @ Wo == sum_h O_h @ Wo[h*dk:(h+1)*dk, :]
        out = bo_ref[...]                    # (1, D) broadcasts over rows
        for h in range(num_heads):           # num_heads is a compile-time constant
            lo, hi = h * dk, (h + 1) * dk
            qh = q[:, lo:hi].astype(wdt)
            kh = k[:, lo:hi].astype(wdt)
            s = jax.lax.dot_general(qh, kh, (((1,), (1,)), ((), ())),
                                    preferred_element_type=f32) + bias
            p = jnp.exp(s - jnp.max(s, axis=-1, keepdims=True))
            p = p * pl.reciprocal(jnp.sum(p, axis=-1, keepdims=True), approx=True)
            oh = jnp.dot(p.astype(wdt), v[:, lo:hi].astype(wdt),
                         preferred_element_type=f32)
            out = out + jnp.dot(oh.astype(wdt), wo_ref[lo:hi, :],
                                preferred_element_type=f32)
        return out

    x = x_ref[...].astype(f32)               # (S, D) residual stream, stays on-chip

    # --- sublayer 0: masked multi-head self-attention (fused LN -> QKV) ---
    nx = ln(x, ln0_ref)
    qkv = mm(nx, wqkv_ref, bqkv_ref)          # (S, 3D) fused Q|K|V projection
    x = x + attn_proj(qkv[:, 0:d] * scale, qkv[:, d:2 * d], qkv[:, 2 * d:3 * d],
                      tt_ref[...], wo0_ref, bo0_ref)

    # --- sublayer 1: multi-head encoder-decoder attention (fused K|V) ---
    nx = ln(x, ln1_ref)
    q = mm(nx, wq1_ref, bq1_ref) * scale
    kv = mm(mem_ref[...].astype(f32), wkv1_ref, bkv1_ref)    # (S_src, 2D)
    x = x + attn_proj(q, kv[:, 0:d], kv[:, d:2 * d],
                      ts_ref[...], wo1_ref, bo1_ref)

    # --- sublayer 2: position-wise feed-forward (fused LN -> FFN -> residual) ---
    nx = ln(x, ln2_ref)
    hdn = jnp.maximum(mm(nx, w1_ref, b1_ref), 0.0)
    x = x + mm(hdn, w2_ref, b2_ref)

    o_ref[...] = x.astype(o_ref.dtype)


def _decoder_layer(x, memory, tt_bias, ts_bias, lp, num_heads, mxu_dtype):
    B, S, D = x.shape
    S_src = memory.shape[1]
    DFF = lp["W1"].shape[1]
    f32, wdt = jnp.float32, mxu_dtype

    sa, ca = lp["self_attn"], lp["src_attn"]
    # Fused / packed parameters (weights in the MXU dtype, bias & LN params f32).
    wqkv = jnp.concatenate([sa["Wq"], sa["Wk"], sa["Wv"]], axis=1).astype(wdt)
    bqkv = jnp.concatenate([sa["bq"], sa["bk"], sa["bv"]]).reshape(1, 3 * D).astype(f32)
    wo0, bo0 = sa["Wo"].astype(wdt), sa["bo"].reshape(1, D).astype(f32)
    wq1, bq1 = ca["Wq"].astype(wdt), ca["bq"].reshape(1, D).astype(f32)
    wkv1 = jnp.concatenate([ca["Wk"], ca["Wv"]], axis=1).astype(wdt)
    bkv1 = jnp.concatenate([ca["bk"], ca["bv"]]).reshape(1, 2 * D).astype(f32)
    wo1, bo1 = ca["Wo"].astype(wdt), ca["bo"].reshape(1, D).astype(f32)
    w1, b1 = lp["W1"].astype(wdt), lp["b1"].reshape(1, DFF).astype(f32)
    w2, b2 = lp["W2"].astype(wdt), lp["b2"].reshape(1, D).astype(f32)
    ln0 = jnp.stack([lp["ln0_g"], lp["ln0_b"]]).astype(f32)
    ln1 = jnp.stack([lp["ln1_g"], lp["ln1_b"]]).astype(f32)
    ln2 = jnp.stack([lp["ln2_g"], lp["ln2_b"]]).astype(f32)

    resident = [ln0, ln1, ln2, wqkv, bqkv, wo0, bo0, wq1, bq1,
                wkv1, bkv1, wo1, bo1, w1, b1, w2, b2]
    _const2 = lambda b: (0, 0)   # resident: DMA'd once, stays in VMEM across the grid
    in_specs = [
        pl.BlockSpec((None, S, D), lambda b: (b, 0, 0)),          # x[b]
        pl.BlockSpec((None, S_src, D), lambda b: (b, 0, 0)),      # memory[b]
        pl.BlockSpec((None, S, S), lambda b: (b, 0, 0)),          # tgt_tgt bias[b]
        pl.BlockSpec((None, S, S_src), lambda b: (b, 0, 0)),      # tgt_src bias[b]
    ] + [pl.BlockSpec(a.shape, _const2) for a in resident]

    flops = B * (2 * S * D * 3 * D + 4 * S * S * D + 2 * S * D * D          # self-attn
                 + 2 * S * D * D + 4 * S_src * D * D + 4 * S * S_src * D
                 + 2 * S * D * D                                            # cross-attn
                 + 4 * S * D * DFF)                                         # FFN
    cost = pl.CostEstimate(
        flops=flops,
        transcendentals=B * S * (S + S_src),
        bytes_accessed=(2 * B * S * D + B * S_src * D + B * S * (S + S_src)) * 4
                       + sum(int(a.size) for a in resident) * jnp.dtype(wdt).itemsize,
    )
    return pl.pallas_call(
        functools.partial(_decoder_layer_kernel, num_heads=num_heads),
        out_shape=jax.ShapeDtypeStruct((B, S, D), x.dtype),
        grid_spec=pltpu.PrefetchScalarGridSpec(
            num_scalar_prefetch=0,
            grid=(B,),
            in_specs=in_specs,
            out_specs=pl.BlockSpec((None, S, D), lambda b: (b, 0, 0)),
        ),
        compiler_params=pltpu.CompilerParams(
            dimension_semantics=("parallel",),
            vmem_limit_bytes=32 * 1024 * 1024,   # explicit for v7x's 64 MiB VMEM
        ),
        cost_estimate=cost,
    )(x, memory, tt_bias, ts_bias, *resident)


# ---------------------------------------------------------------------------
# Final LayerNorm (no consuming matmul -> standalone, row-tiled, lane-dense)
# ---------------------------------------------------------------------------
def _final_layernorm_kernel(x_ref, gb_ref, o_ref):
    x = x_ref[...].astype(jnp.float32)
    mu = jnp.mean(x, axis=-1, keepdims=True)
    xc = x - mu
    var = jnp.mean(xc * xc, axis=-1, keepdims=True)
    y = xc * jax.lax.rsqrt(var + 1e-5) * gb_ref[0:1, :] + gb_ref[1:2, :]
    o_ref[...] = y.astype(o_ref.dtype)


def final_layernorm(x, gamma, beta):
    B, S, D = x.shape
    n = B * S
    tr = _row_tile(n)
    x2 = x.reshape(n, D)
    gb = jnp.stack([gamma, beta]).astype(jnp.float32)
    out = pl.pallas_call(
        _final_layernorm_kernel,
        out_shape=jax.ShapeDtypeStruct((n, D), x.dtype),
        grid_spec=pltpu.PrefetchScalarGridSpec(
            num_scalar_prefetch=0,
            grid=(n // tr,),
            in_specs=[pl.BlockSpec((tr, D), lambda i: (i, 0)),
                      pl.BlockSpec((2, D), lambda i: (0, 0))],   # gamma/beta resident
            out_specs=pl.BlockSpec((tr, D), lambda i: (i, 0)),
        ),
        compiler_params=pltpu.CompilerParams(dimension_semantics=("parallel",)),
    )(x2, gb)
    return out.reshape(B, S, D)


# ---------------------------------------------------------------------------
# Decoder forward
# ---------------------------------------------------------------------------
def decoder_forward(params, x, memory, tgt_src_mask, tgt_tgt_mask, num_heads,
                    mxu_dtype=jnp.bfloat16):
    # Additive mask biases: 0 where attending, -1e9 where masked (same softmax
    # result as masked_fill(-1e9)); avoids a per-element compare+select in-kernel.
    # Note: a fully-masked row degenerates exactly as in the PyTorch reference.
    tt_bias = ((tgt_tgt_mask - 1.0) * 1e9).astype(jnp.float32)
    ts_bias = ((tgt_src_mask - 1.0) * 1e9).astype(jnp.float32)
    for lp in params["layers"]:
        x = _decoder_layer(x, memory, tt_bias, ts_bias, lp, num_heads, mxu_dtype)
    return final_layernorm(x, params["norm_g"], params["norm_b"])


# ---------------------------------------------------------------------------
# Parameter construction (deterministic) and pure-JAX reference
# ---------------------------------------------------------------------------
def init_decoder_params(key, num_layers, dim_model, num_heads, dim_ff):
    assert dim_model % num_heads == 0

    def dense(k, fan_in, fan_out):
        kw, kb = jax.random.split(k)
        lim = 1.0 / math.sqrt(fan_in)
        w = jax.random.uniform(kw, (fan_in, fan_out), jnp.float32, -lim, lim)
        b = jax.random.uniform(kb, (fan_out,), jnp.float32, -lim, lim)
        return w, b

    def attn_params(k):
        ks = jax.random.split(k, 4)
        wq, bq = dense(ks[0], dim_model, dim_model)
        wk, bk = dense(ks[1], dim_model, dim_model)
        wv, bv = dense(ks[2], dim_model, dim_model)
        wo, bo = dense(ks[3], dim_model, dim_model)
        return {"Wq": wq, "bq": bq, "Wk": wk, "bk": bk,
                "Wv": wv, "bv": bv, "Wo": wo, "bo": bo}

    k_self, k_src, k_ff1, k_ff2 = jax.random.split(key, 4)
    w1, b1 = dense(k_ff1, dim_model, dim_ff)
    w2, b2 = dense(k_ff2, dim_ff, dim_model)
    ones = jnp.ones((dim_model,), jnp.float32)
    zeros = jnp.zeros((dim_model,), jnp.float32)
    layer = {
        "self_attn": attn_params(k_self),
        "src_attn": attn_params(k_src),
        "W1": w1, "b1": b1, "W2": w2, "b2": b2,
        "ln0_g": ones, "ln0_b": zeros,
        "ln1_g": ones, "ln1_b": zeros,
        "ln2_g": ones, "ln2_b": zeros,
    }
    # clones(): the PyTorch Decoder deep-copies one layer -> identical initial weights.
    return {"layers": [layer] * num_layers, "norm_g": ones, "norm_b": zeros}


def reference_decoder(params, x, memory, tgt_src_mask, tgt_tgt_mask, num_heads):
    def ln(v, g, b):
        mu = jnp.mean(v, axis=-1, keepdims=True)
        var = jnp.mean((v - mu) ** 2, axis=-1, keepdims=True)
        return (v - mu) / jnp.sqrt(var + 1e-5) * g + b

    def mha(p, q_in, kv_in, mask):
        bsz, sq, d = q_in.shape
        skv = kv_in.shape[1]
        dk = d // num_heads
        q = (q_in @ p["Wq"] + p["bq"]).reshape(bsz, sq, num_heads, dk).transpose(0, 2, 1, 3)
        k = (kv_in @ p["Wk"] + p["bk"]).reshape(bsz, skv, num_heads, dk).transpose(0, 2, 1, 3)
        v = (kv_in @ p["Wv"] + p["bv"]).reshape(bsz, skv, num_heads, dk).transpose(0, 2, 1, 3)
        s = jnp.einsum("bhqd,bhkd->bhqk", q, k) / math.sqrt(dk)
        s = jnp.where(mask[:, None] == 0, -1e9, s)
        pa = jax.nn.softmax(s, axis=-1)
        o = jnp.einsum("bhqk,bhkd->bhqd", pa, v)
        o = o.transpose(0, 2, 1, 3).reshape(bsz, sq, d)
        return o @ p["Wo"] + p["bo"]

    for lp in params["layers"]:
        nx = ln(x, lp["ln0_g"], lp["ln0_b"])
        x = x + mha(lp["self_attn"], nx, nx, tgt_tgt_mask)
        nx = ln(x, lp["ln1_g"], lp["ln1_b"])
        x = x + mha(lp["src_attn"], nx, memory, tgt_src_mask)
        nx = ln(x, lp["ln2_g"], lp["ln2_b"])
        x = x + (jnp.maximum(nx @ lp["W1"] + lp["b1"], 0.0) @ lp["W2"] + lp["b2"])
    return ln(x, params["norm_g"], params["norm_b"])


if __name__ == "__main__":
    B, S_TGT, S_SRC = 2, 8, 8
    DIM, HEADS, DFF, LAYERS = 32, 2, 64, 2

    key = jax.random.PRNGKey(0)
    k_x, k_m, k_p = jax.random.split(key, 3)
    x = jax.random.normal(k_x, (B, S_TGT, DIM), jnp.float32)
    memory = jax.random.normal(k_m, (B, S_SRC, DIM), jnp.float32)

    tril = jnp.tril(jnp.ones((S_TGT, S_TGT), jnp.float32))
    tgt_tgt_mask = jnp.broadcast_to(tril[None, :, :], (B, S_TGT, S_TGT))
    tgt_src_mask = jnp.ones((B, S_TGT, S_SRC), jnp.float32)

    params = init_decoder_params(k_p, LAYERS, DIM, HEADS, DFF)
    ref = reference_decoder(params, x, memory, tgt_src_mask, tgt_tgt_mask, HEADS)

    # Exact-semantics check: f32 MXU operands.
    fwd_f32 = jax.jit(functools.partial(decoder_forward, params, num_heads=HEADS,
                                        mxu_dtype=jnp.float32))
    out = jax.block_until_ready(fwd_f32(x, memory, tgt_src_mask, tgt_tgt_mask))
    assert out.shape == (B, S_TGT, DIM)
    diff = float(jnp.max(jnp.abs(out - ref)))
    assert jnp.allclose(out, ref, atol=2e-2, rtol=2e-2), \
        f"f32 path mismatch vs reference (max abs diff {diff})"

    # Performance path (v6e/v7x feedback): bf16 MXU operands, f32 accumulation.
    fwd_bf16 = jax.jit(functools.partial(decoder_forward, params, num_heads=HEADS,
                                         mxu_dtype=jnp.bfloat16))
    out_bf = jax.block_until_ready(fwd_bf16(x, memory, tgt_src_mask, tgt_tgt_mask))
    diff_bf = float(jnp.max(jnp.abs(out_bf - ref)))
    assert jnp.allclose(out_bf, ref, atol=7e-2, rtol=7e-2), \
        f"bf16 path mismatch vs reference (max abs diff {diff_bf})"

    print("KERNEL_OK")
</pallas_src>

<mosaic_0001>
module attributes {stable_mosaic.version = 11 : i64} {
  func.func @_final_layernorm_kernel(%arg0: i32, %arg1: memref<8x32xf32, #tpu.memory_space<vmem>>, %arg2: memref<2x32xf32, #tpu.memory_space<vmem>>, %arg3: memref<8x32xf32, #tpu.memory_space<vmem>>) attributes {dimension_semantics = [#tpu.dimension_semantics<parallel>], iteration_bounds = array<i64: 2>, scalar_prefetch = 0 : i64, scratch_operands = 0 : i64, tpu.core_type = #tpu.core_type<tc>, window_params = [{transform_indices = @transform_0, window_bounds = array<i64: 8, 32>}, {pipeline_mode = #tpu.pipeline_mode<synchronous>, transform_indices = @transform_1, window_bounds = array<i64: 2, 32>}, {transform_indices = @transform_2, window_bounds = array<i64: 8, 32>}]} {
    %c0 = arith.constant 0 : index
    %c0_0 = arith.constant 0 : index
    %0 = vector.load %arg1[%c0, %c0_0] : memref<8x32xf32, #tpu.memory_space<vmem>>, vector<8x32xf32>
    %cst = arith.constant dense<0.000000e+00> : vector<8xf32>
    %1 = vector.multi_reduction <add>, %0, %cst [1] : vector<8x32xf32> to vector<8xf32>
    %2 = vector.shape_cast %1 : vector<8xf32> to vector<8x1xf32>
    %cst_1 = arith.constant 3.200000e+01 : f32
    %3 = vector.broadcast %cst_1 : f32 to vector<8x1xf32>
    %4 = arith.divf %2, %3 : vector<8x1xf32>
    %5 = vector.broadcast %4 : vector<8x1xf32> to vector<8x32xf32>
    %6 = arith.subf %0, %5 : vector<8x32xf32>
    %7 = arith.mulf %6, %6 : vector<8x32xf32>
    %cst_2 = arith.constant dense<0.000000e+00> : vector<8xf32>
    %8 = vector.multi_reduction <add>, %7, %cst_2 [1] : vector<8x32xf32> to vector<8xf32>
    %9 = vector.shape_cast %8 : vector<8xf32> to vector<8x1xf32>
    %cst_3 = arith.constant 3.200000e+01 : f32
    %10 = vector.broadcast %cst_3 : f32 to vector<8x1xf32>
    %11 = arith.divf %9, %10 : vector<8x1xf32>
    %cst_4 = arith.constant 9.99999974E-6 : f32
    %12 = vector.broadcast %cst_4 : f32 to vector<8x1xf32>
    %13 = arith.addf %11, %12 : vector<8x1xf32>
    %14 = math.rsqrt %13 : vector<8x1xf32>
    %15 = vector.broadcast %14 : vector<8x1xf32> to vector<8x32xf32>
    %16 = arith.mulf %6, %15 : vector<8x32xf32>
    %c0_5 = arith.constant 0 : index
    %c0_6 = arith.constant 0 : index
    %17 = vector.load %arg2[%c0_5, %c0_6] : memref<2x32xf32, #tpu.memory_space<vmem>>, vector<1x32xf32>
    %18 = vector.broadcast %17 : vector<1x32xf32> to vector<8x32xf32>
    %19 = arith.mulf %16, %18 : vector<8x32xf32>
    %c1 = arith.constant 1 : index
    %c0_7 = arith.constant 0 : index
    %20 = vector.load %arg2[%c1, %c0_7] : memref<2x32xf32, #tpu.memory_space<vmem>>, vector<1x32xf32>
    %21 = vector.broadcast %20 : vector<1x32xf32> to vector<8x32xf32>
    %22 = arith.addf %19, %21 : vector<8x32xf32>
    %c0_8 = arith.constant 0 : index
    %c0_9 = arith.constant 0 : index
    %23 = vector.load %arg3[%c0_8, %c0_9] : memref<8x32xf32, #tpu.memory_space<vmem>>, vector<8x32xf32>
    tpu.vector_store %arg3[%c0_8, %c0_9], %22 {strides = array<i32>} : memref<8x32xf32, #tpu.memory_space<vmem>>, vector<8x32xf32>,
    return
  }
  func.func @transform_0(%arg0: i32) -> (i32, i32) {
    %c0_i32 = arith.constant 0 : i32
    %c0_i32_0 = arith.constant 0 : i32
    return %arg0, %c0_i32 : i32, i32
  }
  func.func @transform_1(%arg0: i32) -> (i32, i32) {
    %c0_i32 = arith.constant 0 : i32
    %c0_i32_0 = arith.constant 0 : i32
    %c0_i32_1 = arith.constant 0 : i32
    return %c0_i32, %c0_i32_0 : i32, i32
  }
  func.func @transform_2(%arg0: i32) -> (i32, i32) {
    %c0_i32 = arith.constant 0 : i32
    %c0_i32_0 = arith.constant 0 : i32
    return %arg0, %c0_i32 : i32, i32
  }
}

module attributes {stable_mosaic.version = 11 : i64} {
  func.func @_decoder_layer_kernel(%arg0: i32, %arg1: memref<1x8x32xf32, #tpu.memory_space<vmem>>, %arg2: memref<1x8x32xf32, #tpu.memory_space<vmem>>, %arg3: memref<1x8x8xf32, #tpu.memory_space<vmem>>, %arg4: memref<1x8x8xf32, #tpu.memory_space<vmem>>, %arg5: memref<2x32xf32, #tpu.memory_space<vmem>>, %arg6: memref<2x32xf32, #tpu.memory_space<vmem>>, %arg7: memref<2x32xf32, #tpu.memory_space<vmem>>, %arg8: memref<32x96xf32, #tpu.memory_space<vmem>>, %arg9: memref<1x96xf32, #tpu.memory_space<vmem>>, %arg10: memref<32x32xf32, #tpu.memory_space<vmem>>, %arg11: memref<1x32xf32, #tpu.memory_space<vmem>>, %arg12: memref<32x32xf32, #tpu.memory_space<vmem>>, %arg13: memref<1x32xf32, #tpu.memory_space<vmem>>, %arg14: memref<32x64xf32, #tpu.memory_space<vmem>>, %arg15: memref<1x64xf32, #tpu.memory_space<vmem>>, %arg16: memref<32x32xf32, #tpu.memory_space<vmem>>, %arg17: memref<1x32xf32, #tpu.memory_space<vmem>>, %arg18: memref<32x64xf32, #tpu.memory_space<vmem>>, %arg19: memref<1x64xf32, #tpu.memory_space<vmem>>, %arg20: memref<64x32xf32, #tpu.memory_space<vmem>>, %arg21: memref<1x32xf32, #tpu.memory_space<vmem>>, %arg22: memref<1x8x32xf32, #tpu.memory_space<vmem>>) attributes {dimension_semantics = [#tpu.dimension_semantics<parallel>], iteration_bounds = array<i64: 2>, scalar_prefetch = 0 : i64, scratch_operands = 0 : i64, tpu.core_type = #tpu.core_type<tc>, window_params = [{transform_indices = @transform_0, window_bounds = array<i64: 1, 8, 32>}, {transform_indices = @transform_1, window_bounds = array<i64: 1, 8, 32>}, {transform_indices = @transform_2, window_bounds = array<i64: 1, 8, 8>}, {transform_indices = @transform_3, window_bounds = array<i64: 1, 8, 8>}, {pipeline_mode = #tpu.pipeline_mode<synchronous>, transform_indices = @transform_4, window_bounds = array<i64: 2, 32>}, {pipeline_mode = #tpu.pipeline_mode<synchronous>, transform_indices = @transform_5, window_bounds = array<i64: 2, 32>}, {pipeline_mode = #tpu.pipeline_mode<synchronous>, transform_indices = @transform_6, window_bounds = array<i64: 2, 32>}, {pipeline_mode = #tpu.pipeline_mode<synchronous>, transform_indices = @transform_7, window_bounds = array<i64: 32, 96>}, {pipeline_mode = #tpu.pipeline_mode<synchronous>, transform_indices = @transform_8, window_bounds = array<i64: 1, 96>}, {pipeline_mode = #tpu.pipeline_mode<synchronous>, transform_indices = @transform_9, window_bounds = array<i64: 32, 32>}, {pipeline_mode = #tpu.pipeline_mode<synchronous>, transform_indices = @transform_10, window_bounds = array<i64: 1, 32>}, {pipeline_mode = #tpu.pipeline_mode<synchronous>, transform_indices = @transform_11, window_bounds = array<i64: 32, 32>}, {pipeline_mode = #tpu.pipeline_mode<synchronous>, transform_indices = @transform_12, window_bounds = array<i64: 1, 32>}, {pipeline_mode = #tpu.pipeline_mode<synchronous>, transform_indices = @transform_13, window_bounds = array<i64: 32, 64>}, {pipeline_mode = #tpu.pipeline_mode<synchronous>, transform_indices = @transform_14, window_bounds = array<i64: 1, 64>}, {pipeline_mode = #tpu.pipeline_mode<synchronous>, transform_indices = @transform_15, window_bounds = array<i64: 32, 32>}, {pipeline_mode = #tpu.pipeline_mode<synchronous>, transform_indices = @transform_16, window_bounds = array<i64: 1, 32>}, {pipeline_mode = #tpu.pipeline_mode<synchronous>, transform_indices = @transform_17, window_bounds = array<i64: 32, 64>}, {pipeline_mode = #tpu.pipeline_mode<synchronous>, transform_indices = @transform_18, window_bounds = array<i64: 1, 64>}, {pipeline_mode = #tpu.pipeline_mode<synchronous>, transform_indices = @transform_19, window_bounds = array<i64: 64, 32>}, {pipeline_mode = #tpu.pipeline_mode<synchronous>, transform_indices = @transform_20, window_bounds = array<i64: 1, 32>}, {transform_indices = @transform_21, window_bounds = array<i64: 1, 8, 32>}]} {
    %c0 = arith.constant 0 : index
    %c0_0 = arith.constant 0 : index
    %c0_1 = arith.constant 0 : index
    %0 = vector.load %arg1[%c0, %c0_0, %c0_1] : memref<1x8x32xf32, #tpu.memory_space<vmem>>, vector<1x8x32xf32>
    %1 = vector.shape_cast %0 : vector<1x8x32xf32> to vector<8x32xf32>
    %cst = arith.constant dense<0.000000e+00> : vector<8xf32>
    %2 = vector.multi_reduction <add>, %1, %cst [1] : vector<8x32xf32> to vector<8xf32>
    %3 = vector.shape_cast %2 : vector<8xf32> to vector<8x1xf32>
    %cst_2 = arith.constant 3.200000e+01 : f32
    %4 = vector.broadcast %cst_2 : f32 to vector<8x1xf32>
    %5 = arith.divf %3, %4 : vector<8x1xf32>
    %6 = vector.broadcast %5 : vector<8x1xf32> to vector<8x32xf32>
    %7 = arith.subf %1, %6 : vector<8x32xf32>
    %8 = arith.mulf %7, %7 : vector<8x32xf32>
    %cst_3 = arith.constant dense<0.000000e+00> : vector<8xf32>
    %9 = vector.multi_reduction <add>, %8, %cst_3 [1] : vector<8x32xf32> to vector<8xf32>
    %10 = vector.shape_cast %9 : vector<8xf32> to vector<8x1xf32>
    %cst_4 = arith.constant 3.200000e+01 : f32
    %11 = vector.broadcast %cst_4 : f32 to vector<8x1xf32>
    %12 = arith.divf %10, %11 : vector<8x1xf32>
    %cst_5 = arith.constant 9.99999974E-6 : f32
    %13 = vector.broadcast %cst_5 : f32 to vector<8x1xf32>
    %14 = arith.addf %12, %13 : vector<8x1xf32>
    %15 = math.rsqrt %14 : vector<8x1xf32>
    %16 = vector.broadcast %15 : vector<8x1xf32> to vector<8x32xf32>
    %17 = arith.mulf %7, %16 : vector<8x32xf32>
    %c0_6 = arith.constant 0 : index
    %c0_7 = arith.constant 0 : index
    %18 = vector.load %arg5[%c0_6, %c0_7] : memref<2x32xf32, #tpu.memory_space<vmem>>, vector<1x32xf32>
    %19 = vector.broadcast %18 : vector<1x32xf32> to vector<8x32xf32>
    %20 = arith.mulf %17, %19 : vector<8x32xf32>
    %c1 = arith.constant 1 : index
    %c0_8 = arith.constant 0 : index
    %21 = vector.load %arg5[%c1, %c0_8] : memref<2x32xf32, #tpu.memory_space<vmem>>, vector<1x32xf32>
    %22 = vector.broadcast %21 : vector<1x32xf32> to vector<8x32xf32>
    %23 = arith.addf %20, %22 : vector<8x32xf32>
    %c0_9 = arith.constant 0 : index
    %c0_10 = arith.constant 0 : index
    %24 = vector.load %arg8[%c0_9, %c0_10] : memref<32x96xf32, #tpu.memory_space<vmem>>, vector<32x96xf32>
    %cst_11 = arith.constant dense<0.000000e+00> : vector<8x96xf32>
    %25 = tpu.matmul %23, %24, %cst_11 {dimension_numbers = #tpu.dot_dimension_numbers<[1], [0], [0], [1], [0, 0, 1, 1], [], []>} : vector<8x32xf32>, vector<32x96xf32>, vector<8x96xf32> -> vector<8x96xf32>
    %c0_12 = arith.constant 0 : index
    %c0_13 = arith.constant 0 : index
    %26 = vector.load %arg9[%c0_12, %c0_13] : memref<1x96xf32, #tpu.memory_space<vmem>>, vector<1x96xf32>
    %27 = vector.broadcast %26 : vector<1x96xf32> to vector<8x96xf32>
    %28 = arith.addf %25, %27 : vector<8x96xf32>
    %29 = vector.extract_strided_slice %28 {offsets = [0, 0], sizes = [8, 32], strides = [1, 1]} : vector<8x96xf32> to vector<8x32xf32>
    %cst_14 = arith.constant 2.500000e-01 : f32
    %30 = vector.broadcast %cst_14 : f32 to vector<8x32xf32>
    %31 = arith.mulf %29, %30 : vector<8x32xf32>
    %32 = vector.extract_strided_slice %28 {offsets = [0, 32], sizes = [8, 32], strides = [1, 1]} : vector<8x96xf32> to vector<8x32xf32>
    %33 = vector.extract_strided_slice %28 {offsets = [0, 64], sizes = [8, 32], strides = [1, 1]} : vector<8x96xf32> to vector<8x32xf32>
    %c0_15 = arith.constant 0 : index
    %c0_16 = arith.constant 0 : index
    %c0_17 = arith.constant 0 : index
    %34 = vector.load %arg3[%c0_15, %c0_16, %c0_17] : memref<1x8x8xf32, #tpu.memory_space<vmem>>, vector<1x8x8xf32>
    %35 = vector.shape_cast %34 : vector<1x8x8xf32> to vector<8x8xf32>
    %c0_18 = arith.constant 0 : index
    %c0_19 = arith.constant 0 : index
    %36 = vector.load %arg11[%c0_18, %c0_19] : memref<1x32xf32, #tpu.memory_space<vmem>>, vector<1x32xf32>
    %37 = vector.extract_strided_slice %31 {offsets = [0, 0], sizes = [8, 16], strides = [1, 1]} : vector<8x32xf32> to vector<8x16xf32>
    %38 = vector.extract_strided_slice %32 {offsets = [0, 0], sizes = [8, 16], strides = [1, 1]} : vector<8x32xf32> to vector<8x16xf32>
    %cst_20 = arith.constant dense<0.000000e+00> : vector<8x8xf32>
    %39 = tpu.matmul %37, %38, %cst_20 {dimension_numbers = #tpu.dot_dimension_numbers<[1], [1], [0], [0], [0, 0, 1, 0], [], []>} : vector<8x16xf32>, vector<8x16xf32>, vector<8x8xf32> -> vector<8x8xf32>
    %40 = arith.addf %39, %35 : vector<8x8xf32>
    %cst_21 = arith.constant dense<0xFF800000> : vector<8xf32>
    %41 = vector.multi_reduction <maximumf>, %40, %cst_21 [1] : vector<8x8xf32> to vector<8xf32>
    %42 = vector.shape_cast %41 : vector<8xf32> to vector<8x1xf32>
    %43 = vector.broadcast %42 : vector<8x1xf32> to vector<8x8xf32>
    %44 = arith.subf %40, %43 : vector<8x8xf32>
    %45 = math.exp %44 : vector<8x8xf32>
    %cst_22 = arith.constant dense<0.000000e+00> : vector<8xf32>
    %46 = vector.multi_reduction <add>, %45, %cst_22 [1] : vector<8x8xf32> to vector<8xf32>
    %47 = vector.shape_cast %46 : vector<8xf32> to vector<8x1xf32>
    %48 = tpu.reciprocal %47 {approx = true} : vector<8x1xf32> -> vector<8x1xf32>
    %49 = vector.broadcast %48 : vector<8x1xf32> to vector<8x8xf32>
    %50 = arith.mulf %45, %49 : vector<8x8xf32>
    %51 = vector.extract_strided_slice %33 {offsets = [0, 0], sizes = [8, 16], strides = [1, 1]} : vector<8x32xf32> to vector<8x16xf32>
    %cst_23 = arith.constant dense<0.000000e+00> : vector<8x16xf32>
    %52 = tpu.matmul %50, %51, %cst_23 {dimension_numbers = #tpu.dot_dimension_numbers<[1], [0], [0], [1], [0, 0, 1, 1], [], []>} : vector<8x8xf32>, vector<8x16xf32>, vector<8x16xf32> -> vector<8x16xf32>
    %c0_24 = arith.constant 0 : index
    %c0_25 = arith.constant 0 : index
    %53 = vector.load %arg10[%c0_24, %c0_25] : memref<32x32xf32, #tpu.memory_space<vmem>>, vector<16x32xf32>
    %cst_26 = arith.constant dense<0.000000e+00> : vector<8x32xf32>
    %54 = tpu.matmul %52, %53, %cst_26 {dimension_numbers = #tpu.dot_dimension_numbers<[1], [0], [0], [1], [0, 0, 1, 1], [], []>} : vector<8x16xf32>, vector<16x32xf32>, vector<8x32xf32> -> vector<8x32xf32>
    %55 = vector.broadcast %36 : vector<1x32xf32> to vector<8x32xf32>
    %56 = arith.addf %55, %54 : vector<8x32xf32>
    %57 = vector.extract_strided_slice %31 {offsets = [0, 16], sizes = [8, 16], strides = [1, 1]} : vector<8x32xf32> to vector<8x16xf32>
    %58 = vector.extract_strided_slice %32 {offsets = [0, 16], sizes = [8, 16], strides = [1, 1]} : vector<8x32xf32> to vector<8x16xf32>
    %cst_27 = arith.constant dense<0.000000e+00> : vector<8x8xf32>
    %59 = tpu.matmul %57, %58, %cst_27 {dimension_numbers = #tpu.dot_dimension_numbers<[1], [1], [0], [0], [0, 0, 1, 0], [], []>} : vector<8x16xf32>, vector<8x16xf32>, vector<8x8xf32> -> vector<8x8xf32>
    %60 = arith.addf %59, %35 : vector<8x8xf32>
    %cst_28 = arith.constant dense<0xFF800000> : vector<8xf32>
    %61 = vector.multi_reduction <maximumf>, %60, %cst_28 [1] : vector<8x8xf32> to vector<8xf32>
    %62 = vector.shape_cast %61 : vector<8xf32> to vector<8x1xf32>
    %63 = vector.broadcast %62 : vector<8x1xf32> to vector<8x8xf32>
    %64 = arith.subf %60, %63 : vector<8x8xf32>
    %65 = math.exp %64 : vector<8x8xf32>
    %cst_29 = arith.constant dense<0.000000e+00> : vector<8xf32>
    %66 = vector.multi_reduction <add>, %65, %cst_29 [1] : vector<8x8xf32> to vector<8xf32>
    %67 = vector.shape_cast %66 : vector<8xf32> to vector<8x1xf32>
    %68 = tpu.reciprocal %67 {approx = true} : vector<8x1xf32> -> vector<8x1xf32>
    %69 = vector.broadcast %68 : vector<8x1xf32> to vector<8x8xf32>
    %70 = arith.mulf %65, %69 : vector<8x8xf32>
    %71 = vector.extract_strided_slice %33 {offsets = [0, 16], sizes = [8, 16], strides = [1, 1]} : vector<8x32xf32> to vector<8x16xf32>
    %cst_30 = arith.constant dense<0.000000e+00> : vector<8x16xf32>
    %72 = tpu.matmul %70, %71, %cst_30 {dimension_numbers = #tpu.dot_dimension_numbers<[1], [0], [0], [1], [0, 0, 1, 1], [], []>} : vector<8x8xf32>, vector<8x16xf32>, vector<8x16xf32> -> vector<8x16xf32>
    %c16 = arith.constant 16 : index
    %c0_31 = arith.constant 0 : index
    %73 = vector.load %arg10[%c16, %c0_31] : memref<32x32xf32, #tpu.memory_space<vmem>>, vector<16x32xf32>
    %cst_32 = arith.constant dense<0.000000e+00> : vector<8x32xf32>
    %74 = tpu.matmul %72, %73, %cst_32 {dimension_numbers = #tpu.dot_dimension_numbers<[1], [0], [0], [1], [0, 0, 1, 1], [], []>} : vector<8x16xf32>, vector<16x32xf32>, vector<8x32xf32> -> vector<8x32xf32>
    %75 = arith.addf %56, %74 : vector<8x32xf32>
    %76 = arith.addf %1, %75 : vector<8x32xf32>
    %cst_33 = arith.constant dense<0.000000e+00> : vector<8xf32>
    %77 = vector.multi_reduction <add>, %76, %cst_33 [1] : vector<8x32xf32> to vector<8xf32>
    %78 = vector.shape_cast %77 : vector<8xf32> to vector<8x1xf32>
    %cst_34 = arith.constant 3.200000e+01 : f32
    %79 = vector.broadcast %cst_34 : f32 to vector<8x1xf32>
    %80 = arith.divf %78, %79 : vector<8x1xf32>
    %81 = vector.broadcast %80 : vector<8x1xf32> to vector<8x32xf32>
    %82 = arith.subf %76, %81 : vector<8x32xf32>
    %83 = arith.mulf %82, %82 : vector<8x32xf32>
    %cst_35 = arith.constant dense<0.000000e+00> : vector<8xf32>
    %84 = vector.multi_reduction <add>, %83, %cst_35 [1] : vector<8x32xf32> to vector<8xf32>
    %85 = vector.shape_cast %84 : vector<8xf32> to vector<8x1xf32>
    %cst_36 = arith.constant 3.200000e+01 : f32
    %86 = vector.broadcast %cst_36 : f32 to vector<8x1xf32>
    %87 = arith.divf %85, %86 : vector<8x1xf32>
    %cst_37 = arith.constant 9.99999974E-6 : f32
    %88 = vector.broadcast %cst_37 : f32 to vector<8x1xf32>
    %89 = arith.addf %87, %88 : vector<8x1xf32>
    %90 = math.rsqrt %89 : vector<8x1xf32>
    %91 = vector.broadcast %90 : vector<8x1xf32> to vector<8x32xf32>
    %92 = arith.mulf %82, %91 : vector<8x32xf32>
    %c0_38 = arith.constant 0 : index
    %c0_39 = arith.constant 0 : index
    %93 = vector.load %arg6[%c0_38, %c0_39] : memref<2x32xf32, #tpu.memory_space<vmem>>, vector<1x32xf32>
    %94 = vector.broadcast %93 : vector<1x32xf32> to vector<8x32xf32>
    %95 = arith.mulf %92, %94 : vector<8x32xf32>
    %c1_40 = arith.constant 1 : index
    %c0_41 = arith.constant 0 : index
    %96 = vector.load %arg6[%c1_40, %c0_41] : memref<2x32xf32, #tpu.memory_space<vmem>>, vector<1x32xf32>
    %97 = vector.broadcast %96 : vector<1x32xf32> to vector<8x32xf32>
    %98 = arith.addf %95, %97 : vector<8x32xf32>
    %c0_42 = arith.constant 0 : index
    %c0_43 = arith.constant 0 : index
    %99 = vector.load %arg12[%c0_42, %c0_43] : memref<32x32xf32, #tpu.memory_space<vmem>>, vector<32x32xf32>
    %cst_44 = arith.constant dense<0.000000e+00> : vector<8x32xf32>
    %100 = tpu.matmul %98, %99, %cst_44 {dimension_numbers = #tpu.dot_dimension_numbers<[1], [0], [0], [1], [0, 0, 1, 1], [], []>} : vector<8x32xf32>, vector<32x32xf32>, vector<8x32xf32> -> vector<8x32xf32>
    %c0_45 = arith.constant 0 : index
    %c0_46 = arith.constant 0 : index
    %101 = vector.load %arg13[%c0_45, %c0_46] : memref<1x32xf32, #tpu.memory_space<vmem>>, vector<1x32xf32>
    %102 = vector.broadcast %101 : vector<1x32xf32> to vector<8x32xf32>
    %103 = arith.addf %100, %102 : vector<8x32xf32>
    %cst_47 = arith.constant 2.500000e-01 : f32
    %104 = vector.broadcast %cst_47 : f32 to vector<8x32xf32>
    %105 = arith.mulf %103, %104 : vector<8x32xf32>
    %c0_48 = arith.constant 0 : index
    %c0_49 = arith.constant 0 : index
    %c0_50 = arith.constant 0 : index
    %106 = vector.load %arg2[%c0_48, %c0_49, %c0_50] : memref<1x8x32xf32, #tpu.memory_space<vmem>>, vector<1x8x32xf32>
    %107 = vector.shape_cast %106 : vector<1x8x32xf32> to vector<8x32xf32>
    %c0_51 = arith.constant 0 : index
    %c0_52 = arith.constant 0 : index
    %108 = vector.load %arg14[%c0_51, %c0_52] : memref<32x64xf32, #tpu.memory_space<vmem>>, vector<32x64xf32>
    %cst_53 = arith.constant dense<0.000000e+00> : vector<8x64xf32>
    %109 = tpu.matmul %107, %108, %cst_53 {dimension_numbers = #tpu.dot_dimension_numbers<[1], [0], [0], [1], [0, 0, 1, 1], [], []>} : vector<8x32xf32>, vector<32x64xf32>, vector<8x64xf32> -> vector<8x64xf32>
    %c0_54 = arith.constant 0 : index
    %c0_55 = arith.constant 0 : index
    %110 = vector.load %arg15[%c0_54, %c0_55] : memref<1x64xf32, #tpu.memory_space<vmem>>, vector<1x64xf32>
    %111 = vector.broadcast %110 : vector<1x64xf32> to vector<8x64xf32>
    %112 = arith.addf %109, %111 : vector<8x64xf32>
    %113 = vector.extract_strided_slice %112 {offsets = [0, 0], sizes = [8, 32], strides = [1, 1]} : vector<8x64xf32> to vector<8x32xf32>
    %114 = vector.extract_strided_slice %112 {offsets = [0, 32], sizes = [8, 32], strides = [1, 1]} : vector<8x64xf32> to vector<8x32xf32>
    %c0_56 = arith.constant 0 : index
    %c0_57 = arith.constant 0 : index
    %c0_58 = arith.constant 0 : index
    %115 = vector.load %arg4[%c0_56, %c0_57, %c0_58] : memref<1x8x8xf32, #tpu.memory_space<vmem>>, vector<1x8x8xf32>
    %116 = vector.shape_cast %115 : vector<1x8x8xf32> to vector<8x8xf32>
    %c0_59 = arith.constant 0 : index
    %c0_60 = arith.constant 0 : index
    %117 = vector.load %arg17[%c0_59, %c0_60] : memref<1x32xf32, #tpu.memory_space<vmem>>, vector<1x32xf32>
    %118 = vector.extract_strided_slice %105 {offsets = [0, 0], sizes = [8, 16], strides = [1, 1]} : vector<8x32xf32> to vector<8x16xf32>
    %119 = vector.extract_strided_slice %113 {offsets = [0, 0], sizes = [8, 16], strides = [1, 1]} : vector<8x32xf32> to vector<8x16xf32>
    %cst_61 = arith.constant dense<0.000000e+00> : vector<8x8xf32>
    %120 = tpu.matmul %118, %119, %cst_61 {dimension_numbers = #tpu.dot_dimension_numbers<[1], [1], [0], [0], [0, 0, 1, 0], [], []>} : vector<8x16xf32>, vector<8x16xf32>, vector<8x8xf32> -> vector<8x8xf32>
    %121 = arith.addf %120, %116 : vector<8x8xf32>
    %cst_62 = arith.constant dense<0xFF800000> : vector<8xf32>
    %122 = vector.multi_reduction <maximumf>, %121, %cst_62 [1] : vector<8x8xf32> to vector<8xf32>
    %123 = vector.shape_cast %122 : vector<8xf32> to vector<8x1xf32>
    %124 = vector.broadcast %123 : vector<8x1xf32> to vector<8x8xf32>
    %125 = arith.subf %121, %124 : vector<8x8xf32>
    %126 = math.exp %125 : vector<8x8xf32>
    %cst_63 = arith.constant dense<0.000000e+00> : vector<8xf32>
    %127 = vector.multi_reduction <add>, %126, %cst_63 [1] : vector<8x8xf32> to vector<8xf32>
    %128 = vector.shape_cast %127 : vector<8xf32> to vector<8x1xf32>
    %129 = tpu.reciprocal %128 {approx = true} : vector<8x1xf32> -> vector<8x1xf32>
    %130 = vector.broadcast %129 : vector<8x1xf32> to vector<8x8xf32>
    %131 = arith.mulf %126, %130 : vector<8x8xf32>
    %132 = vector.extract_strided_slice %114 {offsets = [0, 0], sizes = [8, 16], strides = [1, 1]} : vector<8x32xf32> to vector<8x16xf32>
    %cst_64 = arith.constant dense<0.000000e+00> : vector<8x16xf32>
    %133 = tpu.matmul %131, %132, %cst_64 {dimension_numbers = #tpu.dot_dimension_numbers<[1], [0], [0], [1], [0, 0, 1, 1], [], []>} : vector<8x8xf32>, vector<8x16xf32>, vector<8x16xf32> -> vector<8x16xf32>
    %c0_65 = arith.constant 0 : index
    %c0_66 = arith.constant 0 : index
    %134 = vector.load %arg16[%c0_65, %c0_66] : memref<32x32xf32, #tpu.memory_space<vmem>>, vector<16x32xf32>
    %cst_67 = arith.constant dense<0.000000e+00> : vector<8x32xf32>
    %135 = tpu.matmul %133, %134, %cst_67 {dimension_numbers = #tpu.dot_dimension_numbers<[1], [0], [0], [1], [0, 0, 1, 1], [], []>} : vector<8x16xf32>, vector<16x32xf32>, vector<8x32xf32> -> vector<8x32xf32>
    %136 = vector.broadcast %117 : vector<1x32xf32> to vector<8x32xf32>
    %137 = arith.addf %136, %135 : vector<8x32xf32>
    %138 = vector.extract_strided_slice %105 {offsets = [0, 16], sizes = [8, 16], strides = [1, 1]} : vector<8x32xf32> to vector<8x16xf32>
    %139 = vector.extract_strided_slice %113 {offsets = [0, 16], sizes = [8, 16], strides = [1, 1]} : vector<8x32xf32> to vector<8x16xf32>
    %cst_68 = arith.constant dense<0.000000e+00> : vector<8x8xf32>
    %140 = tpu.matmul %138, %139, %cst_68 {dimension_numbers = #tpu.dot_dimension_numbers<[1], [1], [0], [0], [0, 0, 1, 0], [], []>} : vector<8x16xf32>, vector<8x16xf32>, vector<8x8xf32> -> vector<8x8xf32>
    %141 = arith.addf %140, %116 : vector<8x8xf32>
    %cst_69 = arith.constant dense<0xFF800000> : vector<8xf32>
    %142 = vector.multi_reduction <maximumf>, %141, %cst_69 [1] : vector<8x8xf32> to vector<8xf32>
    %143 = vector.shape_cast %142 : vector<8xf32> to vector<8x1xf32>
    %144 = vector.broadcast %143 : vector<8x1xf32> to vector<8x8xf32>
    %145 = arith.subf %141, %144 : vector<8x8xf32>
    %146 = math.exp %145 : vector<8x8xf32>
    %cst_70 = arith.constant dense<0.000000e+00> : vector<8xf32>
    %147 = vector.multi_reduction <add>, %146, %cst_70 [1] : vector<8x8xf32> to vector<8xf32>
    %148 = vector.shape_cast %147 : vector<8xf32> to vector<8x1xf32>
    %149 = tpu.reciprocal %148 {approx = true} : vector<8x1xf32> -> vector<8x1xf32>
    %150 = vector.broadcast %149 : vector<8x1xf32> to vector<8x8xf32>
    %151 = arith.mulf %146, %150 : vector<8x8xf32>
    %152 = vector.extract_strided_slice %114 {offsets = [0, 16], sizes = [8, 16], strides = [1, 1]} : vector<8x32xf32> to vector<8x16xf32>
    %cst_71 = arith.constant dense<0.000000e+00> : vector<8x16xf32>
    %153 = tpu.matmul %151, %152, %cst_71 {dimension_numbers = #tpu.dot_dimension_numbers<[1], [0], [0], [1], [0, 0, 1, 1], [], []>} : vector<8x8xf32>, vector<8x16xf32>, vector<8x16xf32> -> vector<8x16xf32>
    %c16_72 = arith.constant 16 : index
    %c0_73 = arith.constant 0 : index
    %154 = vector.load %arg16[%c16_72, %c0_73] : memref<32x32xf32, #tpu.memory_space<vmem>>, vector<16x32xf32>
    %cst_74 = arith.constant dense<0.000000e+00> : vector<8x32xf32>
    %155 = tpu.matmul %153, %154, %cst_74 {dimension_numbers = #tpu.dot_dimension_numbers<[1], [0], [0], [1], [0, 0, 1, 1], [], []>} : vector<8x16xf32>, vector<16x32xf32>, vector<8x32xf32> -> vector<8x32xf32>
    %156 = arith.addf %137, %155 : vector<8x32xf32>
    %157 = arith.addf %76, %156 : vector<8x32xf32>
    %cst_75 = arith.constant dense<0.000000e+00> : vector<8xf32>
    %158 = vector.multi_reduction <add>, %157, %cst_75 [1] : vector<8x32xf32> to vector<8xf32>
    %159 = vector.shape_cast %158 : vector<8xf32> to vector<8x1xf32>
    %cst_76 = arith.constant 3.200000e+01 : f32
    %160 = vector.broadcast %cst_76 : f32 to vector<8x1xf32>
    %161 = arith.divf %159, %160 : vector<8x1xf32>
    %162 = vector.broadcast %161 : vector<8x1xf32> to vector<8x32xf32>
    %163 = arith.subf %157, %162 : vector<8x32xf32>
    %164 = arith.mulf %163, %163 : vector<8x32xf32>
    %cst_77 = arith.constant dense<0.000000e+00> : vector<8xf32>
    %165 = vector.multi_reduction <add>, %164, %cst_77 [1] : vector<8x32xf32> to vector<8xf32>
    %166 = vector.shape_cast %165 : vector<8xf32> to vector<8x1xf32>
    %cst_78 = arith.constant 3.200000e+01 : f32
    %167 = vector.broadcast %cst_78 : f32 to vector<8x1xf32>
    %168 = arith.divf %166, %167 : vector<8x1xf32>
    %cst_79 = arith.constant 9.99999974E-6 : f32
    %169 = vector.broadcast %cst_79 : f32 to vector<8x1xf32>
    %170 = arith.addf %168, %169 : vector<8x1xf32>
    %171 = math.rsqrt %170 : vector<8x1xf32>
    %172 = vector.broadcast %171 : vector<8x1xf32> to vector<8x32xf32>
    %173 = arith.mulf %163, %172 : vector<8x32xf32>
    %c0_80 = arith.constant 0 : index
    %c0_81 = arith.constant 0 : index
    %174 = vector.load %arg7[%c0_80, %c0_81] : memref<2x32xf32, #tpu.memory_space<vmem>>, vector<1x32xf32>
    %175 = vector.broadcast %174 : vector<1x32xf32> to vector<8x32xf32>
    %176 = arith.mulf %173, %175 : vector<8x32xf32>
    %c1_82 = arith.constant 1 : index
    %c0_83 = arith.constant 0 : index
    %177 = vector.load %arg7[%c1_82, %c0_83] : memref<2x32xf32, #tpu.memory_space<vmem>>, vector<1x32xf32>
    %178 = vector.broadcast %177 : vector<1x32xf32> to vector<8x32xf32>
    %179 = arith.addf %176, %178 : vector<8x32xf32>
    %c0_84 = arith.constant 0 : index
    %c0_85 = arith.constant 0 : index
    %180 = vector.load %arg18[%c0_84, %c0_85] : memref<32x64xf32, #tpu.memory_space<vmem>>, vector<32x64xf32>
    %cst_86 = arith.constant dense<0.000000e+00> : vector<8x64xf32>
    %181 = tpu.matmul %179, %180, %cst_86 {dimension_numbers = #tpu.dot_dimension_numbers<[1], [0], [0], [1], [0, 0, 1, 1], [], []>} : vector<8x32xf32>, vector<32x64xf32>, vector<8x64xf32> -> vector<8x64xf32>
    %c0_87 = arith.constant 0 : index
    %c0_88 = arith.constant 0 : index
    %182 = vector.load %arg19[%c0_87, %c0_88] : memref<1x64xf32, #tpu.memory_space<vmem>>, vector<1x64xf32>
    %183 = vector.broadcast %182 : vector<1x64xf32> to vector<8x64xf32>
    %184 = arith.addf %181, %183 : vector<8x64xf32>
    %cst_89 = arith.constant 0.000000e+00 : f32
    %185 = vector.broadcast %cst_89 : f32 to vector<8x64xf32>
    %186 = arith.maximumf %184, %185 : vector<8x64xf32>
    %c0_90 = arith.constant 0 : index
    %c0_91 = arith.constant 0 : index
    %187 = vector.load %arg20[%c0_90, %c0_91] : memref<64x32xf32, #tpu.memory_space<vmem>>, vector<64x32xf32>
    %cst_92 = arith.constant dense<0.000000e+00> : vector<8x32xf32>
    %188 = tpu.matmul %186, %187, %cst_92 {dimension_numbers = #tpu.dot_dimension_numbers<[1], [0], [0], [1], [0, 0, 1, 1], [], []>} : vector<8x64xf32>, vector<64x32xf32>, vector<8x32xf32> -> vector<8x32xf32>
    %c0_93 = arith.constant 0 : index
    %c0_94 = arith.constant 0 : index
    %189 = vector.load %arg21[%c0_93, %c0_94] : memref<1x32xf32, #tpu.memory_space<vmem>>, vector<1x32xf32>
    %190 = vector.broadcast %189 : vector<1x32xf32> to vector<8x32xf32>
    %191 = arith.addf %188, %190 : vector<8x32xf32>
    %192 = arith.addf %157, %191 : vector<8x32xf32>
    %c0_95 = arith.constant 0 : index
    %c0_96 = arith.constant 0 : index
    %c0_97 = arith.constant 0 : index
    %193 = vector.load %arg22[%c0_95, %c0_96, %c0_97] : memref<1x8x32xf32, #tpu.memory_space<vmem>>, vector<1x8x32xf32>
    %194 = vector.shape_cast %193 : vector<1x8x32xf32> to vector<8x32xf32>
    %195 = vector.shape_cast %192 : vector<8x32xf32> to vector<1x8x32xf32>
    tpu.vector_store %arg22[%c0_95, %c0_96, %c0_97], %195 {strides = array<i32>} : memref<1x8x32xf32, #tpu.memory_space<vmem>>, vector<1x8x32xf32>,
    return
  }
  func.func @transform_0(%arg0: i32) -> (i32, i32, i32) {
    %c0_i32 = arith.constant 0 : i32
    %c0_i32_0 = arith.constant 0 : i32
    %c0_i32_1 = arith.constant 0 : i32
    return %arg0, %c0_i32, %c0_i32_0 : i32, i32, i32
  }
  func.func @transform_1(%arg0: i32) -> (i32, i32, i32) {
    %c0_i32 = arith.constant 0 : i32
    %c0_i32_0 = arith.constant 0 : i32
    %c0_i32_1 = arith.constant 0 : i32
    return %arg0, %c0_i32, %c0_i32_0 : i32, i32, i32
  }
  func.func @transform_2(%arg0: i32) -> (i32, i32, i32) {
    %c0_i32 = arith.constant 0 : i32
    %c0_i32_0 = arith.constant 0 : i32
    %c0_i32_1 = arith.constant 0 : i32
    return %arg0, %c0_i32, %c0_i32_0 : i32, i32, i32
  }
  func.func @transform_3(%arg0: i32) -> (i32, i32, i32) {
    %c0_i32 = arith.constant 0 : i32
    %c0_i32_0 = arith.constant 0 : i32
    %c0_i32_1 = arith.constant 0 : i32
    return %arg0, %c0_i32, %c0_i32_0 : i32, i32, i32
  }
  func.func @transform_4(%arg0: i32) -> (i32, i32) {
    %c0_i32 = arith.constant 0 : i32
    %c0_i32_0 = arith.constant 0 : i32
    %c0_i32_1 = arith.constant 0 : i32
    return %c0_i32, %c0_i32_0 : i32, i32
  }
  func.func @transform_5(%arg0: i32) -> (i32, i32) {
    %c0_i32 = arith.constant 0 : i32
    %c0_i32_0 = arith.constant 0 : i32
    %c0_i32_1 = arith.constant 0 : i32
    return %c0_i32, %c0_i32_0 : i32, i32
  }
  func.func @transform_6(%arg0: i32) -> (i32, i32) {
    %c0_i32 = arith.constant 0 : i32
    %c0_i32_0 = arith.constant 0 : i32
    %c0_i32_1 = arith.constant 0 : i32
    return %c0_i32, %c0_i32_0 : i32, i32
  }
  func.func @transform_7(%arg0: i32) -> (i32, i32) {
    %c0_i32 = arith.constant 0 : i32
    %c0_i32_0 = arith.constant 0 : i32
    %c0_i32_1 = arith.constant 0 : i32
    return %c0_i32, %c0_i32_0 : i32, i32
  }
  func.func @transform_8(%arg0: i32) -> (i32, i32) {
    %c0_i32 = arith.constant 0 : i32
    %c0_i32_0 = arith.constant 0 : i32
    %c0_i32_1 = arith.constant 0 : i32
    return %c0_i32, %c0_i32_0 : i32, i32
  }
  func.func @transform_9(%arg0: i32) -> (i32, i32) {
    %c0_i32 = arith.constant 0 : i32
    %c0_i32_0 = arith.constant 0 : i32
    %c0_i32_1 = arith.constant 0 : i32
    return %c0_i32, %c0_i32_0 : i32, i32
  }
  func.func @transform_10(%arg0: i32) -> (i32, i32) {
    %c0_i32 = arith.constant 0 : i32
    %c0_i32_0 = arith.constant 0 : i32
    %c0_i32_1 = arith.constant 0 : i32
    return %c0_i32, %c0_i32_0 : i32, i32
  }
  func.func @transform_11(%arg0: i32) -> (i32, i32) {
    %c0_i32 = arith.constant 0 : i32
    %c0_i32_0 = arith.constant 0 : i32
    %c0_i32_1 = arith.constant 0 : i32
    return %c0_i32, %c0_i32_0 : i32, i32
  }
  func.func @transform_12(%arg0: i32) -> (i32, i32) {
    %c0_i32 = arith.constant 0 : i32
    %c0_i32_0 = arith.constant 0 : i32
    %c0_i32_1 = arith.constant 0 : i32
    return %c0_i32, %c0_i32_0 : i32, i32
  }
  func.func @transform_13(%arg0: i32) -> (i32, i32) {
    %c0_i32 = arith.constant 0 : i32
    %c0_i32_0 = arith.constant 0 : i32
    %c0_i32_1 = arith.constant 0 : i32
    return %c0_i32, %c0_i32_0 : i32, i32
  }
  func.func @transform_14(%arg0: i32) -> (i32, i32) {
    %c0_i32 = arith.constant 0 : i32
    %c0_i32_0 = arith.constant 0 : i32
    %c0_i32_1 = arith.constant 0 : i32
    return %c0_i32, %c0_i32_0 : i32, i32
  }
  func.func @transform_15(%arg0: i32) -> (i32, i32) {
    %c0_i32 = arith.constant 0 : i32
    %c0_i32_0 = arith.constant 0 : i32
    %c0_i32_1 = arith.constant 0 : i32
    return %c0_i32, %c0_i32_0 : i32, i32
  }
  func.func @transform_16(%arg0: i32) -> (i32, i32) {
    %c0_i32 = arith.constant 0 : i32
    %c0_i32_0 = arith.constant 0 : i32
    %c0_i32_1 = arith.constant 0 : i32
    return %c0_i32, %c0_i32_0 : i32, i32
  }
  func.func @transform_17(%arg0: i32) -> (i32, i32) {
    %c0_i32 = arith.constant 0 : i32
    %c0_i32_0 = arith.constant 0 : i32
    %c0_i32_1 = arith.constant 0 : i32
    return %c0_i32, %c0_i32_0 : i32, i32
  }
  func.func @transform_18(%arg0: i32) -> (i32, i32) {
    %c0_i32 = arith.constant 0 : i32
    %c0_i32_0 = arith.constant 0 : i32
    %c0_i32_1 = arith.constant 0 : i32
    return %c0_i32, %c0_i32_0 : i32, i32
  }
  func.func @transform_19(%arg0: i32) -> (i32, i32) {
    %c0_i32 = arith.constant 0 : i32
    %c0_i32_0 = arith.constant 0 : i32
    %c0_i32_1 = arith.constant 0 : i32
    return %c0_i32, %c0_i32_0 : i32, i32
  }
  func.func @transform_20(%arg0: i32) -> (i32, i32) {
    %c0_i32 = arith.constant 0 : i32
    %c0_i32_0 = arith.constant 0 : i32
    %c0_i32_1 = arith.constant 0 : i32
    return %c0_i32, %c0_i32_0 : i32, i32
  }
  func.func @transform_21(%arg0: i32) -> (i32, i32, i32) {
    %c0_i32 = arith.constant 0 : i32
    %c0_i32_0 = arith.constant 0 : i32
    %c0_i32_1 = arith.constant 0 : i32
    return %arg0, %c0_i32, %c0_i32_0 : i32, i32, i32
  }
}

module attributes {stable_mosaic.version = 11 : i64} {
  func.func @_decoder_layer_kernel(%arg0: i32, %arg1: memref<1x8x32xf32, #tpu.memory_space<vmem>>, %arg2: memref<1x8x32xf32, #tpu.memory_space<vmem>>, %arg3: memref<1x8x8xf32, #tpu.memory_space<vmem>>, %arg4: memref<1x8x8xf32, #tpu.memory_space<vmem>>, %arg5: memref<2x32xf32, #tpu.memory_space<vmem>>, %arg6: memref<2x32xf32, #tpu.memory_space<vmem>>, %arg7: memref<2x32xf32, #tpu.memory_space<vmem>>, %arg8: memref<32x96xf32, #tpu.memory_space<vmem>>, %arg9: memref<1x96xf32, #tpu.memory_space<vmem>>, %arg10: memref<32x32xf32, #tpu.memory_space<vmem>>, %arg11: memref<1x32xf32, #tpu.memory_space<vmem>>, %arg12: memref<32x32xf32, #tpu.memory_space<vmem>>, %arg13: memref<1x32xf32, #tpu.memory_space<vmem>>, %arg14: memref<32x64xf32, #tpu.memory_space<vmem>>, %arg15: memref<1x64xf32, #tpu.memory_space<vmem>>, %arg16: memref<32x32xf32, #tpu.memory_space<vmem>>, %arg17: memref<1x32xf32, #tpu.memory_space<vmem>>, %arg18: memref<32x64xf32, #tpu.memory_space<vmem>>, %arg19: memref<1x64xf32, #tpu.memory_space<vmem>>, %arg20: memref<64x32xf32, #tpu.memory_space<vmem>>, %arg21: memref<1x32xf32, #tpu.memory_space<vmem>>, %arg22: memref<1x8x32xf32, #tpu.memory_space<vmem>>) attributes {dimension_semantics = [#tpu.dimension_semantics<parallel>], iteration_bounds = array<i64: 2>, scalar_prefetch = 0 : i64, scratch_operands = 0 : i64, tpu.core_type = #tpu.core_type<tc>, window_params = [{transform_indices = @transform_0, window_bounds = array<i64: 1, 8, 32>}, {transform_indices = @transform_1, window_bounds = array<i64: 1, 8, 32>}, {transform_indices = @transform_2, window_bounds = array<i64: 1, 8, 8>}, {transform_indices = @transform_3, window_bounds = array<i64: 1, 8, 8>}, {pipeline_mode = #tpu.pipeline_mode<synchronous>, transform_indices = @transform_4, window_bounds = array<i64: 2, 32>}, {pipeline_mode = #tpu.pipeline_mode<synchronous>, transform_indices = @transform_5, window_bounds = array<i64: 2, 32>}, {pipeline_mode = #tpu.pipeline_mode<synchronous>, transform_indices = @transform_6, window_bounds = array<i64: 2, 32>}, {pipeline_mode = #tpu.pipeline_mode<synchronous>, transform_indices = @transform_7, window_bounds = array<i64: 32, 96>}, {pipeline_mode = #tpu.pipeline_mode<synchronous>, transform_indices = @transform_8, window_bounds = array<i64: 1, 96>}, {pipeline_mode = #tpu.pipeline_mode<synchronous>, transform_indices = @transform_9, window_bounds = array<i64: 32, 32>}, {pipeline_mode = #tpu.pipeline_mode<synchronous>, transform_indices = @transform_10, window_bounds = array<i64: 1, 32>}, {pipeline_mode = #tpu.pipeline_mode<synchronous>, transform_indices = @transform_11, window_bounds = array<i64: 32, 32>}, {pipeline_mode = #tpu.pipeline_mode<synchronous>, transform_indices = @transform_12, window_bounds = array<i64: 1, 32>}, {pipeline_mode = #tpu.pipeline_mode<synchronous>, transform_indices = @transform_13, window_bounds = array<i64: 32, 64>}, {pipeline_mode = #tpu.pipeline_mode<synchronous>, transform_indices = @transform_14, window_bounds = array<i64: 1, 64>}, {pipeline_mode = #tpu.pipeline_mode<synchronous>, transform_indices = @transform_15, window_bounds = array<i64: 32, 32>}, {pipeline_mode = #tpu.pipeline_mode<synchronous>, transform_indices = @transform_16, window_bounds = array<i64: 1, 32>}, {pipeline_mode = #tpu.pipeline_mode<synchronous>, transform_indices = @transform_17, window_bounds = array<i64: 32, 64>}, {pipeline_mode = #tpu.pipeline_mode<synchronous>, transform_indices = @transform_18, window_bounds = array<i64: 1, 64>}, {pipeline_mode = #tpu.pipeline_mode<synchronous>, transform_indices = @transform_19, window_bounds = array<i64: 64, 32>}, {pipeline_mode = #tpu.pipeline_mode<synchronous>, transform_indices = @transform_20, window_bounds = array<i64: 1, 32>}, {transform_indices = @transform_21, window_bounds = array<i64: 1, 8, 32>}]} {
    %c0 = arith.constant 0 : index
    %c0_0 = arith.constant 0 : index
    %c0_1 = arith.constant 0 : index
    %0 = vector.load %arg1[%c0, %c0_0, %c0_1] : memref<1x8x32xf32, #tpu.memory_space<vmem>>, vector<1x8x32xf32>
    %1 = vector.shape_cast %0 : vector<1x8x32xf32> to vector<8x32xf32>
    %cst = arith.constant dense<0.000000e+00> : vector<8xf32>
    %2 = vector.multi_reduction <add>, %1, %cst [1] : vector<8x32xf32> to vector<8xf32>
    %3 = vector.shape_cast %2 : vector<8xf32> to vector<8x1xf32>
    %cst_2 = arith.constant 3.200000e+01 : f32
    %4 = vector.broadcast %cst_2 : f32 to vector<8x1xf32>
    %5 = arith.divf %3, %4 : vector<8x1xf32>
    %6 = vector.broadcast %5 : vector<8x1xf32> to vector<8x32xf32>
    %7 = arith.subf %1, %6 : vector<8x32xf32>
    %8 = arith.mulf %7, %7 : vector<8x32xf32>
    %cst_3 = arith.constant dense<0.000000e+00> : vector<8xf32>
    %9 = vector.multi_reduction <add>, %8, %cst_3 [1] : vector<8x32xf32> to vector<8xf32>
    %10 = vector.shape_cast %9 : vector<8xf32> to vector<8x1xf32>
    %cst_4 = arith.constant 3.200000e+01 : f32
    %11 = vector.broadcast %cst_4 : f32 to vector<8x1xf32>
    %12 = arith.divf %10, %11 : vector<8x1xf32>
    %cst_5 = arith.constant 9.99999974E-6 : f32
    %13 = vector.broadcast %cst_5 : f32 to vector<8x1xf32>
    %14 = arith.addf %12, %13 : vector<8x1xf32>
    %15 = math.rsqrt %14 : vector<8x1xf32>
    %16 = vector.broadcast %15 : vector<8x1xf32> to vector<8x32xf32>
    %17 = arith.mulf %7, %16 : vector<8x32xf32>
    %c0_6 = arith.constant 0 : index
    %c0_7 = arith.constant 0 : index
    %18 = vector.load %arg5[%c0_6, %c0_7] : memref<2x32xf32, #tpu.memory_space<vmem>>, vector<1x32xf32>
    %19 = vector.broadcast %18 : vector<1x32xf32> to vector<8x32xf32>
    %20 = arith.mulf %17, %19 : vector<8x32xf32>
    %c1 = arith.constant 1 : index
    %c0_8 = arith.constant 0 : index
    %21 = vector.load %arg5[%c1, %c0_8] : memref<2x32xf32, #tpu.memory_space<vmem>>, vector<1x32xf32>
    %22 = vector.broadcast %21 : vector<1x32xf32> to vector<8x32xf32>
    %23 = arith.addf %20, %22 : vector<8x32xf32>
    %c0_9 = arith.constant 0 : index
    %c0_10 = arith.constant 0 : index
    %24 = vector.load %arg8[%c0_9, %c0_10] : memref<32x96xf32, #tpu.memory_space<vmem>>, vector<32x96xf32>
    %cst_11 = arith.constant dense<0.000000e+00> : vector<8x96xf32>
    %25 = tpu.matmul %23, %24, %cst_11 {dimension_numbers = #tpu.dot_dimension_numbers<[1], [0], [0], [1], [0, 0, 1, 1], [], []>} : vector<8x32xf32>, vector<32x96xf32>, vector<8x96xf32> -> vector<8x96xf32>
    %c0_12 = arith.constant 0 : index
    %c0_13 = arith.constant 0 : index
    %26 = vector.load %arg9[%c0_12, %c0_13] : memref<1x96xf32, #tpu.memory_space<vmem>>, vector<1x96xf32>
    %27 = vector.broadcast %26 : vector<1x96xf32> to vector<8x96xf32>
    %28 = arith.addf %25, %27 : vector<8x96xf32>
    %29 = vector.extract_strided_slice %28 {offsets = [0, 0], sizes = [8, 32], strides = [1, 1]} : vector<8x96xf32> to vector<8x32xf32>
    %cst_14 = arith.constant 2.500000e-01 : f32
    %30 = vector.broadcast %cst_14 : f32 to vector<8x32xf32>
    %31 = arith.mulf %29, %30 : vector<8x32xf32>
    %32 = vector.extract_strided_slice %28 {offsets = [0, 32], sizes = [8, 32], strides = [1, 1]} : vector<8x96xf32> to vector<8x32xf32>
    %33 = vector.extract_strided_slice %28 {offsets = [0, 64], sizes = [8, 32], strides = [1, 1]} : vector<8x96xf32> to vector<8x32xf32>
    %c0_15 = arith.constant 0 : index
    %c0_16 = arith.constant 0 : index
    %c0_17 = arith.constant 0 : index
    %34 = vector.load %arg3[%c0_15, %c0_16, %c0_17] : memref<1x8x8xf32, #tpu.memory_space<vmem>>, vector<1x8x8xf32>
    %35 = vector.shape_cast %34 : vector<1x8x8xf32> to vector<8x8xf32>
    %c0_18 = arith.constant 0 : index
    %c0_19 = arith.constant 0 : index
    %36 = vector.load %arg11[%c0_18, %c0_19] : memref<1x32xf32, #tpu.memory_space<vmem>>, vector<1x32xf32>
    %37 = vector.extract_strided_slice %31 {offsets = [0, 0], sizes = [8, 16], strides = [1, 1]} : vector<8x32xf32> to vector<8x16xf32>
    %38 = vector.extract_strided_slice %32 {offsets = [0, 0], sizes = [8, 16], strides = [1, 1]} : vector<8x32xf32> to vector<8x16xf32>
    %cst_20 = arith.constant dense<0.000000e+00> : vector<8x8xf32>
    %39 = tpu.matmul %37, %38, %cst_20 {dimension_numbers = #tpu.dot_dimension_numbers<[1], [1], [0], [0], [0, 0, 1, 0], [], []>} : vector<8x16xf32>, vector<8x16xf32>, vector<8x8xf32> -> vector<8x8xf32>
    %40 = arith.addf %39, %35 : vector<8x8xf32>
    %cst_21 = arith.constant dense<0xFF800000> : vector<8xf32>
    %41 = vector.multi_reduction <maximumf>, %40, %cst_21 [1] : vector<8x8xf32> to vector<8xf32>
    %42 = vector.shape_cast %41 : vector<8xf32> to vector<8x1xf32>
    %43 = vector.broadcast %42 : vector<8x1xf32> to vector<8x8xf32>
    %44 = arith.subf %40, %43 : vector<8x8xf32>
    %45 = math.exp %44 : vector<8x8xf32>
    %cst_22 = arith.constant dense<0.000000e+00> : vector<8xf32>
    %46 = vector.multi_reduction <add>, %45, %cst_22 [1] : vector<8x8xf32> to vector<8xf32>
    %47 = vector.shape_cast %46 : vector<8xf32> to vector<8x1xf32>
    %48 = tpu.reciprocal %47 {approx = true} : vector<8x1xf32> -> vector<8x1xf32>
    %49 = vector.broadcast %48 : vector<8x1xf32> to vector<8x8xf32>
    %50 = arith.mulf %45, %49 : vector<8x8xf32>
    %51 = vector.extract_strided_slice %33 {offsets = [0, 0], sizes = [8, 16], strides = [1, 1]} : vector<8x32xf32> to vector<8x16xf32>
    %cst_23 = arith.constant dense<0.000000e+00> : vector<8x16xf32>
    %52 = tpu.matmul %50, %51, %cst_23 {dimension_numbers = #tpu.dot_dimension_numbers<[1], [0], [0], [1], [0, 0, 1, 1], [], []>} : vector<8x8xf32>, vector<8x16xf32>, vector<8x16xf32> -> vector<8x16xf32>
    %c0_24 = arith.constant 0 : index
    %c0_25 = arith.constant 0 : index
    %53 = vector.load %arg10[%c0_24, %c0_25] : memref<32x32xf32, #tpu.memory_space<vmem>>, vector<16x32xf32>
    %cst_26 = arith.constant dense<0.000000e+00> : vector<8x32xf32>
    %54 = tpu.matmul %52, %53, %cst_26 {dimension_numbers = #tpu.dot_dimension_numbers<[1], [0], [0], [1], [0, 0, 1, 1], [], []>} : vector<8x16xf32>, vector<16x32xf32>, vector<8x32xf32> -> vector<8x32xf32>
    %55 = vector.broadcast %36 : vector<1x32xf32> to vector<8x32xf32>
    %56 = arith.addf %55, %54 : vector<8x32xf32>
    %57 = vector.extract_strided_slice %31 {offsets = [0, 16], sizes = [8, 16], strides = [1, 1]} : vector<8x32xf32> to vector<8x16xf32>
    %58 = vector.extract_strided_slice %32 {offsets = [0, 16], sizes = [8, 16], strides = [1, 1]} : vector<8x32xf32> to vector<8x16xf32>
    %cst_27 = arith.constant dense<0.000000e+00> : vector<8x8xf32>
    %59 = tpu.matmul %57, %58, %cst_27 {dimension_numbers = #tpu.dot_dimension_numbers<[1], [1], [0], [0], [0, 0, 1, 0], [], []>} : vector<8x16xf32>, vector<8x16xf32>, vector<8x8xf32> -> vector<8x8xf32>
    %60 = arith.addf %59, %35 : vector<8x8xf32>
    %cst_28 = arith.constant dense<0xFF800000> : vector<8xf32>
    %61 = vector.multi_reduction <maximumf>, %60, %cst_28 [1] : vector<8x8xf32> to vector<8xf32>
    %62 = vector.shape_cast %61 : vector<8xf32> to vector<8x1xf32>
    %63 = vector.broadcast %62 : vector<8x1xf32> to vector<8x8xf32>
    %64 = arith.subf %60, %63 : vector<8x8xf32>
    %65 = math.exp %64 : vector<8x8xf32>
    %cst_29 = arith.constant dense<0.000000e+00> : vector<8xf32>
    %66 = vector.multi_reduction <add>, %65, %cst_29 [1] : vector<8x8xf32> to vector<8xf32>
    %67 = vector.shape_cast %66 : vector<8xf32> to vector<8x1xf32>
    %68 = tpu.reciprocal %67 {approx = true} : vector<8x1xf32> -> vector<8x1xf32>
    %69 = vector.broadcast %68 : vector<8x1xf32> to vector<8x8xf32>
    %70 = arith.mulf %65, %69 : vector<8x8xf32>
    %71 = vector.extract_strided_slice %33 {offsets = [0, 16], sizes = [8, 16], strides = [1, 1]} : vector<8x32xf32> to vector<8x16xf32>
    %cst_30 = arith.constant dense<0.000000e+00> : vector<8x16xf32>
    %72 = tpu.matmul %70, %71, %cst_30 {dimension_numbers = #tpu.dot_dimension_numbers<[1], [0], [0], [1], [0, 0, 1, 1], [], []>} : vector<8x8xf32>, vector<8x16xf32>, vector<8x16xf32> -> vector<8x16xf32>
    %c16 = arith.constant 16 : index
    %c0_31 = arith.constant 0 : index
    %73 = vector.load %arg10[%c16, %c0_31] : memref<32x32xf32, #tpu.memory_space<vmem>>, vector<16x32xf32>
    %cst_32 = arith.constant dense<0.000000e+00> : vector<8x32xf32>
    %74 = tpu.matmul %72, %73, %cst_32 {dimension_numbers = #tpu.dot_dimension_numbers<[1], [0], [0], [1], [0, 0, 1, 1], [], []>} : vector<8x16xf32>, vector<16x32xf32>, vector<8x32xf32> -> vector<8x32xf32>
    %75 = arith.addf %56, %74 : vector<8x32xf32>
    %76 = arith.addf %1, %75 : vector<8x32xf32>
    %cst_33 = arith.constant dense<0.000000e+00> : vector<8xf32>
    %77 = vector.multi_reduction <add>, %76, %cst_33 [1] : vector<8x32xf32> to vector<8xf32>
    %78 = vector.shape_cast %77 : vector<8xf32> to vector<8x1xf32>
    %cst_34 = arith.constant 3.200000e+01 : f32
    %79 = vector.broadcast %cst_34 : f32 to vector<8x1xf32>
    %80 = arith.divf %78, %79 : vector<8x1xf32>
    %81 = vector.broadcast %80 : vector<8x1xf32> to vector<8x32xf32>
    %82 = arith.subf %76, %81 : vector<8x32xf32>
    %83 = arith.mulf %82, %82 : vector<8x32xf32>
    %cst_35 = arith.constant dense<0.000000e+00> : vector<8xf32>
    %84 = vector.multi_reduction <add>, %83, %cst_35 [1] : vector<8x32xf32> to vector<8xf32>
    %85 = vector.shape_cast %84 : vector<8xf32> to vector<8x1xf32>
    %cst_36 = arith.constant 3.200000e+01 : f32
    %86 = vector.broadcast %cst_36 : f32 to vector<8x1xf32>
    %87 = arith.divf %85, %86 : vector<8x1xf32>
    %cst_37 = arith.constant 9.99999974E-6 : f32
    %88 = vector.broadcast %cst_37 : f32 to vector<8x1xf32>
    %89 = arith.addf %87, %88 : vector<8x1xf32>
    %90 = math.rsqrt %89 : vector<8x1xf32>
    %91 = vector.broadcast %90 : vector<8x1xf32> to vector<8x32xf32>
    %92 = arith.mulf %82, %91 : vector<8x32xf32>
    %c0_38 = arith.constant 0 : index
    %c0_39 = arith.constant 0 : index
    %93 = vector.load %arg6[%c0_38, %c0_39] : memref<2x32xf32, #tpu.memory_space<vmem>>, vector<1x32xf32>
    %94 = vector.broadcast %93 : vector<1x32xf32> to vector<8x32xf32>
    %95 = arith.mulf %92, %94 : vector<8x32xf32>
    %c1_40 = arith.constant 1 : index
    %c0_41 = arith.constant 0 : index
    %96 = vector.load %arg6[%c1_40, %c0_41] : memref<2x32xf32, #tpu.memory_space<vmem>>, vector<1x32xf32>
    %97 = vector.broadcast %96 : vector<1x32xf32> to vector<8x32xf32>
    %98 = arith.addf %95, %97 : vector<8x32xf32>
    %c0_42 = arith.constant 0 : index
    %c0_43 = arith.constant 0 : index
    %99 = vector.load %arg12[%c0_42, %c0_43] : memref<32x32xf32, #tpu.memory_space<vmem>>, vector<32x32xf32>
    %cst_44 = arith.constant dense<0.000000e+00> : vector<8x32xf32>
    %100 = tpu.matmul %98, %99, %cst_44 {dimension_numbers = #tpu.dot_dimension_numbers<[1], [0], [0], [1], [0, 0, 1, 1], [], []>} : vector<8x32xf32>, vector<32x32xf32>, vector<8x32xf32> -> vector<8x32xf32>
    %c0_45 = arith.constant 0 : index
    %c0_46 = arith.constant 0 : index
    %101 = vector.load %arg13[%c0_45, %c0_46] : memref<1x32xf32, #tpu.memory_space<vmem>>, vector<1x32xf32>
    %102 = vector.broadcast %101 : vector<1x32xf32> to vector<8x32xf32>
    %103 = arith.addf %100, %102 : vector<8x32xf32>
    %cst_47 = arith.constant 2.500000e-01 : f32
    %104 = vector.broadcast %cst_47 : f32 to vector<8x32xf32>
    %105 = arith.mulf %103, %104 : vector<8x32xf32>
    %c0_48 = arith.constant 0 : index
    %c0_49 = arith.constant 0 : index
    %c0_50 = arith.constant 0 : index
    %106 = vector.load %arg2[%c0_48, %c0_49, %c0_50] : memref<1x8x32xf32, #tpu.memory_space<vmem>>, vector<1x8x32xf32>
    %107 = vector.shape_cast %106 : vector<1x8x32xf32> to vector<8x32xf32>
    %c0_51 = arith.constant 0 : index
    %c0_52 = arith.constant 0 : index
    %108 = vector.load %arg14[%c0_51, %c0_52] : memref<32x64xf32, #tpu.memory_space<vmem>>, vector<32x64xf32>
    %cst_53 = arith.constant dense<0.000000e+00> : vector<8x64xf32>
    %109 = tpu.matmul %107, %108, %cst_53 {dimension_numbers = #tpu.dot_dimension_numbers<[1], [0], [0], [1], [0, 0, 1, 1], [], []>} : vector<8x32xf32>, vector<32x64xf32>, vector<8x64xf32> -> vector<8x64xf32>
    %c0_54 = arith.constant 0 : index
    %c0_55 = arith.constant 0 : index
    %110 = vector.load %arg15[%c0_54, %c0_55] : memref<1x64xf32, #tpu.memory_space<vmem>>, vector<1x64xf32>
    %111 = vector.broadcast %110 : vector<1x64xf32> to vector<8x64xf32>
    %112 = arith.addf %109, %111 : vector<8x64xf32>
    %113 = vector.extract_strided_slice %112 {offsets = [0, 0], sizes = [8, 32], strides = [1, 1]} : vector<8x64xf32> to vector<8x32xf32>
    %114 = vector.extract_strided_slice %112 {offsets = [0, 32], sizes = [8, 32], strides = [1, 1]} : vector<8x64xf32> to vector<8x32xf32>
    %c0_56 = arith.constant 0 : index
    %c0_57 = arith.constant 0 : index
    %c0_58 = arith.constant 0 : index
    %115 = vector.load %arg4[%c0_56, %c0_57, %c0_58] : memref<1x8x8xf32, #tpu.memory_space<vmem>>, vector<1x8x8xf32>
    %116 = vector.shape_cast %115 : vector<1x8x8xf32> to vector<8x8xf32>
    %c0_59 = arith.constant 0 : index
    %c0_60 = arith.constant 0 : index
    %117 = vector.load %arg17[%c0_59, %c0_60] : memref<1x32xf32, #tpu.memory_space<vmem>>, vector<1x32xf32>
    %118 = vector.extract_strided_slice %105 {offsets = [0, 0], sizes = [8, 16], strides = [1, 1]} : vector<8x32xf32> to vector<8x16xf32>
    %119 = vector.extract_strided_slice %113 {offsets = [0, 0], sizes = [8, 16], strides = [1, 1]} : vector<8x32xf32> to vector<8x16xf32>
    %cst_61 = arith.constant dense<0.000000e+00> : vector<8x8xf32>
    %120 = tpu.matmul %118, %119, %cst_61 {dimension_numbers = #tpu.dot_dimension_numbers<[1], [1], [0], [0], [0, 0, 1, 0], [], []>} : vector<8x16xf32>, vector<8x16xf32>, vector<8x8xf32> -> vector<8x8xf32>
    %121 = arith.addf %120, %116 : vector<8x8xf32>
    %cst_62 = arith.constant dense<0xFF800000> : vector<8xf32>
    %122 = vector.multi_reduction <maximumf>, %121, %cst_62 [1] : vector<8x8xf32> to vector<8xf32>
    %123 = vector.shape_cast %122 : vector<8xf32> to vector<8x1xf32>
    %124 = vector.broadcast %123 : vector<8x1xf32> to vector<8x8xf32>
    %125 = arith.subf %121, %124 : vector<8x8xf32>
    %126 = math.exp %125 : vector<8x8xf32>
    %cst_63 = arith.constant dense<0.000000e+00> : vector<8xf32>
    %127 = vector.multi_reduction <add>, %126, %cst_63 [1] : vector<8x8xf32> to vector<8xf32>
    %128 = vector.shape_cast %127 : vector<8xf32> to vector<8x1xf32>
    %129 = tpu.reciprocal %128 {approx = true} : vector<8x1xf32> -> vector<8x1xf32>
    %130 = vector.broadcast %129 : vector<8x1xf32> to vector<8x8xf32>
    %131 = arith.mulf %126, %130 : vector<8x8xf32>
    %132 = vector.extract_strided_slice %114 {offsets = [0, 0], sizes = [8, 16], strides = [1, 1]} : vector<8x32xf32> to vector<8x16xf32>
    %cst_64 = arith.constant dense<0.000000e+00> : vector<8x16xf32>
    %133 = tpu.matmul %131, %132, %cst_64 {dimension_numbers = #tpu.dot_dimension_numbers<[1], [0], [0], [1], [0, 0, 1, 1], [], []>} : vector<8x8xf32>, vector<8x16xf32>, vector<8x16xf32> -> vector<8x16xf32>
    %c0_65 = arith.constant 0 : index
    %c0_66 = arith.constant 0 : index
    %134 = vector.load %arg16[%c0_65, %c0_66] : memref<32x32xf32, #tpu.memory_space<vmem>>, vector<16x32xf32>
    %cst_67 = arith.constant dense<0.000000e+00> : vector<8x32xf32>
    %135 = tpu.matmul %133, %134, %cst_67 {dimension_numbers = #tpu.dot_dimension_numbers<[1], [0], [0], [1], [0, 0, 1, 1], [], []>} : vector<8x16xf32>, vector<16x32xf32>, vector<8x32xf32> -> vector<8x32xf32>
    %136 = vector.broadcast %117 : vector<1x32xf32> to vector<8x32xf32>
    %137 = arith.addf %136, %135 : vector<8x32xf32>
    %138 = vector.extract_strided_slice %105 {offsets = [0, 16], sizes = [8, 16], strides = [1, 1]} : vector<8x32xf32> to vector<8x16xf32>
    %139 = vector.extract_strided_slice %113 {offsets = [0, 16], sizes = [8, 16], strides = [1, 1]} : vector<8x32xf32> to vector<8x16xf32>
    %cst_68 = arith.constant dense<0.000000e+00> : vector<8x8xf32>
    %140 = tpu.matmul %138, %139, %cst_68 {dimension_numbers = #tpu.dot_dimension_numbers<[1], [1], [0], [0], [0, 0, 1, 0], [], []>} : vector<8x16xf32>, vector<8x16xf32>, vector<8x8xf32> -> vector<8x8xf32>
    %141 = arith.addf %140, %116 : vector<8x8xf32>
    %cst_69 = arith.constant dense<0xFF800000> : vector<8xf32>
    %142 = vector.multi_reduction <maximumf>, %141, %cst_69 [1] : vector<8x8xf32> to vector<8xf32>
    %143 = vector.shape_cast %142 : vector<8xf32> to vector<8x1xf32>
    %144 = vector.broadcast %143 : vector<8x1xf32> to vector<8x8xf32>
    %145 = arith.subf %141, %144 : vector<8x8xf32>
    %146 = math.exp %145 : vector<8x8xf32>
    %cst_70 = arith.constant dense<0.000000e+00> : vector<8xf32>
    %147 = vector.multi_reduction <add>, %146, %cst_70 [1] : vector<8x8xf32> to vector<8xf32>
    %148 = vector.shape_cast %147 : vector<8xf32> to vector<8x1xf32>
    %149 = tpu.reciprocal %148 {approx = true} : vector<8x1xf32> -> vector<8x1xf32>
    %150 = vector.broadcast %149 : vector<8x1xf32> to vector<8x8xf32>
    %151 = arith.mulf %146, %150 : vector<8x8xf32>
    %152 = vector.extract_strided_slice %114 {offsets = [0, 16], sizes = [8, 16], strides = [1, 1]} : vector<8x32xf32> to vector<8x16xf32>
    %cst_71 = arith.constant dense<0.000000e+00> : vector<8x16xf32>
    %153 = tpu.matmul %151, %152, %cst_71 {dimension_numbers = #tpu.dot_dimension_numbers<[1], [0], [0], [1], [0, 0, 1, 1], [], []>} : vector<8x8xf32>, vector<8x16xf32>, vector<8x16xf32> -> vector<8x16xf32>
    %c16_72 = arith.constant 16 : index
    %c0_73 = arith.constant 0 : index
    %154 = vector.load %arg16[%c16_72, %c0_73] : memref<32x32xf32, #tpu.memory_space<vmem>>, vector<16x32xf32>
    %cst_74 = arith.constant dense<0.000000e+00> : vector<8x32xf32>
    %155 = tpu.matmul %153, %154, %cst_74 {dimension_numbers = #tpu.dot_dimension_numbers<[1], [0], [0], [1], [0, 0, 1, 1], [], []>} : vector<8x16xf32>, vector<16x32xf32>, vector<8x32xf32> -> vector<8x32xf32>
    %156 = arith.addf %137, %155 : vector<8x32xf32>
    %157 = arith.addf %76, %156 : vector<8x32xf32>
    %cst_75 = arith.constant dense<0.000000e+00> : vector<8xf32>
    %158 = vector.multi_reduction <add>, %157, %cst_75 [1] : vector<8x32xf32> to vector<8xf32>
    %159 = vector.shape_cast %158 : vector<8xf32> to vector<8x1xf32>
    %cst_76 = arith.constant 3.200000e+01 : f32
    %160 = vector.broadcast %cst_76 : f32 to vector<8x1xf32>
    %161 = arith.divf %159, %160 : vector<8x1xf32>
    %162 = vector.broadcast %161 : vector<8x1xf32> to vector<8x32xf32>
    %163 = arith.subf %157, %162 : vector<8x32xf32>
    %164 = arith.mulf %163, %163 : vector<8x32xf32>
    %cst_77 = arith.constant dense<0.000000e+00> : vector<8xf32>
    %165 = vector.multi_reduction <add>, %164, %cst_77 [1] : vector<8x32xf32> to vector<8xf32>
    %166 = vector.shape_cast %165 : vector<8xf32> to vector<8x1xf32>
    %cst_78 = arith.constant 3.200000e+01 : f32
    %167 = vector.broadcast %cst_78 : f32 to vector<8x1xf32>
    %168 = arith.divf %166, %167 : vector<8x1xf32>
    %cst_79 = arith.constant 9.99999974E-6 : f32
    %169 = vector.broadcast %cst_79 : f32 to vector<8x1xf32>
    %170 = arith.addf %168, %169 : vector<8x1xf32>
    %171 = math.rsqrt %170 : vector<8x1xf32>
    %172 = vector.broadcast %171 : vector<8x1xf32> to vector<8x32xf32>
    %173 = arith.mulf %163, %172 : vector<8x32xf32>
    %c0_80 = arith.constant 0 : index
    %c0_81 = arith.constant 0 : index
    %174 = vector.load %arg7[%c0_80, %c0_81] : memref<2x32xf32, #tpu.memory_space<vmem>>, vector<1x32xf32>
    %175 = vector.broadcast %174 : vector<1x32xf32> to vector<8x32xf32>
    %176 = arith.mulf %173, %175 : vector<8x32xf32>
    %c1_82 = arith.constant 1 : index
    %c0_83 = arith.constant 0 : index
    %177 = vector.load %arg7[%c1_82, %c0_83] : memref<2x32xf32, #tpu.memory_space<vmem>>, vector<1x32xf32>
    %178 = vector.broadcast %177 : vector<1x32xf32> to vector<8x32xf32>
    %179 = arith.addf %176, %178 : vector<8x32xf32>
    %c0_84 = arith.constant 0 : index
    %c0_85 = arith.constant 0 : index
    %180 = vector.load %arg18[%c0_84, %c0_85] : memref<32x64xf32, #tpu.memory_space<vmem>>, vector<32x64xf32>
    %cst_86 = arith.constant dense<0.000000e+00> : vector<8x64xf32>
    %181 = tpu.matmul %179, %180, %cst_86 {dimension_numbers = #tpu.dot_dimension_numbers<[1], [0], [0], [1], [0, 0, 1, 1], [], []>} : vector<8x32xf32>, vector<32x64xf32>, vector<8x64xf32> -> vector<8x64xf32>
    %c0_87 = arith.constant 0 : index
    %c0_88 = arith.constant 0 : index
    %182 = vector.load %arg19[%c0_87, %c0_88] : memref<1x64xf32, #tpu.memory_space<vmem>>, vector<1x64xf32>
    %183 = vector.broadcast %182 : vector<1x64xf32> to vector<8x64xf32>
    %184 = arith.addf %181, %183 : vector<8x64xf32>
    %cst_89 = arith.constant 0.000000e+00 : f32
    %185 = vector.broadcast %cst_89 : f32 to vector<8x64xf32>
    %186 = arith.maximumf %184, %185 : vector<8x64xf32>
    %c0_90 = arith.constant 0 : index
    %c0_91 = arith.constant 0 : index
    %187 = vector.load %arg20[%c0_90, %c0_91] : memref<64x32xf32, #tpu.memory_space<vmem>>, vector<64x32xf32>
    %cst_92 = arith.constant dense<0.000000e+00> : vector<8x32xf32>
    %188 = tpu.matmul %186, %187, %cst_92 {dimension_numbers = #tpu.dot_dimension_numbers<[1], [0], [0], [1], [0, 0, 1, 1], [], []>} : vector<8x64xf32>, vector<64x32xf32>, vector<8x32xf32> -> vector<8x32xf32>
    %c0_93 = arith.constant 0 : index
    %c0_94 = arith.constant 0 : index
    %189 = vector.load %arg21[%c0_93, %c0_94] : memref<1x32xf32, #tpu.memory_space<vmem>>, vector<1x32xf32>
    %190 = vector.broadcast %189 : vector<1x32xf32> to vector<8x32xf32>
    %191 = arith.addf %188, %190 : vector<8x32xf32>
    %192 = arith.addf %157, %191 : vector<8x32xf32>
    %c0_95 = arith.constant 0 : index
    %c0_96 = arith.constant 0 : index
    %c0_97 = arith.constant 0 : index
    %193 = vector.load %arg22[%c0_95, %c0_96, %c0_97] : memref<1x8x32xf32, #tpu.memory_space<vmem>>, vector<1x8x32xf32>
    %194 = vector.shape_cast %193 : vector<1x8x32xf32> to vector<8x32xf32>
    %195 = vector.shape_cast %192 : vector<8x32xf32> to vector<1x8x32xf32>
    tpu.vector_store %arg22[%c0_95, %c0_96, %c0_97], %195 {strides = array<i32>} : memref<1x8x32xf32, #tpu.memory_space<vmem>>, vector<1x8x32xf32>,
    return
  }
  func.func @transform_0(%arg0: i32) -> (i32, i32, i32) {
    %c0_i32 = arith.constant 0 : i32
    %c0_i32_0 = arith.constant 0 : i32
    %c0_i32_1 = arith.constant 0 : i32
    return %arg0, %c0_i32, %c0_i32_0 : i32, i32, i32
  }
  func.func @transform_1(%arg0: i32) -> (i32, i32, i32) {
    %c0_i32 = arith.constant 0 : i32
    %c0_i32_0 = arith.constant 0 : i32
    %c0_i32_1 = arith.constant 0 : i32
    return %arg0, %c0_i32, %c0_i32_0 : i32, i32, i32
  }
  func.func @transform_2(%arg0: i32) -> (i32, i32, i32) {
    %c0_i32 = arith.constant 0 : i32
    %c0_i32_0 = arith.constant 0 : i32
    %c0_i32_1 = arith.constant 0 : i32
    return %arg0, %c0_i32, %c0_i32_0 : i32, i32, i32
  }
  func.func @transform_3(%arg0: i32) -> (i32, i32, i32) {
    %c0_i32 = arith.constant 0 : i32
    %c0_i32_0 = arith.constant 0 : i32
    %c0_i32_1 = arith.constant 0 : i32
    return %arg0, %c0_i32, %c0_i32_0 : i32, i32, i32
  }
  func.func @transform_4(%arg0: i32) -> (i32, i32) {
    %c0_i32 = arith.constant 0 : i32
    %c0_i32_0 = arith.constant 0 : i32
    %c0_i32_1 = arith.constant 0 : i32
    return %c0_i32, %c0_i32_0 : i32, i32
  }
  func.func @transform_5(%arg0: i32) -> (i32, i32) {
    %c0_i32 = arith.constant 0 : i32
    %c0_i32_0 = arith.constant 0 : i32
    %c0_i32_1 = arith.constant 0 : i32
    return %c0_i32, %c0_i32_0 : i32, i32
  }
  func.func @transform_6(%arg0: i32) -> (i32, i32) {
    %c0_i32 = arith.constant 0 : i32
    %c0_i32_0 = arith.constant 0 : i32
    %c0_i32_1 = arith.constant 0 : i32
    return %c0_i32, %c0_i32_0 : i32, i32
  }
  func.func @transform_7(%arg0: i32) -> (i32, i32) {
    %c0_i32 = arith.constant 0 : i32
    %c0_i32_0 = arith.constant 0 : i32
    %c0_i32_1 = arith.constant 0 : i32
    return %c0_i32, %c0_i32_0 : i32, i32
  }
  func.func @transform_8(%arg0: i32) -> (i32, i32) {
    %c0_i32 = arith.constant 0 : i32
    %c0_i32_0 = arith.constant 0 : i32
    %c0_i32_1 = arith.constant 0 : i32
    return %c0_i32, %c0_i32_0 : i32, i32
  }
  func.func @transform_9(%arg0: i32) -> (i32, i32) {
    %c0_i32 = arith.constant 0 : i32
    %c0_i32_0 = arith.constant 0 : i32
    %c0_i32_1 = arith.constant 0 : i32
    return %c0_i32, %c0_i32_0 : i32, i32
  }
  func.func @transform_10(%arg0: i32) -> (i32, i32) {
    %c0_i32 = arith.constant 0 : i32
    %c0_i32_0 = arith.constant 0 : i32
    %c0_i32_1 = arith.constant 0 : i32
    return %c0_i32, %c0_i32_0 : i32, i32
  }
  func.func @transform_11(%arg0: i32) -> (i32, i32) {
    %c0_i32 = arith.constant 0 : i32
    %c0_i32_0 = arith.constant 0 : i32
    %c0_i32_1 = arith.constant 0 : i32
    return %c0_i32, %c0_i32_0 : i32, i32
  }
  func.func @transform_12(%arg0: i32) -> (i32, i32) {
    %c0_i32 = arith.constant 0 : i32
    %c0_i32_0 = arith.constant 0 : i32
    %c0_i32_1 = arith.constant 0 : i32
    return %c0_i32, %c0_i32_0 : i32, i32
  }
  func.func @transform_13(%arg0: i32) -> (i32, i32) {
    %c0_i32 = arith.constant 0 : i32
    %c0_i32_0 = arith.constant 0 : i32
    %c0_i32_1 = arith.constant 0 : i32
    return %c0_i32, %c0_i32_0 : i32, i32
  }
  func.func @transform_14(%arg0: i32) -> (i32, i32) {
    %c0_i32 = arith.constant 0 : i32
    %c0_i32_0 = arith.constant 0 : i32
    %c0_i32_1 = arith.constant 0 : i32
    return %c0_i32, %c0_i32_0 : i32, i32
  }
  func.func @transform_15(%arg0: i32) -> (i32, i32) {
    %c0_i32 = arith.constant 0 : i32
    %c0_i32_0 = arith.constant 0 : i32
    %c0_i32_1 = arith.constant 0 : i32
    return %c0_i32, %c0_i32_0 : i32, i32
  }
  func.func @transform_16(%arg0: i32) -> (i32, i32) {
    %c0_i32 = arith.constant 0 : i32
    %c0_i32_0 = arith.constant 0 : i32
    %c0_i32_1 = arith.constant 0 : i32
    return %c0_i32, %c0_i32_0 : i32, i32
  }
  func.func @transform_17(%arg0: i32) -> (i32, i32) {
    %c0_i32 = arith.constant 0 : i32
    %c0_i32_0 = arith.constant 0 : i32
    %c0_i32_1 = arith.constant 0 : i32
    return %c0_i32, %c0_i32_0 : i32, i32
  }
  func.func @transform_18(%arg0: i32) -> (i32, i32) {
    %c0_i32 = arith.constant 0 : i32
    %c0_i32_0 = arith.constant 0 : i32
    %c0_i32_1 = arith.constant 0 : i32
    return %c0_i32, %c0_i32_0 : i32, i32
  }
  func.func @transform_19(%arg0: i32) -> (i32, i32) {
    %c0_i32 = arith.constant 0 : i32
    %c0_i32_0 = arith.constant 0 : i32
    %c0_i32_1 = arith.constant 0 : i32
    return %c0_i32, %c0_i32_0 : i32, i32
  }
  func.func @transform_20(%arg0: i32) -> (i32, i32) {
    %c0_i32 = arith.constant 0 : i32
    %c0_i32_0 = arith.constant 0 : i32
    %c0_i32_1 = arith.constant 0 : i32
    return %c0_i32, %c0_i32_0 : i32, i32
  }
  func.func @transform_21(%arg0: i32) -> (i32, i32, i32) {
    %c0_i32 = arith.constant 0 : i32
    %c0_i32_0 = arith.constant 0 : i32
    %c0_i32_1 = arith.constant 0 : i32
    return %arg0, %c0_i32, %c0_i32_0 : i32, i32, i32
  }
}

</mosaic_0001>

<llo_original>
// kernel: decoder_forward.5
$region0: #{decoder_forward.5}
  #allocation0 [shape = 'u32[]', space=smem, size = 0x4, offset = 0x4, fixed_abs, tag = 'smem constant byte address 0x4 - core index']
  #allocation1 [shape = 'u32[144,128]{1,0:T(1,128)}', space=vmem, size = 0x12000, scoped, tag = 'internal scratch']
  %s0 = inlined_call_operand.vmem [shape: f32[16,32], index: 0, kind: input, shape index: {}]
  %s1 = inlined_call_operand.vmem [shape: f32[2,32], index: 1, kind: input, shape index: {}]
  %s2 = inlined_call_operand.hbm [shape: f32[16,32], index: 2, kind: output, shape index: {}]
  %s3 = sld [smem:[#allocation0]]
  $region41: #{decoder_forward.5} parent=0
    _
  %s5 = ssub.s32 1, %s3
  %s6 = scalar_select 0, %s5, %s3
  $region1: #{decoder_forward.5} parent=0
    #allocation2 [shape = 'u8[8192]{0}', space=vmem, size = 0x2000, scoped, tag = 'output window, operand 0']
    #allocation3 [shape = 's32[2]{0}', space=sflag, size = 0x8, scoped, tag = 'scoped memory for decoder_forward.5']
    %7 = vsyncpa [#allocation3], 0
    %s8 = scalar_lea.sflag [#allocation3], 1
    %9 = vsyncpa %s8, 0
    loop: start=0, step=1, limit=4
    $region2: #{decoder_forward.5} parent=1 // loop_pre_header
      _
    $region3: #{decoder_forward.5} parent=1 // loop_header
      %s11 = sphi 0, %s15
      %p12 = scmp.ge.s32.totalorder %s11, 4
      %s21 = sphi 0, %s23
      %s24 = sphi 0, %s21
      %s25 = sphi 0, %s24
      %s41 = sphi 0, %s25
      %s45 = sphi 0, %s45
      %s47 = sphi 0, %s45
      %s48 = sphi 0, %s47
      %s62 = sphi 0, %s48
      %s68 = sphi 0, %s70
      %s71 = sphi 0, %s68
      %s72 = sphi 0, %s71
      %s88 = sphi 0, %s72
    $region4: #{decoder_forward.5} parent=1 // loop_header_branch
      %14 = sbr.rel (%p12) target = $region8
    $region5: #{decoder_forward.5} parent=1 // loop_body
      %s16 = ssub.s32 %s11, 1
      %s17 = ssub.s32 %s11, 2
      %s18 = sadd.s32 %s11, 1
      %s19 = ssub.s32 %s11, %s18
      %p20 = scmp.eq.s32.totalorder %s19, 0
      %s22 = sadd.s32 %s21, 1
      %s23 = scalar_select %p20, %s21, %s22
      %p26 = pneg %p20
      %p27 = scmp.eq.s32.totalorder %s11, 1
      %p28 = por %p26, %p27
      %p29 = scmp.ne.s32.totalorder %s21, %s24
      %p30 = scmp.eq.s32.totalorder %s11, 0
      %p31 = por %p29, %p30
      %p32 = scmp.ne.s32.totalorder %s21, %s24
      %p33 = scmp.eq.s32.totalorder %s16, 1
      %p34 = por %p32, %p33
      %p35 = scmp.ne.s32.totalorder %s24, %s25
      %p36 = scmp.eq.s32.totalorder %s16, 0
      %p37 = por %p35, %p36
      %p38 = scmp.ne.s32.totalorder %s24, %s25
      %p39 = scmp.eq.s32.totalorder %s17, 1
      %p40 = por %p38, %p39
      %p42 = scmp.ne.s32.totalorder %s25, %s41
      %p43 = scmp.eq.s32.totalorder %s17, 0
      %p44 = por %p42, %p43
      %s46 = sadd.s32 %s45, 1
      %p49 = scmp.eq.s32.totalorder %s11, 1
      %p50 = scmp.ne.s32.totalorder %s45, %s47
      %p51 = scmp.eq.s32.totalorder %s11, 0
      %p52 = por %p50, %p51
      %p53 = scmp.ne.s32.totalorder %s45, %s47
      %p54 = scmp.eq.s32.totalorder %s16, 1
      %p55 = por %p53, %p54
      %p56 = scmp.ne.s32.totalorder %s47, %s48
      %p57 = scmp.eq.s32.totalorder %s16, 0
      %p58 = por %p56, %p57
      %p59 = scmp.ne.s32.totalorder %s47, %s48
      %p60 = scmp.eq.s32.totalorder %s17, 1
      %p61 = por %p59, %p60
      %p63 = scmp.ne.s32.totalorder %s48, %s62
      %p64 = scmp.eq.s32.totalorder %s17, 0
      %p65 = por %p63, %p64
      %s66 = ssub.s32 %s11, %s18
      %p67 = scmp.eq.s32.totalorder %s66, 0
      %s69 = sadd.s32 %s68, 1
      %s70 = scalar_select %p67, %s68, %s69
      %p73 = pneg %p67
      %p74 = scmp.eq.s32.totalorder %s11, 1
      %p75 = por %p73, %p74
      %p76 = scmp.ne.s32.totalorder %s68, %s71
      %p77 = scmp.eq.s32.totalorder %s11, 0
      %p78 = por %p76, %p77
      %p79 = scmp.ne.s32.totalorder %s68, %s71
      %p80 = scmp.eq.s32.totalorder %s16, 1
      %p81 = por %p79, %p80
      %p82 = scmp.ne.s32.totalorder %s71, %s72
      %p83 = scmp.eq.s32.totalorder %s16, 0
      %p84 = por %p82, %p83
      %p85 = scmp.ne.s32.totalorder %s71, %s72
      %p86 = scmp.eq.s32.totalorder %s17, 1
      %p87 = por %p85, %p86
      %p89 = scmp.ne.s32.totalorder %s72, %s88
      %p90 = scmp.eq.s32.totalorder %s17, 0
      %p91 = por %p89, %p90
      %p92 = scmp.le.s32.totalorder 1, %s11
      %p93 = scmp.lt.s32.totalorder %s11, 3
      %p94 = pnand %p92, %p93
      %p95 = pneg %p94
      // Predicated region
      $region9: #{decoder_forward.5} parent=5 // pred_check
        _
      $region10: #{decoder_forward.5} parent=5 // pred_check_branch
        %97 = sbr.rel (%p94) target = $region12
      $region11: #{decoder_forward.5} parent=5 // pred_region
        %s98 = ssub.s32 %s11, 1
        // Predicated region
        $region13: #{decoder_forward.5} parent=11 // pred_check
          %p99 = pneg %p58
        $region14: #{decoder_forward.5} parent=11 // pred_check_branch
          %101 = sbr.rel (%p99) target = $region16
        $region15: #{decoder_forward.5} parent=11 // pred_region
          _
        $region16: #{decoder_forward.5} parent=11 // pred_fallthru
          _
      $region12: #{decoder_forward.5} parent=5 // pred_fallthru
        _
      %p102 = scmp.lt.s32.totalorder %s11, 2
      // Predicated region
      $region17: #{decoder_forward.5} parent=5 // pred_check
        %p103 = pneg %p102
      $region18: #{decoder_forward.5} parent=5 // pred_check_branch
        %105 = sbr.rel (%p103) target = $region20
      $region19: #{decoder_forward.5} parent=5 // pred_region
        // Predicated region
        $region21: #{decoder_forward.5} parent=19 // pred_check
          %p106 = pneg %p31
        $region22: #{decoder_forward.5} parent=19 // pred_check_branch
          %108 = sbr.rel (%p106) target = $region24
        $region23: #{decoder_forward.5} parent=19 // pred_region
          %p109 = scmp.lt.s32.totalorder %s11, 1
          %s110 = scalar_select %p109, %s11, 1
          %s111 = smul.addr %s110, 8
          %s112 = scalar_lea.vmem %s0, %s111
        $region24: #{decoder_forward.5} parent=19 // pred_fallthru
          _
      $region20: #{decoder_forward.5} parent=5 // pred_fallthru
        _
      %p113 = scmp.le.s32.totalorder 1, %s11
      %p114 = scmp.lt.s32.totalorder %s11, 3
      %p115 = pnand %p113, %p114
      %p116 = pneg %p115
      // Predicated region
      $region25: #{decoder_forward.5} parent=5 // pred_check
        _
      $region26: #{decoder_forward.5} parent=5 // pred_check_branch
        %118 = sbr.rel (%p115) target = $region28
      $region27: #{decoder_forward.5} parent=5 // pred_region
        %s119 = ssub.s32 %s11, 1
        %p120 = scmp.lt.s32.totalorder %s16, 1
        %s121 = scalar_select %p120, %s16, 1
        %s122 = smul.addr %s121, 8
        %s123 = scalar_lea.vmem %s0, %s122
        %p124 = pneg %p37
        %p125 = pneg %p34
        %p126 = pneg %p58
        %p127 = pneg %p55
        %p128 = pneg %p84
        %p129 = pneg %p81
        %s130 = sand.u32 %s71, 1
        %s131 = scalar_lea.sflag [#allocation3], %s130
        %s132 = sand.u32 %s71, 1
        %s133 = smul.addr %s132, 8
        %s134 = scalar_lea.vmem [#allocation2], %s133
        %p135 = scmp.lt.s32.totalorder %s16, 1
        %s136 = scalar_select %p135, %s16, 1
        %s137 = smul.addr %s136, 8
        %s138 = scalar_lea.vmem %s0, %s137
        %v139 = vld [vmem:[%s138] sm:$0xff]
        %vm140 = vcmask 261120
        %v141 = vsel %vm140, %v139, 0.0
        %142 = vadd.xlane.f32.xlu0 %v141
        %v143 = vpop.xlane.xlu0 %142
        %v144 = vrcp.pop 32.0
        %v145 = vmul.f32 %v143, %v144
        %v146 = vsub.f32 %v139, %v145
        %v147 = vmul.f32 %v146, %v146
        %v148 = vsel %vm140, %v147, 0.0
        %149 = vadd.xlane.f32.xlu0 %v148
        %v150 = vpop.xlane.xlu0 %149
        %v151 = vmul.f32 %v150, %v144
        %v152 = vadd.f32 %v151, 1e-05
        %v153 = vrsqrt.pop %v152
        %v154 = vmul.f32 %v146, %v153
        %v155 = vld [vmem:[%s1] sm:$0x1]
        %v156 = vlaneseq
        %v157 = vshrl.u32 %v156, 7
        %v158 = vsub.s32 0, %v157
        %v159 = vrot.slane %v155, %v158
        %v160 = vmul.f32 %v154, %v159
        %v161 = vld [vmem:[%s1 + $0x1] sm:$0x1]
        %v162 = vlaneseq
        %v163 = vshrl.u32 %v162, 7
        %v164 = vsub.s32 0, %v163
        %v165 = vrot.slane %v161, %v164
        %v166 = vadd.f32 %v160, %v165
        %167 = vst.msk [vmem:[%s134] sm:$0xff] %vm140, %v166
        %s168 = sand.u32 %s71, 1
        %s169 = scalar_lea.sflag [#allocation3], %s168
        %s170 = sand.u32 %s71, 1
        %s171 = smul.addr %s170, 8
        %s172 = scalar_lea.vmem [#allocation2], %s171
        // Predicated region
        $region29: #{decoder_forward.5} parent=27 // pred_check
          %p173 = pneg %p81
        $region30: #{decoder_forward.5} parent=27 // pred_check_branch
          %175 = sbr.rel (%p173) target = $region32
        $region31: #{decoder_forward.5} parent=27 // pred_region
          %s177 = ssub.s32 128, 128
          %178 = vsyncadd %s169, %s177
          %s179 = smul.addr %s16, 128
          %s180 = scalar_lea.hbm %s2, %s179
          %s182 = sshll.u32 %s172, 4
          %s183 = int_to_ptr.vmem [resolvable:$true] %s182
          %185 = dma.vmem_to_hbm [thread:$0]  %s183, 128, %s180, %s169
        $region32: #{decoder_forward.5} parent=27 // pred_fallthru
          _
      $region28: #{decoder_forward.5} parent=5 // pred_fallthru
        _
      %p186 = scmp.le.s32.totalorder 2, %s11
      // Predicated region
      $region33: #{decoder_forward.5} parent=5 // pred_check
        %p187 = pneg %p186
      $region34: #{decoder_forward.5} parent=5 // pred_check_branch
        %189 = sbr.rel (%p187) target = $region36
      $region35: #{decoder_forward.5} parent=5 // pred_region
        %s190 = ssub.s32 %s11, 2
        // Predicated region
        $region37: #{decoder_forward.5} parent=35 // pred_check
          %p191 = pneg %p87
        $region38: #{decoder_forward.5} parent=35 // pred_check_branch
          %193 = sbr.rel (%p191) target = $region40
        $region39: #{decoder_forward.5} parent=35 // pred_region
          %s194 = sand.u32 %s72, 1
          %s195 = scalar_lea.sflag [#allocation3], %s194
          %s196 = sand.u32 %s72, 1
          %s197 = smul.addr %s196, 8
          %s198 = scalar_lea.vmem [#allocation2], %s197
          %199 = dma.done %s195, 128
        $region40: #{decoder_forward.5} parent=35 // pred_fallthru
          _
      $region36: #{decoder_forward.5} parent=5 // pred_fallthru
        _
    $region6: #{decoder_forward.5} parent=1 // loop_footer
      %s15 = sadd.s32 1, %s11
    $region7: #{decoder_forward.5} parent=1 // loop_footer_branch
      %10 = sbr.rel target = $region3
    $region8: #{decoder_forward.5} parent=1 // loop_exit
      _
    %200 = vsyncpa [#allocation3], 1
    %s201 = scalar_lea.sflag [#allocation3], 1
    %202 = vsyncpa %s201, 1

// kernel: decoder_forward.3
$region0: #{decoder_forward.3}
  #allocation0 [shape = 'u32[]', space=smem, size = 0x4, offset = 0x4, fixed_abs, tag = 'smem constant byte address 0x4 - core index']
  #allocation1 [shape = 'u32[144,128]{1,0:T(1,128)}', space=vmem, size = 0x12000, scoped, tag = 'internal scratch']
  %s0 = inlined_call_operand.hbm [shape: f32[2,8,32], index: 0, kind: input, shape index: {}]
  %s1 = inlined_call_operand.hbm [shape: f32[2,8,32], index: 1, kind: input, shape index: {}]
  %s2 = inlined_call_operand.vmem [shape: f32[2,8,8], index: 2, kind: input, shape index: {}]
  %s3 = inlined_call_operand.vmem [shape: f32[2,8,8], index: 3, kind: input, shape index: {}]
  %s4 = inlined_call_operand.vmem [shape: f32[2,32], index: 4, kind: input, shape index: {}, may-alias: {4,5,6}]
  %s5 = inlined_call_operand.vmem [shape: f32[2,32], index: 5, kind: input, shape index: {}, may-alias: {4,5,6}]
  %s6 = inlined_call_operand.vmem [shape: f32[2,32], index: 6, kind: input, shape index: {}, may-alias: {4,5,6}]
  %s7 = inlined_call_operand.hbm [shape: f32[32,96], index: 7, kind: input, shape index: {}]
  %s8 = inlined_call_operand.hbm [shape: f32[1,96], index: 8, kind: input, shape index: {}]
  %s9 = inlined_call_operand.hbm [shape: f32[32,32], index: 9, kind: input, shape index: {}]
  %s10 = inlined_call_operand.hbm [shape: f32[1,32], index: 10, kind: input, shape index: {}]
  %s11 = inlined_call_operand.hbm [shape: f32[32,32], index: 11, kind: input, shape index: {}]
  %s12 = inlined_call_operand.hbm [shape: f32[1,32], index: 12, kind: input, shape index: {}]
  %s13 = inlined_call_operand.hbm [shape: f32[32,64], index: 13, kind: input, shape index: {}]
  %s14 = inlined_call_operand.hbm [shape: f32[1,64], index: 14, kind: input, shape index: {}]
  %s15 = inlined_call_operand.hbm [shape: f32[32,32], index: 15, kind: input, shape index: {}]
  %s16 = inlined_call_operand.hbm [shape: f32[1,32], index: 16, kind: input, shape index: {}]
  %s17 = inlined_call_operand.vmem [shape: f32[32,64], index: 17, kind: input, shape index: {}]
  %s18 = inlined_call_operand.hbm [shape: f32[1,64], index: 18, kind: input, shape index: {}]
  %s19 = inlined_call_operand.vmem [shape: f32[64,32], index: 19, kind: input, shape index: {}]
  %s20 = inlined_call_operand.hbm [shape: f32[1,32], index: 20, kind: input, shape index: {}]
  %s21 = inlined_call_operand.vmem [shape: f32[2,8,32], index: 21, kind: output, shape index: {}]
  %s22 = sld [smem:[#allocation0]]
  $region173: #{decoder_forward.3} parent=0
    _
  %s24 = ssub.s32 1, %s22
  %s25 = scalar_select 0, %s24, %s22
  $region1: #{decoder_forward.3} parent=0
    #allocation2 [shape = 'u8[8192]{0}', space=vmem, size = 0x2000, scoped, tag = 'input window, operand 0']
    #allocation3 [shape = 's32[2]{0}', space=sflag, size = 0x8, scoped, tag = 'scoped memory for decoder_forward.3']
    #allocation4 [shape = 'u8[8192]{0}', space=vmem, size = 0x2000, scoped, tag = 'input window, operand 1']
    #allocation5 [shape = 's32[2]{0}', space=sflag, size = 0x8, scoped, tag = 'scoped memory for decoder_forward.3']
    #allocation6 [shape = 'u8[16384]{0}', space=vmem, size = 0x4000, scoped, tag = 'input window, operand 7, single buffered']
    #allocation7 [shape = 'u8[512]{0}', space=vmem, size = 0x400, scoped, tag = 'input window, operand 8, single buffered']
    #allocation8 [shape = 's32[1]{0}', space=sflag, size = 0x4, scoped, tag = 'scoped memory for decoder_forward.3']
    #allocation9 [shape = 'u8[16384]{0}', space=vmem, size = 0x4000, scoped, tag = 'input window, operand 9, single buffered']
    #allocation10 [shape = 'u8[512]{0}', space=vmem, size = 0x400, scoped, tag = 'input window, operand 10, single buffered']
    #allocation11 [shape = 's32[1]{0}', space=sflag, size = 0x4, scoped, tag = 'scoped memory for decoder_forward.3']
    #allocation12 [shape = 'u8[16384]{0}', space=vmem, size = 0x4000, scoped, tag = 'input window, operand 11, single buffered']
    #allocation13 [shape = 'u8[512]{0}', space=vmem, size = 0x400, scoped, tag = 'input window, operand 12, single buffered']
    #allocation14 [shape = 's32[1]{0}', space=sflag, size = 0x4, scoped, tag = 'scoped memory for decoder_forward.3']
    #allocation15 [shape = 'u8[16384]{0}', space=vmem, size = 0x4000, scoped, tag = 'input window, operand 13, single buffered']
    #allocation16 [shape = 'u8[512]{0}', space=vmem, size = 0x400, scoped, tag = 'input window, operand 14, single buffered']
    #allocation17 [shape = 's32[1]{0}', space=sflag, size = 0x4, scoped, tag = 'scoped memory for decoder_forward.3']
    #allocation18 [shape = 'u8[16384]{0}', space=vmem, size = 0x4000, scoped, tag = 'input window, operand 15, single buffered']
    #allocation19 [shape = 'u8[512]{0}', space=vmem, size = 0x400, scoped, tag = 'input window, operand 16, single buffered']
    #allocation20 [shape = 's32[1]{0}', space=sflag, size = 0x4, scoped, tag = 'scoped memory for decoder_forward.3']
    #allocation21 [shape = 'u8[512]{0}', space=vmem, size = 0x400, scoped, tag = 'input window, operand 18, single buffered']
    #allocation22 [shape = 'u8[512]{0}', space=vmem, size = 0x400, scoped, tag = 'input window, operand 20, single buffered']
    #allocation23 [shape = 's32[1]{0}', space=sflag, size = 0x4, scoped, tag = 'scoped memory for decoder_forward.3']
    %26 = vsyncpa [#allocation3], 0
    %s27 = scalar_lea.sflag [#allocation3], 1
    %28 = vsyncpa %s27, 0
    %29 = vsyncpa [#allocation5], 0
    %s30 = scalar_lea.sflag [#allocation5], 1
    %31 = vsyncpa %s30, 0
    %32 = vsyncpa [#allocation8], 0
    %33 = vsyncpa [#allocation11], 0
    %34 = vsyncpa [#allocation14], 0
    %35 = vsyncpa [#allocation17], 0
    %36 = vsyncpa [#allocation20], 0
    %37 = vsyncpa [#allocation23], 0
    loop: start=0, step=1, limit=4
    $region2: #{decoder_forward.3} parent=1 // loop_pre_header
      _
    $region3: #{decoder_forward.3} parent=1 // loop_header
      %s39 = sphi 0, %s43
      %p40 = scmp.ge.s32.totalorder %s39, 4
      %s49 = sphi 0, %s51
      %s52 = sphi 0, %s49
      %s53 = sphi 0, %s52
      %s69 = sphi 0, %s53
      %s75 = sphi 0, %s77
      %s78 = sphi 0, %s75
      %s79 = sphi 0, %s78
      %s95 = sphi 0, %s79
      %s101 = sphi 0, %s103
      %s104 = sphi 0, %s101
      %s105 = sphi 0, %s104
      %s121 = sphi 0, %s105
      %s127 = sphi 0, %s129
      %s130 = sphi 0, %s127
      %s131 = sphi 0, %s130
      %s147 = sphi 0, %s131
      %s151 = sphi 0, %s151
      %s153 = sphi 0, %s151
      %s154 = sphi 0, %s153
      %s168 = sphi 0, %s154
      %s172 = sphi 0, %s172
      %s174 = sphi 0, %s172
      %s175 = sphi 0, %s174
      %s189 = sphi 0, %s175
      %s193 = sphi 0, %s193
      %s195 = sphi 0, %s193
      %s196 = sphi 0, %s195
      %s210 = sphi 0, %s196
      %s214 = sphi 0, %s214
      %s216 = sphi 0, %s214
      %s217 = sphi 0, %s216
      %s231 = sphi 0, %s217
      %s235 = sphi 0, %s235
      %s237 = sphi 0, %s235
      %s238 = sphi 0, %s237
      %s252 = sphi 0, %s238
      %s256 = sphi 0, %s256
      %s258 = sphi 0, %s256
      %s259 = sphi 0, %s258
      %s273 = sphi 0, %s259
      %s277 = sphi 0, %s277
      %s279 = sphi 0, %s277
      %s280 = sphi 0, %s279
      %s294 = sphi 0, %s280
      %s298 = sphi 0, %s298
      %s300 = sphi 0, %s298
      %s301 = sphi 0, %s300
      %s315 = sphi 0, %s301
      %s319 = sphi 0, %s319
      %s321 = sphi 0, %s319
      %s322 = sphi 0, %s321
      %s336 = sphi 0, %s322
      %s340 = sphi 0, %s340
      %s342 = sphi 0, %s340
      %s343 = sphi 0, %s342
      %s357 = sphi 0, %s343
      %s361 = sphi 0, %s361
      %s363 = sphi 0, %s361
      %s364 = sphi 0, %s363
      %s378 = sphi 0, %s364
      %s382 = sphi 0, %s382
      %s384 = sphi 0, %s382
      %s385 = sphi 0, %s384
      %s399 = sphi 0, %s385
      %s403 = sphi 0, %s403
      %s405 = sphi 0, %s403
      %s406 = sphi 0, %s405
      %s420 = sphi 0, %s406
      %s424 = sphi 0, %s424
      %s426 = sphi 0, %s424
      %s427 = sphi 0, %s426
      %s441 = sphi 0, %s427
      %s445 = sphi 0, %s445
      %s447 = sphi 0, %s445
      %s448 = sphi 0, %s447
      %s462 = sphi 0, %s448
      %s466 = sphi 0, %s466
      %s468 = sphi 0, %s466
      %s469 = sphi 0, %s468
      %s483 = sphi 0, %s469
      %s487 = sphi 0, %s487
      %s489 = sphi 0, %s487
      %s490 = sphi 0, %s489
      %s504 = sphi 0, %s490
      %s510 = sphi 0, %s512
      %s513 = sphi 0, %s510
      %s514 = sphi 0, %s513
      %s530 = sphi 0, %s514
    $region4: #{decoder_forward.3} parent=1 // loop_header_branch
      %42 = sbr.rel (%p40) target = $region8
    $region5: #{decoder_forward.3} parent=1 // loop_body
      %s44 = ssub.s32 %s39, 1
      %s45 = ssub.s32 %s39, 2
      %s46 = sadd.s32 %s39, 1
      %s47 = ssub.s32 %s39, %s46
      %p48 = scmp.eq.s32.totalorder %s47, 0
      %s50 = sadd.s32 %s49, 1
      %s51 = scalar_select %p48, %s49, %s50
      %p54 = pneg %p48
      %p55 = scmp.eq.s32.totalorder %s39, 1
      %p56 = por %p54, %p55
      %p57 = scmp.ne.s32.totalorder %s49, %s52
      %p58 = scmp.eq.s32.totalorder %s39, 0
      %p59 = por %p57, %p58
      %p60 = scmp.ne.s32.totalorder %s49, %s52
      %p61 = scmp.eq.s32.totalorder %s44, 1
      %p62 = por %p60, %p61
      %p63 = scmp.ne.s32.totalorder %s52, %s53
      %p64 = scmp.eq.s32.totalorder %s44, 0
      %p65 = por %p63, %p64
      %p66 = scmp.ne.s32.totalorder %s52, %s53
      %p67 = scmp.eq.s32.totalorder %s45, 1
      %p68 = por %p66, %p67
      %p70 = scmp.ne.s32.totalorder %s53, %s69
      %p71 = scmp.eq.s32.totalorder %s45, 0
      %p72 = por %p70, %p71
      %s73 = ssub.s32 %s39, %s46
      %p74 = scmp.eq.s32.totalorder %s73, 0
      %s76 = sadd.s32 %s75, 1
      %s77 = scalar_select %p74, %s75, %s76
      %p80 = pneg %p74
      %p81 = scmp.eq.s32.totalorder %s39, 1
      %p82 = por %p80, %p81
      %p83 = scmp.ne.s32.totalorder %s75, %s78
      %p84 = scmp.eq.s32.totalorder %s39, 0
      %p85 = por %p83, %p84
      %p86 = scmp.ne.s32.totalorder %s75, %s78
      %p87 = scmp.eq.s32.totalorder %s44, 1
      %p88 = por %p86, %p87
      %p89 = scmp.ne.s32.totalorder %s78, %s79
      %p90 = scmp.eq.s32.totalorder %s44, 0
      %p91 = por %p89, %p90
      %p92 = scmp.ne.s32.totalorder %s78, %s79
      %p93 = scmp.eq.s32.totalorder %s45, 1
      %p94 = por %p92, %p93
      %p96 = scmp.ne.s32.totalorder %s79, %s95
      %p97 = scmp.eq.s32.totalorder %s45, 0
      %p98 = por %p96, %p97
      %s99 = ssub.s32 %s39, %s46
      %p100 = scmp.eq.s32.totalorder %s99, 0
      %s102 = sadd.s32 %s101, 1
      %s103 = scalar_select %p100, %s101, %s102
      %p106 = pneg %p100
      %p107 = scmp.eq.s32.totalorder %s39, 1
      %p108 = por %p106, %p107
      %p109 = scmp.ne.s32.totalorder %s101, %s104
      %p110 = scmp.eq.s32.totalorder %s39, 0
      %p111 = por %p109, %p110
      %p112 = scmp.ne.s32.totalorder %s101, %s104
      %p113 = scmp.eq.s32.totalorder %s44, 1
      %p114 = por %p112, %p113
      %p115 = scmp.ne.s32.totalorder %s104, %s105
      %p116 = scmp.eq.s32.totalorder %s44, 0
      %p117 = por %p115, %p116
      %p118 = scmp.ne.s32.totalorder %s104, %s105
      %p119 = scmp.eq.s32.totalorder %s45, 1
      %p120 = por %p118, %p119
      %p122 = scmp.ne.s32.totalorder %s105, %s121
      %p123 = scmp.eq.s32.totalorder %s45, 0
      %p124 = por %p122, %p123
      %s125 = ssub.s32 %s39, %s46
      %p126 = scmp.eq.s32.totalorder %s125, 0
      %s128 = sadd.s32 %s127, 1
      %s129 = scalar_select %p126, %s127, %s128
      %p132 = pneg %p126
      %p133 = scmp.eq.s32.totalorder %s39, 1
      %p134 = por %p132, %p133
      %p135 = scmp.ne.s32.totalorder %s127, %s130
      %p136 = scmp.eq.s32.totalorder %s39, 0
      %p137 = por %p135, %p136
      %p138 = scmp.ne.s32.totalorder %s127, %s130
      %p139 = scmp.eq.s32.totalorder %s44, 1
      %p140 = por %p138, %p139
      %p141 = scmp.ne.s32.totalorder %s130, %s131
      %p142 = scmp.eq.s32.totalorder %s44, 0
      %p143 = por %p141, %p142
      %p144 = scmp.ne.s32.totalorder %s130, %s131
      %p145 = scmp.eq.s32.totalorder %s45, 1
      %p146 = por %p144, %p145
      %p148 = scmp.ne.s32.totalorder %s131, %s147
      %p149 = scmp.eq.s32.totalorder %s45, 0
      %p150 = por %p148, %p149
      %s152 = sadd.s32 %s151, 1
      %p155 = scmp.eq.s32.totalorder %s39, 1
      %p156 = scmp.ne.s32.totalorder %s151, %s153
      %p157 = scmp.eq.s32.totalorder %s39, 0
      %p158 = por %p156, %p157
      %p159 = scmp.ne.s32.totalorder %s151, %s153
      %p160 = scmp.eq.s32.totalorder %s44, 1
      %p161 = por %p159, %p160
      %p162 = scmp.ne.s32.totalorder %s153, %s154
      %p163 = scmp.eq.s32.totalorder %s44, 0
      %p164 = por %p162, %p163
      %p165 = scmp.ne.s32.totalorder %s153, %s154
      %p166 = scmp.eq.s32.totalorder %s45, 1
      %p167 = por %p165, %p166
      %p169 = scmp.ne.s32.totalorder %s154, %s168
      %p170 = scmp.eq.s32.totalorder %s45, 0
      %p171 = por %p169, %p170
      %s173 = sadd.s32 %s172, 1
      %p176 = scmp.eq.s32.totalorder %s39, 1
      %p177 = scmp.ne.s32.totalorder %s172, %s174
      %p178 = scmp.eq.s32.totalorder %s39, 0
      %p179 = por %p177, %p178
      %p180 = scmp.ne.s32.totalorder %s172, %s174
      %p181 = scmp.eq.s32.totalorder %s44, 1
      %p182 = por %p180, %p181
      %p183 = scmp.ne.s32.totalorder %s174, %s175
      %p184 = scmp.eq.s32.totalorder %s44, 0
      %p185 = por %p183, %p184
      %p186 = scmp.ne.s32.totalorder %s174, %s175
      %p187 = scmp.eq.s32.totalorder %s45, 1
      %p188 = por %p186, %p187
      %p190 = scmp.ne.s32.totalorder %s175, %s189
      %p191 = scmp.eq.s32.totalorder %s45, 0
      %p192 = por %p190, %p191
      %s194 = sadd.s32 %s193, 1
      %p197 = scmp.eq.s32.totalorder %s39, 1
      %p198 = scmp.ne.s32.totalorder %s193, %s195
      %p199 = scmp.eq.s32.totalorder %s39, 0
      %p200 = por %p198, %p199
      %p201 = scmp.ne.s32.totalorder %s193, %s195
      %p202 = scmp.eq.s32.totalorder %s44, 1
      %p203 = por %p201, %p202
      %p204 = scmp.ne.s32.totalorder %s195, %s196
      %p205 = scmp.eq.s32.totalorder %s44, 0
      %p206 = por %p204, %p205
      %p207 = scmp.ne.s32.totalorder %s195, %s196
      %p208 = scmp.eq.s32.totalorder %s45, 1
      %p209 = por %p207, %p208
      %p211 = scmp.ne.s32.totalorder %s196, %s210
      %p212 = scmp.eq.s32.totalorder %s45, 0
      %p213 = por %p211, %p212
      %s215 = sadd.s32 %s214, 1
      %p218 = scmp.eq.s32.totalorder %s39, 1
      %p219 = scmp.ne.s32.totalorder %s214, %s216
      %p220 = scmp.eq.s32.totalorder %s39, 0
      %p221 = por %p219, %p220
      %p222 = scmp.ne.s32.totalorder %s214, %s216
      %p223 = scmp.eq.s32.totalorder %s44, 1
      %p224 = por %p222, %p223
      %p225 = scmp.ne.s32.totalorder %s216, %s217
      %p226 = scmp.eq.s32.totalorder %s44, 0
      %p227 = por %p225, %p226
      %p228 = scmp.ne.s32.totalorder %s216, %s217
      %p229 = scmp.eq.s32.totalorder %s45, 1
      %p230 = por %p228, %p229
      %p232 = scmp.ne.s32.totalorder %s217, %s231
      %p233 = scmp.eq.s32.totalorder %s45, 0
      %p234 = por %p232, %p233
      %s236 = sadd.s32 %s235, 1
      %p239 = scmp.eq.s32.totalorder %s39, 1
      %p240 = scmp.ne.s32.totalorder %s235, %s237
      %p241 = scmp.eq.s32.totalorder %s39, 0
      %p242 = por %p240, %p241
      %p243 = scmp.ne.s32.totalorder %s235, %s237
      %p244 = scmp.eq.s32.totalorder %s44, 1
      %p245 = por %p243, %p244
      %p246 = scmp.ne.s32.totalorder %s237, %s238
      %p247 = scmp.eq.s32.totalorder %s44, 0
      %p248 = por %p246, %p247
      %p249 = scmp.ne.s32.totalorder %s237, %s238
      %p250 = scmp.eq.s32.totalorder %s45, 1
      %p251 = por %p249, %p250
      %p253 = scmp.ne.s32.totalorder %s238, %s252
      %p254 = scmp.eq.s32.totalorder %s45, 0
      %p255 = por %p253, %p254
      %s257 = sadd.s32 %s256, 1
      %p260 = scmp.eq.s32.totalorder %s39, 1
      %p261 = scmp.ne.s32.totalorder %s256, %s258
      %p262 = scmp.eq.s32.totalorder %s39, 0
      %p263 = por %p261, %p262
      %p264 = scmp.ne.s32.totalorder %s256, %s258
      %p265 = scmp.eq.s32.totalorder %s44, 1
      %p266 = por %p264, %p265
      %p267 = scmp.ne.s32.totalorder %s258, %s259
      %p268 = scmp.eq.s32.totalorder %s44, 0
      %p269 = por %p267, %p268
      %p270 = scmp.ne.s32.totalorder %s258, %s259
      %p271 = scmp.eq.s32.totalorder %s45, 1
      %p272 = por %p270, %p271
      %p274 = scmp.ne.s32.totalorder %s259, %s273
      %p275 = scmp.eq.s32.totalorder %s45, 0
      %p276 = por %p274, %p275
      %s278 = sadd.s32 %s277, 1
      %p281 = scmp.eq.s32.totalorder %s39, 1
      %p282 = scmp.ne.s32.totalorder %s277, %s279
      %p283 = scmp.eq.s32.totalorder %s39, 0
      %p284 = por %p282, %p283
      %p285 = scmp.ne.s32.totalorder %s277, %s279
      %p286 = scmp.eq.s32.totalorder %s44, 1
      %p287 = por %p285, %p286
      %p288 = scmp.ne.s32.totalorder %s279, %s280
      %p289 = scmp.eq.s32.totalorder %s44, 0
      %p290 = por %p288, %p289
      %p291 = scmp.ne.s32.totalorder %s279, %s280
      %p292 = scmp.eq.s32.totalorder %s45, 1
      %p293 = por %p291, %p292
      %p295 = scmp.ne.s32.totalorder %s280, %s294
      %p296 = scmp.eq.s32.totalorder %s45, 0
      %p297 = por %p295, %p296
      %s299 = sadd.s32 %s298, 1
      %p302 = scmp.eq.s32.totalorder %s39, 1
      %p303 = scmp.ne.s32.totalorder %s298, %s300
      %p304 = scmp.eq.s32.totalorder %s39, 0
      %p305 = por %p303, %p304
      %p306 = scmp.ne.s32.totalorder %s298, %s300
      %p307 = scmp.eq.s32.totalorder %s44, 1
      %p308 = por %p306, %p307
      %p309 = scmp.ne.s32.totalorder %s300, %s301
      %p310 = scmp.eq.s32.totalorder %s44, 0
      %p311 = por %p309, %p310
      %p312 = scmp.ne.s32.totalorder %s300, %s301
      %p313 = scmp.eq.s32.totalorder %s45, 1
      %p314 = por %p312, %p313
      %p316 = scmp.ne.s32.totalorder %s301, %s315
      %p317 = scmp.eq.s32.totalorder %s45, 0
      %p318 = por %p316, %p317
      %s320 = sadd.s32 %s319, 1
      %p323 = scmp.eq.s32.totalorder %s39, 1
      %p324 = scmp.ne.s32.totalorder %s319, %s321
      %p325 = scmp.eq.s32.totalorder %s39, 0
      %p326 = por %p324, %p325
      %p327 = scmp.ne.s32.totalorder %s319, %s321
      %p328 = scmp.eq.s32.totalorder %s44, 1
      %p329 = por %p327, %p328
      %p330 = scmp.ne.s32.totalorder %s321, %s322
      %p331 = scmp.eq.s32.totalorder %s44, 0
      %p332 = por %p330, %p331
      %p333 = scmp.ne.s32.totalorder %s321, %s322
      %p334 = scmp.eq.s32.totalorder %s45, 1
      %p335 = por %p333, %p334
      %p337 = scmp.ne.s32.totalorder %s322, %s336
      %p338 = scmp.eq.s32.totalorder %s45, 0
      %p339 = por %p337, %p338
      %s341 = sadd.s32 %s340, 1
      %p344 = scmp.eq.s32.totalorder %s39, 1
      %p345 = scmp.ne.s32.totalorder %s340, %s342
      %p346 = scmp.eq.s32.totalorder %s39, 0
      %p347 = por %p345, %p346
      %p348 = scmp.ne.s32.totalorder %s340, %s342
      %p349 = scmp.eq.s32.totalorder %s44, 1
      %p350 = por %p348, %p349
      %p351 = scmp.ne.s32.totalorder %s342, %s343
      %p352 = scmp.eq.s32.totalorder %s44, 0
      %p353 = por %p351, %p352
      %p354 = scmp.ne.s32.totalorder %s342, %s343
      %p355 = scmp.eq.s32.totalorder %s45, 1
      %p356 = por %p354, %p355
      %p358 = scmp.ne.s32.totalorder %s343, %s357
      %p359 = scmp.eq.s32.totalorder %s45, 0
      %p360 = por %p358, %p359
      %s362 = sadd.s32 %s361, 1
      %p365 = scmp.eq.s32.totalorder %s39, 1
      %p366 = scmp.ne.s32.totalorder %s361, %s363
      %p367 = scmp.eq.s32.totalorder %s39, 0
      %p368 = por %p366, %p367
      %p369 = scmp.ne.s32.totalorder %s361, %s363
      %p370 = scmp.eq.s32.totalorder %s44, 1
      %p371 = por %p369, %p370
      %p372 = scmp.ne.s32.totalorder %s363, %s364
      %p373 = scmp.eq.s32.totalorder %s44, 0
      %p374 = por %p372, %p373
      %p375 = scmp.ne.s32.totalorder %s363, %s364
      %p376 = scmp.eq.s32.totalorder %s45, 1
      %p377 = por %p375, %p376
      %p379 = scmp.ne.s32.totalorder %s364, %s378
      %p380 = scmp.eq.s32.totalorder %s45, 0
      %p381 = por %p379, %p380
      %s383 = sadd.s32 %s382, 1
      %p386 = scmp.eq.s32.totalorder %s39, 1
      %p387 = scmp.ne.s32.totalorder %s382, %s384
      %p388 = scmp.eq.s32.totalorder %s39, 0
      %p389 = por %p387, %p388
      %p390 = scmp.ne.s32.totalorder %s382, %s384
      %p391 = scmp.eq.s32.totalorder %s44, 1
      %p392 = por %p390, %p391
      %p393 = scmp.ne.s32.totalorder %s384, %s385
      %p394 = scmp.eq.s32.totalorder %s44, 0
      %p395 = por %p393, %p394
      %p396 = scmp.ne.s32.totalorder %s384, %s385
      %p397 = scmp.eq.s32.totalorder %s45, 1
      %p398 = por %p396, %p397
      %p400 = scmp.ne.s32.totalorder %s385, %s399
      %p401 = scmp.eq.s32.totalorder %s45, 0
      %p402 = por %p400, %p401
      %s404 = sadd.s32 %s403, 1
      %p407 = scmp.eq.s32.totalorder %s39, 1
      %p408 = scmp.ne.s32.totalorder %s403, %s405
      %p409 = scmp.eq.s32.totalorder %s39, 0
      %p410 = por %p408, %p409
      %p411 = scmp.ne.s32.totalorder %s403, %s405
      %p412 = scmp.eq.s32.totalorder %s44, 1
      %p413 = por %p411, %p412
      %p414 = scmp.ne.s32.totalorder %s405, %s406
      %p415 = scmp.eq.s32.totalorder %s44, 0
      %p416 = por %p414, %p415
      %p417 = scmp.ne.s32.totalorder %s405, %s406
      %p418 = scmp.eq.s32.totalorder %s45, 1
      %p419 = por %p417, %p418
      %p421 = scmp.ne.s32.totalorder %s406, %s420
      %p422 = scmp.eq.s32.totalorder %s45, 0
      %p423 = por %p421, %p422
      %s425 = sadd.s32 %s424, 1
      %p428 = scmp.eq.s32.totalorder %s39, 1
      %p429 = scmp.ne.s32.totalorder %s424, %s426
      %p430 = scmp.eq.s32.totalorder %s39, 0
      %p431 = por %p429, %p430
      %p432 = scmp.ne.s32.totalorder %s424, %s426
      %p433 = scmp.eq.s32.totalorder %s44, 1
      %p434 = por %p432, %p433
      %p435 = scmp.ne.s32.totalorder %s426, %s427
      %p436 = scmp.eq.s32.totalorder %s44, 0
      %p437 = por %p435, %p436
      %p438 = scmp.ne.s32.totalorder %s426, %s427
      %p439 = scmp.eq.s32.totalorder %s45, 1
      %p440 = por %p438, %p439
      %p442 = scmp.ne.s32.totalorder %s427, %s441
      %p443 = scmp.eq.s32.totalorder %s45, 0
      %p444 = por %p442, %p443
      %s446 = sadd.s32 %s445, 1
      %p449 = scmp.eq.s32.totalorder %s39, 1
      %p450 = scmp.ne.s32.totalorder %s445, %s447
      %p451 = scmp.eq.s32.totalorder %s39, 0
      %p452 = por %p450, %p451
      %p453 = scmp.ne.s32.totalorder %s445, %s447
      %p454 = scmp.eq.s32.totalorder %s44, 1
      %p455 = por %p453, %p454
      %p456 = scmp.ne.s32.totalorder %s447, %s448
      %p457 = scmp.eq.s32.totalorder %s44, 0
      %p458 = por %p456, %p457
      %p459 = scmp.ne.s32.totalorder %s447, %s448
      %p460 = scmp.eq.s32.totalorder %s45, 1
      %p461 = por %p459, %p460
      %p463 = scmp.ne.s32.totalorder %s448, %s462
      %p464 = scmp.eq.s32.totalorder %s45, 0
      %p465 = por %p463, %p464
      %s467 = sadd.s32 %s466, 1
      %p470 = scmp.eq.s32.totalorder %s39, 1
      %p471 = scmp.ne.s32.totalorder %s466, %s468
      %p472 = scmp.eq.s32.totalorder %s39, 0
      %p473 = por %p471, %p472
      %p474 = scmp.ne.s32.totalorder %s466, %s468
      %p475 = scmp.eq.s32.totalorder %s44, 1
      %p476 = por %p474, %p475
      %p477 = scmp.ne.s32.totalorder %s468, %s469
      %p478 = scmp.eq.s32.totalorder %s44, 0
      %p479 = por %p477, %p478
      %p480 = scmp.ne.s32.totalorder %s468, %s469
      %p481 = scmp.eq.s32.totalorder %s45, 1
      %p482 = por %p480, %p481
      %p484 = scmp.ne.s32.totalorder %s469, %s483
      %p485 = scmp.eq.s32.totalorder %s45, 0
      %p486 = por %p484, %p485
      %s488 = sadd.s32 %s487, 1
      %p491 = scmp.eq.s32.totalorder %s39, 1
      %p492 = scmp.ne.s32.totalorder %s487, %s489
      %p493 = scmp.eq.s32.totalorder %s39, 0
      %p494 = por %p492, %p493
      %p495 = scmp.ne.s32.totalorder %s487, %s489
      %p496 = scmp.eq.s32.totalorder %s44, 1
      %p497 = por %p495, %p496
      %p498 = scmp.ne.s32.totalorder %s489, %s490
      %p499 = scmp.eq.s32.totalorder %s44, 0
      %p500 = por %p498, %p499
      %p501 = scmp.ne.s32.totalorder %s489, %s490
      %p502 = scmp.eq.s32.totalorder %s45, 1
      %p503 = por %p501, %p502
      %p505 = scmp.ne.s32.totalorder %s490, %s504
      %p506 = scmp.eq.s32.totalorder %s45, 0
      %p507 = por %p505, %p506
      %s508 = ssub.s32 %s39, %s46
      %p509 = scmp.eq.s32.totalorder %s508, 0
      %s511 = sadd.s32 %s510, 1
      %s512 = scalar_select %p509, %s510, %s511
      %p515 = pneg %p509
      %p516 = scmp.eq.s32.totalorder %s39, 1
      %p517 = por %p515, %p516
      %p518 = scmp.ne.s32.totalorder %s510, %s513
      %p519 = scmp.eq.s32.totalorder %s39, 0
      %p520 = por %p518, %p519
      %p521 = scmp.ne.s32.totalorder %s510, %s513
      %p522 = scmp.eq.s32.totalorder %s44, 1
      %p523 = por %p521, %p522
      %p524 = scmp.ne.s32.totalorder %s513, %s514
      %p525 = scmp.eq.s32.totalorder %s44, 0
      %p526 = por %p524, %p525
      %p527 = scmp.ne.s32.totalorder %s513, %s514
      %p528 = scmp.eq.s32.totalorder %s45, 1
      %p529 = por %p527, %p528
      %p531 = scmp.ne.s32.totalorder %s514, %s530
      %p532 = scmp.eq.s32.totalorder %s45, 0
      %p533 = por %p531, %p532
      %p534 = scmp.le.s32.totalorder 1, %s39
      %p535 = scmp.lt.s32.totalorder %s39, 3
      %p536 = pnand %p534, %p535
      %p537 = pneg %p536
      // Predicated region
      $region9: #{decoder_forward.3} parent=5 // pred_check
        _
      $region10: #{decoder_forward.3} parent=5 // pred_check_branch
        %539 = sbr.rel (%p536) target = $region12
      $region11: #{decoder_forward.3} parent=5 // pred_region
        %s540 = ssub.s32 %s39, 1
        // Predicated region
        $region13: #{decoder_forward.3} parent=11 // pred_check
          %p541 = pneg %p164
        $region14: #{decoder_forward.3} parent=11 // pred_check_branch
          %543 = sbr.rel (%p541) target = $region16
        $region15: #{decoder_forward.3} parent=11 // pred_region
          _
        $region16: #{decoder_forward.3} parent=11 // pred_fallthru
          _
        // Predicated region
        $region17: #{decoder_forward.3} parent=11 // pred_check
          %p544 = pneg %p185
        $region18: #{decoder_forward.3} parent=11 // pred_check_branch
          %546 = sbr.rel (%p544) target = $region20
        $region19: #{decoder_forward.3} parent=11 // pred_region
          _
        $region20: #{decoder_forward.3} parent=11 // pred_fallthru
          _
        // Predicated region
        $region21: #{decoder_forward.3} parent=11 // pred_check
          %p547 = pneg %p206
        $region22: #{decoder_forward.3} parent=11 // pred_check_branch
          %549 = sbr.rel (%p547) target = $region24
        $region23: #{decoder_forward.3} parent=11 // pred_region
          _
        $region24: #{decoder_forward.3} parent=11 // pred_fallthru
          _
        // Predicated region
        $region25: #{decoder_forward.3} parent=11 // pred_check
          %p550 = pneg %p227
        $region26: #{decoder_forward.3} parent=11 // pred_check_branch
          %552 = sbr.rel (%p550) target = $region28
        $region27: #{decoder_forward.3} parent=11 // pred_region
          %s554 = ssub.s32 512, 512
          %555 = vsyncadd [#allocation5], %s554
          %s556 = sshll.u32 [#allocation6], 4
          %s557 = int_to_ptr.vmem [resolvable:$true] %s556
          %562 = dma.hbm_to_vmem [thread:$0]  %s7, 512, %s557, [#allocation5], 128, 128, 8
        $region28: #{decoder_forward.3} parent=11 // pred_fallthru
          _
        // Predicated region
        $region29: #{decoder_forward.3} parent=11 // pred_check
          %p563 = pneg %p248
        $region30: #{decoder_forward.3} parent=11 // pred_check_branch
          %565 = sbr.rel (%p563) target = $region32
        $region31: #{decoder_forward.3} parent=11 // pred_region
          %s567 = ssub.s32 16, 16
          %568 = vsyncadd [#allocation8], %s567
          %s570 = sshll.u32 [#allocation7], 4
          %s571 = int_to_ptr.vmem [resolvable:$true] %s570
          %573 = dma.hbm_to_vmem [thread:$0]  %s8, 16, %s571, [#allocation8]
        $region32: #{decoder_forward.3} parent=11 // pred_fallthru
          _
        // Predicated region
        $region33: #{decoder_forward.3} parent=11 // pred_check
          %p574 = pneg %p269
        $region34: #{decoder_forward.3} parent=11 // pred_check_branch
          %576 = sbr.rel (%p574) target = $region36
        $region35: #{decoder_forward.3} parent=11 // pred_region
          %s578 = ssub.s32 512, 512
          %579 = vsyncadd [#allocation8], %s578
          %s580 = sshll.u32 [#allocation9], 4
          %s581 = int_to_ptr.vmem [resolvable:$true] %s580
          %586 = dma.hbm_to_vmem [thread:$0]  %s9, 512, %s581, [#allocation8], 128, 128, 8
        $region36: #{decoder_forward.3} parent=11 // pred_fallthru
          _
        // Predicated region
        $region37: #{decoder_forward.3} parent=11 // pred_check
          %p587 = pneg %p290
        $region38: #{decoder_forward.3} parent=11 // pred_check_branch
          %589 = sbr.rel (%p587) target = $region40
        $region39: #{decoder_forward.3} parent=11 // pred_region
          %s591 = ssub.s32 16, 16
          %592 = vsyncadd [#allocation11], %s591
          %s594 = sshll.u32 [#allocation10], 4
          %s595 = int_to_ptr.vmem [resolvable:$true] %s594
          %597 = dma.hbm_to_vmem [thread:$0]  %s10, 16, %s595, [#allocation11]
        $region40: #{decoder_forward.3} parent=11 // pred_fallthru
          _
        // Predicated region
        $region41: #{decoder_forward.3} parent=11 // pred_check
          %p598 = pneg %p311
        $region42: #{decoder_forward.3} parent=11 // pred_check_branch
          %600 = sbr.rel (%p598) target = $region44
        $region43: #{decoder_forward.3} parent=11 // pred_region
          %s602 = ssub.s32 512, 512
          %603 = vsyncadd [#allocation11], %s602
          %s604 = sshll.u32 [#allocation12], 4
          %s605 = int_to_ptr.vmem [resolvable:$true] %s604
          %610 = dma.hbm_to_vmem [thread:$0]  %s11, 512, %s605, [#allocation11], 128, 128, 8
        $region44: #{decoder_forward.3} parent=11 // pred_fallthru
          _
        // Predicated region
        $region45: #{decoder_forward.3} parent=11 // pred_check
          %p611 = pneg %p332
        $region46: #{decoder_forward.3} parent=11 // pred_check_branch
          %613 = sbr.rel (%p611) target = $region48
        $region47: #{decoder_forward.3} parent=11 // pred_region
          %s615 = ssub.s32 16, 16
          %616 = vsyncadd [#allocation14], %s615
          %s618 = sshll.u32 [#allocation13], 4
          %s619 = int_to_ptr.vmem [resolvable:$true] %s618
          %621 = dma.hbm_to_vmem [thread:$0]  %s12, 16, %s619, [#allocation14]
        $region48: #{decoder_forward.3} parent=11 // pred_fallthru
          _
        // Predicated region
        $region49: #{decoder_forward.3} parent=11 // pred_check
          %p622 = pneg %p353
        $region50: #{decoder_forward.3} parent=11 // pred_check_branch
          %624 = sbr.rel (%p622) target = $region52
        $region51: #{decoder_forward.3} parent=11 // pred_region
          %s626 = ssub.s32 512, 512
          %627 = vsyncadd [#allocation14], %s626
          %s628 = sshll.u32 [#allocation15], 4
          %s629 = int_to_ptr.vmem [resolvable:$true] %s628
          %634 = dma.hbm_to_vmem [thread:$0]  %s13, 512, %s629, [#allocation14], 128, 128, 8
        $region52: #{decoder_forward.3} parent=11 // pred_fallthru
          _
        // Predicated region
        $region53: #{decoder_forward.3} parent=11 // pred_check
          %p635 = pneg %p374
        $region54: #{decoder_forward.3} parent=11 // pred_check_branch
          %637 = sbr.rel (%p635) target = $region56
        $region55: #{decoder_forward.3} parent=11 // pred_region
          %s639 = ssub.s32 16, 16
          %640 = vsyncadd [#allocation17], %s639
          %s642 = sshll.u32 [#allocation16], 4
          %s643 = int_to_ptr.vmem [resolvable:$true] %s642
          %645 = dma.hbm_to_vmem [thread:$0]  %s14, 16, %s643, [#allocation17]
        $region56: #{decoder_forward.3} parent=11 // pred_fallthru
          _
        // Predicated region
        $region57: #{decoder_forward.3} parent=11 // pred_check
          %p646 = pneg %p395
        $region58: #{decoder_forward.3} parent=11 // pred_check_branch
          %648 = sbr.rel (%p646) target = $region60
        $region59: #{decoder_forward.3} parent=11 // pred_region
          %s650 = ssub.s32 512, 512
          %651 = vsyncadd [#allocation17], %s650
          %s652 = sshll.u32 [#allocation18], 4
          %s653 = int_to_ptr.vmem [resolvable:$true] %s652
          %658 = dma.hbm_to_vmem [thread:$0]  %s15, 512, %s653, [#allocation17], 128, 128, 8
        $region60: #{decoder_forward.3} parent=11 // pred_fallthru
          _
        // Predicated region
        $region61: #{decoder_forward.3} parent=11 // pred_check
          %p659 = pneg %p416
        $region62: #{decoder_forward.3} parent=11 // pred_check_branch
          %661 = sbr.rel (%p659) target = $region64
        $region63: #{decoder_forward.3} parent=11 // pred_region
          %s663 = ssub.s32 16, 16
          %664 = vsyncadd [#allocation20], %s663
          %s666 = sshll.u32 [#allocation19], 4
          %s667 = int_to_ptr.vmem [resolvable:$true] %s666
          %669 = dma.hbm_to_vmem [thread:$0]  %s16, 16, %s667, [#allocation20]
        $region64: #{decoder_forward.3} parent=11 // pred_fallthru
          _
        // Predicated region
        $region65: #{decoder_forward.3} parent=11 // pred_check
          %p670 = pneg %p437
        $region66: #{decoder_forward.3} parent=11 // pred_check_branch
          %672 = sbr.rel (%p670) target = $region68
        $region67: #{decoder_forward.3} parent=11 // pred_region
          _
        $region68: #{decoder_forward.3} parent=11 // pred_fallthru
          _
        // Predicated region
        $region69: #{decoder_forward.3} parent=11 // pred_check
          %p673 = pneg %p458
        $region70: #{decoder_forward.3} parent=11 // pred_check_branch
          %675 = sbr.rel (%p673) target = $region72
        $region71: #{decoder_forward.3} parent=11 // pred_region
          %s677 = ssub.s32 16, 16
          %678 = vsyncadd [#allocation20], %s677
          %s680 = sshll.u32 [#allocation21], 4
          %s681 = int_to_ptr.vmem [resolvable:$true] %s680
          %683 = dma.hbm_to_vmem [thread:$0]  %s18, 16, %s681, [#allocation20]
        $region72: #{decoder_forward.3} parent=11 // pred_fallthru
          _
        // Predicated region
        $region73: #{decoder_forward.3} parent=11 // pred_check
          %p684 = pneg %p479
        $region74: #{decoder_forward.3} parent=11 // pred_check_branch
          %686 = sbr.rel (%p684) target = $region76
        $region75: #{decoder_forward.3} parent=11 // pred_region
          _
        $region76: #{decoder_forward.3} parent=11 // pred_fallthru
          _
        // Predicated region
        $region77: #{decoder_forward.3} parent=11 // pred_check
          %p687 = pneg %p500
        $region78: #{decoder_forward.3} parent=11 // pred_check_branch
          %689 = sbr.rel (%p687) target = $region80
        $region79: #{decoder_forward.3} parent=11 // pred_region
          %s691 = ssub.s32 16, 16
          %692 = vsyncadd [#allocation23], %s691
          %s694 = sshll.u32 [#allocation22], 4
          %s695 = int_to_ptr.vmem [resolvable:$true] %s694
          %697 = dma.hbm_to_vmem [thread:$0]  %s20, 16, %s695, [#allocation23]
        $region80: #{decoder_forward.3} parent=11 // pred_fallthru
          _
      $region12: #{decoder_forward.3} parent=5 // pred_fallthru
        _
      %p698 = scmp.lt.s32.totalorder %s39, 2
      // Predicated region
      $region81: #{decoder_forward.3} parent=5 // pred_check
        %p699 = pneg %p698
      $region82: #{decoder_forward.3} parent=5 // pred_check_branch
        %701 = sbr.rel (%p699) target = $region84
      $region83: #{decoder_forward.3} parent=5 // pred_region
        // Predicated region
        $region85: #{decoder_forward.3} parent=83 // pred_check
          %p702 = pneg %p59
        $region86: #{decoder_forward.3} parent=83 // pred_check_branch
          %704 = sbr.rel (%p702) target = $region88
        $region87: #{decoder_forward.3} parent=83 // pred_region
          %s705 = sand.u32 %s49, 1
          %s706 = scalar_lea.sflag [#allocation3], %s705
          %s707 = sand.u32 %s49, 1
          %s708 = smul.addr %s707, 8
          %s709 = scalar_lea.vmem [#allocation2], %s708
          %s711 = ssub.s32 128, 128
          %712 = vsyncadd %s706, %s711
          %s713 = smul.addr %s39, 128
          %s714 = scalar_lea.hbm %s0, %s713
          %s716 = sshll.u32 %s709, 4
          %s717 = int_to_ptr.vmem [resolvable:$true] %s716
          %719 = dma.hbm_to_vmem [thread:$0]  %s714, 128, %s717, %s706
        $region88: #{decoder_forward.3} parent=83 // pred_fallthru
          _
        // Predicated region
        $region89: #{decoder_forward.3} parent=83 // pred_check
          %p720 = pneg %p85
        $region90: #{decoder_forward.3} parent=83 // pred_check_branch
          %722 = sbr.rel (%p720) target = $region92
        $region91: #{decoder_forward.3} parent=83 // pred_region
          %s723 = sand.u32 %s39, 1
          %s724 = scalar_lea.sflag [#allocation5], %s723
          %s725 = sand.u32 %s75, 1
          %s726 = smul.addr %s725, 8
          %s727 = scalar_lea.vmem [#allocation4], %s726
          %s729 = ssub.s32 128, 128
          %730 = vsyncadd %s724, %s729
          %s731 = smul.addr %s39, 128
          %s732 = scalar_lea.hbm %s1, %s731
          %s734 = sshll.u32 %s727, 4
          %s735 = int_to_ptr.vmem [resolvable:$true] %s734
          %737 = dma.hbm_to_vmem [thread:$0]  %s732, 128, %s735, %s724
        $region92: #{decoder_forward.3} parent=83 // pred_fallthru
          _
        // Predicated region
        $region93: #{decoder_forward.3} parent=83 // pred_check
          %p738 = pneg %p111
        $region94: #{decoder_forward.3} parent=83 // pred_check_branch
          %740 = sbr.rel (%p738) target = $region96
        $region95: #{decoder_forward.3} parent=83 // pred_region
          %p741 = scmp.lt.s32.totalorder %s39, 1
          %s742 = scalar_select %p741, %s39, 1
          %s743 = smul.addr %s742, 8
          %s744 = scalar_lea.vmem %s2, %s743
        $region96: #{decoder_forward.3} parent=83 // pred_fallthru
          _
        // Predicated region
        $region97: #{decoder_forward.3} parent=83 // pred_check
          %p745 = pneg %p137
        $region98: #{decoder_forward.3} parent=83 // pred_check_branch
          %747 = sbr.rel (%p745) target = $region100
        $region99: #{decoder_forward.3} parent=83 // pred_region
          %p748 = scmp.lt.s32.totalorder %s39, 1
          %s749 = scalar_select %p748, %s39, 1
          %s750 = smul.addr %s749, 8
          %s751 = scalar_lea.vmem %s3, %s750
        $region100: #{decoder_forward.3} parent=83 // pred_fallthru
          _
      $region84: #{decoder_forward.3} parent=5 // pred_fallthru
        _
      %p752 = scmp.le.s32.totalorder 1, %s39
      %p753 = scmp.lt.s32.totalorder %s39, 3
      %p754 = pnand %p752, %p753
      %p755 = pneg %p754
      // Predicated region
      $region101: #{decoder_forward.3} parent=5 // pred_check
        _
      $region102: #{decoder_forward.3} parent=5 // pred_check_branch
        %757 = sbr.rel (%p754) target = $region104
      $region103: #{decoder_forward.3} parent=5 // pred_region
        %s758 = ssub.s32 %s39, 1
        %s759 = sand.u32 %s52, 1
        %s760 = scalar_lea.sflag [#allocation3], %s759
        %s761 = sand.u32 %s52, 1
        %s762 = smul.addr %s761, 8
        %s763 = scalar_lea.vmem [#allocation2], %s762
        // Predicated region
        $region105: #{decoder_forward.3} parent=103 // pred_check
          %p764 = pneg %p65
        $region106: #{decoder_forward.3} parent=103 // pred_check_branch
          %766 = sbr.rel (%p764) target = $region108
        $region107: #{decoder_forward.3} parent=103 // pred_region
          %767 = dma.done %s760, 128
        $region108: #{decoder_forward.3} parent=103 // pred_fallthru
          _
        %s768 = sand.u32 %s44, 1
        %s769 = scalar_lea.sflag [#allocation5], %s768
        %s770 = sand.u32 %s78, 1
        %s771 = smul.addr %s770, 8
        %s772 = scalar_lea.vmem [#allocation4], %s771
        // Predicated region
        $region109: #{decoder_forward.3} parent=103 // pred_check
          %p773 = pneg %p91
        $region110: #{decoder_forward.3} parent=103 // pred_check_branch
          %775 = sbr.rel (%p773) target = $region112
        $region111: #{decoder_forward.3} parent=103 // pred_region
          %776 = dma.done %s769, 128
        $region112: #{decoder_forward.3} parent=103 // pred_fallthru
          _
        // Predicated region
        $region113: #{decoder_forward.3} parent=103 // pred_check
          %p777 = pneg %p227
        $region114: #{decoder_forward.3} parent=103 // pred_check_branch
          %779 = sbr.rel (%p777) target = $region116
        $region115: #{decoder_forward.3} parent=103 // pred_region
          %780 = dma.done [#allocation5], 512
        $region116: #{decoder_forward.3} parent=103 // pred_fallthru
          _
        // Predicated region
        $region117: #{decoder_forward.3} parent=103 // pred_check
          %p781 = pneg %p248
        $region118: #{decoder_forward.3} parent=103 // pred_check_branch
          %783 = sbr.rel (%p781) target = $region120
        $region119: #{decoder_forward.3} parent=103 // pred_region
          %784 = dma.done [#allocation8], 16
        $region120: #{decoder_forward.3} parent=103 // pred_fallthru
          _
        // Predicated region
        $region121: #{decoder_forward.3} parent=103 // pred_check
          %p785 = pneg %p269
        $region122: #{decoder_forward.3} parent=103 // pred_check_branch
          %787 = sbr.rel (%p785) target = $region124
        $region123: #{decoder_forward.3} parent=103 // pred_region
          %788 = dma.done [#allocation8], 512
        $region124: #{decoder_forward.3} parent=103 // pred_fallthru
          _
        // Predicated region
        $region125: #{decoder_forward.3} parent=103 // pred_check
          %p789 = pneg %p290
        $region126: #{decoder_forward.3} parent=103 // pred_check_branch
          %791 = sbr.rel (%p789) target = $region128
        $region127: #{decoder_forward.3} parent=103 // pred_region
          %792 = dma.done [#allocation11], 16
        $region128: #{decoder_forward.3} parent=103 // pred_fallthru
          _
        // Predicated region
        $region129: #{decoder_forward.3} parent=103 // pred_check
          %p793 = pneg %p311
        $region130: #{decoder_forward.3} parent=103 // pred_check_branch
          %795 = sbr.rel (%p793) target = $region132
        $region131: #{decoder_forward.3} parent=103 // pred_region
          %796 = dma.done [#allocation11], 512
        $region132: #{decoder_forward.3} parent=103 // pred_fallthru
          _
        // Predicated region
        $region133: #{decoder_forward.3} parent=103 // pred_check
          %p797 = pneg %p332
        $region134: #{decoder_forward.3} parent=103 // pred_check_branch
          %799 = sbr.rel (%p797) target = $region136
        $region135: #{decoder_forward.3} parent=103 // pred_region
          %800 = dma.done [#allocation14], 16
        $region136: #{decoder_forward.3} parent=103 // pred_fallthru
          _
        // Predicated region
        $region137: #{decoder_forward.3} parent=103 // pred_check
          %p801 = pneg %p353
        $region138: #{decoder_forward.3} parent=103 // pred_check_branch
          %803 = sbr.rel (%p801) target = $region140
        $region139: #{decoder_forward.3} parent=103 // pred_region
          %804 = dma.done [#allocation14], 512
        $region140: #{decoder_forward.3} parent=103 // pred_fallthru
          _
        // Predicated region
        $region141: #{decoder_forward.3} parent=103 // pred_check
          %p805 = pneg %p374
        $region142: #{decoder_forward.3} parent=103 // pred_check_branch
          %807 = sbr.rel (%p805) target = $region144
        $region143: #{decoder_forward.3} parent=103 // pred_region
          %808 = dma.done [#allocation17], 16
        $region144: #{decoder_forward.3} parent=103 // pred_fallthru
          _
        // Predicated region
        $region145: #{decoder_forward.3} parent=103 // pred_check
          %p809 = pneg %p395
        $region146: #{decoder_forward.3} parent=103 // pred_check_branch
          %811 = sbr.rel (%p809) target = $region148
        $region147: #{decoder_forward.3} parent=103 // pred_region
          %812 = dma.done [#allocation17], 512
        $region148: #{decoder_forward.3} parent=103 // pred_fallthru
          _
        // Predicated region
        $region149: #{decoder_forward.3} parent=103 // pred_check
          %p813 = pneg %p416
        $region150: #{decoder_forward.3} parent=103 // pred_check_branch
          %815 = sbr.rel (%p813) target = $region152
        $region151: #{decoder_forward.3} parent=103 // pred_region
          %816 = dma.done [#allocation20], 16
        $region152: #{decoder_forward.3} parent=103 // pred_fallthru
          _
        // Predicated region
        $region153: #{decoder_forward.3} parent=103 // pred_check
          %p817 = pneg %p458
        $region154: #{decoder_forward.3} parent=103 // pred_check_branch
          %819 = sbr.rel (%p817) target = $region156
        $region155: #{decoder_forward.3} parent=103 // pred_region
          %820 = dma.done [#allocation20], 16
        $region156: #{decoder_forward.3} parent=103 // pred_fallthru
          _
        // Predicated region
        $region157: #{decoder_forward.3} parent=103 // pred_check
          %p821 = pneg %p500
        $region158: #{decoder_forward.3} parent=103 // pred_check_branch
          %823 = sbr.rel (%p821) target = $region160
        $region159: #{decoder_forward.3} parent=103 // pred_region
          %824 = dma.done [#allocation23], 16
        $region160: #{decoder_forward.3} parent=103 // pred_fallthru
          _
        %s825 = sand.u32 %s52, 1
        %s826 = scalar_lea.sflag [#allocation3], %s825
        %s827 = sand.u32 %s52, 1
        %s828 = smul.addr %s827, 8
        %s829 = scalar_lea.vmem [#allocation2], %s828
        %p830 = pneg %p65
        %p831 = pneg %p62
        %s832 = sand.u32 %s44, 1
        %s833 = scalar_lea.sflag [#allocation5], %s832
        %s834 = sand.u32 %s78, 1
        %s835 = smul.addr %s834, 8
        %s836 = scalar_lea.vmem [#allocation4], %s835
        %p837 = pneg %p91
        %p838 = pneg %p88
        %p839 = scmp.lt.s32.totalorder %s44, 1
        %s840 = scalar_select %p839, %s44, 1
        %s841 = smul.addr %s840, 8
        %s842 = scalar_lea.vmem %s2, %s841
        %p843 = pneg %p117
        %p844 = pneg %p114
        %p845 = scmp.lt.s32.totalorder %s44, 1
        %s846 = scalar_select %p845, %s44, 1
        %s847 = smul.addr %s846, 8
        %s848 = scalar_lea.vmem %s3, %s847
        %p849 = pneg %p143
        %p850 = pneg %p140
        %p851 = pneg %p164
        %p852 = pneg %p161
        %p853 = pneg %p185
        %p854 = pneg %p182
        %p855 = pneg %p206
        %p856 = pneg %p203
        %p857 = pneg %p227
        %p858 = pneg %p224
        %p859 = pneg %p248
        %p860 = pneg %p245
        %p861 = pneg %p269
        %p862 = pneg %p266
        %p863 = pneg %p290
        %p864 = pneg %p287
        %p865 = pneg %p311
        %p866 = pneg %p308
        %p867 = pneg %p332
        %p868 = pneg %p329
        %p869 = pneg %p353
        %p870 = pneg %p350
        %p871 = pneg %p374
        %p872 = pneg %p371
        %p873 = pneg %p395
        %p874 = pneg %p392
        %p875 = pneg %p416
        %p876 = pneg %p413
        %p877 = pneg %p437
        %p878 = pneg %p434
        %p879 = pneg %p458
        %p880 = pneg %p455
        %p881 = pneg %p479
        %p882 = pneg %p476
        %p883 = pneg %p500
        %p884 = pneg %p497
        %p885 = pneg %p526
        %p886 = pneg %p523
        %p887 = scmp.lt.s32.totalorder %s44, 1
        %s888 = scalar_select %p887, %s44, 1
        %s889 = smul.addr %s888, 8
        %s890 = scalar_lea.vmem %s21, %s889
        %p891 = scmp.lt.s32.totalorder %s44, 1
        %s892 = scalar_select %p891, %s44, 1
        %s893 = smul.addr %s892, 8
        %s894 = scalar_lea.vmem %s2, %s893
        %p895 = scmp.lt.s32.totalorder %s44, 1
        %s896 = scalar_select %p895, %s44, 1
        %s897 = smul.addr %s896, 8
        %s898 = scalar_lea.vmem %s3, %s897
        %p899 = scmp.lt.s32.totalorder %s44, 1
        %s900 = scalar_select %p899, %s44, 1
        %s901 = smul.addr %s900, 8
        %s902 = scalar_lea.vmem %s21, %s901
        %v903 = vld [vmem:[%s763] sm:$0xff]
        %vm904 = vcmask 261120
        %v905 = vsel %vm904, %v903, 0.0
        %906 = vadd.xlane.f32.xlu0 %v905
        %v907 = vpop.xlane.xlu0 %906
        %v908 = vrcp.pop 32.0
        %v909 = vmul.f32 %v907, %v908
        %v910 = vsub.f32 %v903, %v909
        %v911 = vmul.f32 %v910, %v910
        %v912 = vsel %vm904, %v911, 0.0
        %913 = vadd.xlane.f32.xlu0 %v912
        %v914 = vpop.xlane.xlu0 %913
        %v915 = vmul.f32 %v914, %v908
        %v916 = vadd.f32 %v915, 1e-05
        %v917 = vrsqrt.pop %v916
        %v918 = vmul.f32 %v910, %v917
        %v919 = vld [vmem:[%s4] sm:$0x1]
        %v920 = vlaneseq
        %v921 = vshrl.u32 %v920, 7
        %v922 = vsub.s32 0, %v921
        %v923 = vrot.slane %v919, %v922
        %v924 = vmul.f32 %v918, %v923
        %v925 = vld [vmem:[%s4 + $0x1] sm:$0x1]
        %v926 = vlaneseq
        %v927 = vshrl.u32 %v926, 7
        %v928 = vsub.s32 0, %v927
        %v929 = vrot.slane %v925, %v928
        %v930 = vadd.f32 %v924, %v929
        %v931 = vld [vmem:[#allocation6] sm:$0xff]
        %v932 = vld [vmem:[#allocation6 + $0x8] sm:$0xff]
        %v933 = vld [vmem:[#allocation6 + $0x10] sm:$0xff]
        %v934 = vld [vmem:[#allocation6 + $0x18] sm:$0xff]
        %v935 = vld [vmem:[#allocation7] sm:$0x1]
        %v937 = vlaneseq
        %v938 = vshrl.u32 %v937, 7
        %v939 = vsub.s32 0, %v938
        %v940 = vrot.slane %v935, %v939
        %v943 = vsel %vm904, %v930, 0
        %945 = vmatprep.subr.mxu0 0.0
        %946 = vmatpush1.msra.mxu0 0.0
        %947 = vmatprep.subr.mxu0 0.0
        %948 = vmatpush1.msra.mxu0 0.0
        %949 = vmatprep.subr.mxu0 0.0
        %950 = vmatpush1.msra.mxu0 0.0
        %951 = vmatprep.subr.mxu0 0.0
        %952 = vmatpush1.msra.mxu0 0.0
        %953 = vmatprep.subr.mxu0 0.0
        %954 = vmatpush1.msra.mxu0 0.0
        %955 = vmatprep.subr.mxu0 0.0
        %956 = vmatpush1.msra.mxu0 0.0
        %957 = vmatprep.subr.mxu0 0.0
        %958 = vmatpush1.msra.mxu0 0.0
        %959 = vmatprep.subr.mxu0 0.0
        %960 = vmatpush1.msra.mxu0 0.0
        %961 = vmatprep.subr.mxu0 0.0
        %962 = vmatpush1.msra.mxu0 0.0
        %963 = vmatprep.subr.mxu0 0.0
        %964 = vmatpush1.msra.mxu0 0.0
        %965 = vmatprep.subr.mxu0 0.0
        %966 = vmatpush1.msra.mxu0 0.0
        %967 = vmatprep.subr.mxu0 0.0
        %968 = vmatpush1.msra.mxu0 0.0
        %969 = vmatprep.subr.mxu0 0.0
        %970 = vmatpush1.msra.mxu0 %v934
        %971 = vmatprep.subr.mxu0 0.0
        %972 = vmatpush1.msra.mxu0 %v933
        %973 = vmatprep.subr.mxu0 0.0
        %974 = vmatpush1.msra.mxu0 %v932
        %975 = vmatprep.subr.mxu0 0.0
        %976 = vmatpush1.msra.mxu0 %v931
        %977 = vmatprep.subr.mxu0 0.0
        %978 = vmatpush2.msra.mxu0 0.0
        %979 = vmatprep.subr.mxu0 0.0
        %980 = vmatpush2.msra.mxu0 0.0
        %981 = vmatprep.subr.mxu0 0.0
        %982 = vmatpush2.msra.mxu0 0.0
        %983 = vmatprep.subr.mxu0 0.0
        %984 = vmatpush2.msra.mxu0 0.0
        %985 = vmatprep.subr.mxu0 0.0
        %986 = vmatpush2.msra.mxu0 0.0
        %987 = vmatprep.subr.mxu0 0.0
        %988 = vmatpush2.msra.mxu0 0.0
        %989 = vmatprep.subr.mxu0 0.0
        %990 = vmatpush2.msra.mxu0 0.0
        %991 = vmatprep.subr.mxu0 0.0
        %992 = vmatpush2.msra.mxu0 0.0
        %993 = vmatprep.subr.mxu0 0.0
        %994 = vmatpush2.msra.mxu0 0.0
        %995 = vmatprep.subr.mxu0 0.0
        %996 = vmatpush2.msra.mxu0 0.0
        %997 = vmatprep.subr.mxu0 0.0
        %998 = vmatpush2.msra.mxu0 0.0
        %999 = vmatprep.subr.mxu0 0.0
        %1000 = vmatpush2.msra.mxu0 0.0
        %1001 = vmatprep.subr.mxu0 0.0
        %1002 = vmatpush2.msra.mxu0 0.0
        %1003 = vmatprep.subr.mxu0 0.0
        %1004 = vmatpush2.msra.mxu0 0.0
        %1005 = vmatprep.subr.mxu0 0.0
        %1006 = vmatpush2.msra.mxu0 0.0
        %1007 = vmatprep.subr.mxu0 0.0
        %1008 = vmatpush2.msra.mxu0 0.0
        %1009 = vmatprep.mubr.f32.mxu0 0.0
        %1010 = vmatmul.mubr.f32.gmra.mxu0 %v943
        %v1011 = vpop.f32.mrf.mxu0
        %v1012 = vadd.f32 %v940, %v1011
        %v1013 = vpop.f32.mrf.mxu0
        %1014 = vdwg.mxu0
        %v1015 = vmul.f32 %v1012, 0.25
        %v1016 = vld [vmem:[%s894] sm:$0xff]
        %v1017 = vld [vmem:[#allocation10] sm:$0x1]
        %1019 = vrot.lane.b32.xlu0 %v1012, 96
        %v1020 = vpop.permute.xlu0 %1019
        %vm1021 = vcmask 130048
        %v1023 = vsel %vm1021, %v1015, 0
        %v1025 = vsel %vm1021, %v1020, 0
        %1027 = vmatprep.subr.mxu0 0.0
        %1028 = vmatpush1.xpose.msra.mxu0 0.0
        %1029 = vmatprep.subr.mxu0 0.0
        %1030 = vmatpush1.xpose.msra.mxu0 0.0
        %1031 = vmatprep.subr.mxu0 0.0
        %1032 = vmatpush1.xpose.msra.mxu0 0.0
        %1033 = vmatprep.subr.mxu0 0.0
        %1034 = vmatpush1.xpose.msra.mxu0 0.0
        %1035 = vmatprep.subr.mxu0 0.0
        %1036 = vmatpush1.xpose.msra.mxu0 0.0
        %1037 = vmatprep.subr.mxu0 0.0
        %1038 = vmatpush1.xpose.msra.mxu0 0.0
        %1039 = vmatprep.subr.mxu0 0.0
        %1040 = vmatpush1.xpose.msra.mxu0 0.0
        %1041 = vmatprep.subr.mxu0 0.0
        %1042 = vmatpush1.xpose.msra.mxu0 0.0
        %1043 = vmatprep.subr.mxu0 0.0
        %1044 = vmatpush1.xpose.msra.mxu0 0.0
        %1045 = vmatprep.subr.mxu0 0.0
        %1046 = vmatpush1.xpose.msra.mxu0 0.0
        %1047 = vmatprep.subr.mxu0 0.0
        %1048 = vmatpush1.xpose.msra.mxu0 0.0
        %1049 = vmatprep.subr.mxu0 0.0
        %1050 = vmatpush1.xpose.msra.mxu0 0.0
        %1051 = vmatprep.subr.mxu0 0.0
        %1052 = vmatpush1.xpose.msra.mxu0 0.0
        %1053 = vmatprep.subr.mxu0 0.0
        %1054 = vmatpush1.xpose.msra.mxu0 0.0
        %1055 = vmatprep.subr.mxu0 0.0
        %1056 = vmatpush1.xpose.msra.mxu0 0.0
        %1057 = vmatprep.subr.mxu0 0.0
        %1058 = vmatpush1.xpose.msra.mxu0 %v1025
        %1059 = vmatprep.subr.mxu0 0.0
        %1060 = vmatpush2.xpose.msra.mxu0 0.0
        %1061 = vmatprep.subr.mxu0 0.0
        %1062 = vmatpush2.xpose.msra.mxu0 0.0
        %1063 = vmatprep.subr.mxu0 0.0
        %1064 = vmatpush2.xpose.msra.mxu0 0.0
        %1065 = vmatprep.subr.mxu0 0.0
        %1066 = vmatpush2.xpose.msra.mxu0 0.0
        %1067 = vmatprep.subr.mxu0 0.0
        %1068 = vmatpush2.xpose.msra.mxu0 0.0
        %1069 = vmatprep.subr.mxu0 0.0
        %1070 = vmatpush2.xpose.msra.mxu0 0.0
        %1071 = vmatprep.subr.mxu0 0.0
        %1072 = vmatpush2.xpose.msra.mxu0 0.0
        %1073 = vmatprep.subr.mxu0 0.0
        %1074 = vmatpush2.xpose.msra.mxu0 0.0
        %1075 = vmatprep.subr.mxu0 0.0
        %1076 = vmatpush2.xpose.msra.mxu0 0.0
        %1077 = vmatprep.subr.mxu0 0.0
        %1078 = vmatpush2.xpose.msra.mxu0 0.0
        %1079 = vmatprep.subr.mxu0 0.0
        %1080 = vmatpush2.xpose.msra.mxu0 0.0
        %1081 = vmatprep.subr.mxu0 0.0
        %1082 = vmatpush2.xpose.msra.mxu0 0.0
        %1083 = vmatprep.subr.mxu0 0.0
        %1084 = vmatpush2.xpose.msra.mxu0 0.0
        %1085 = vmatprep.subr.mxu0 0.0
        %1086 = vmatpush2.xpose.msra.mxu0 0.0
        %1087 = vmatprep.subr.mxu0 0.0
        %1088 = vmatpush2.xpose.msra.mxu0 0.0
        %1089 = vmatprep.subr.mxu0 0.0
        %1090 = vmatpush2.xpose.msra.mxu0 0.0
        %1091 = vmatprep.mubr.f32.mxu0 0.0
        %1092 = vmatmul.mubr.f32.gmra.mxu0 %v1023
        %v1093 = vpop.f32.mrf.mxu0
        %v1094 = vadd.f32 %v1016, %v1093
        %v1095 = vpop.f32.mrf.mxu0
        %1096 = vdwg.mxu0
        %vm1097 = vcmask 64512
        %v1098 = vsel %vm1097, %v1094, -inf
        %1099 = vmax.xlane.f32.xlu0 %v1098
        %v1100 = vpop.xlane.xlu0 %1099
        %v1101 = vsub.f32 %v1094, %v1100
        %v1102 = vmul.f32 %v1101, 1.442695
        %v1103 = vpow.pop %v1102
        %v1104 = vsel %vm1097, %v1103, 0.0
        %1105 = vadd.xlane.f32.xlu0 %v1104
        %v1106 = vpop.xlane.xlu0 %1105
        %v1107 = vrcp.pop %v1106
        %v1108 = vmul.f32 %v1103, %v1107
        %1109 = vrot.lane.b32.xlu0 %v1012, 64
        %v1110 = vpop.permute.xlu0 %1109
        %v1113 = vsel %vm1097, %v1108, 0
        %1115 = vmatprep.subr.mxu0 0.0
        %1116 = vmatpush1.msra.mxu0 0.0
        %1117 = vmatprep.subr.mxu0 0.0
        %1118 = vmatpush1.msra.mxu0 0.0
        %1119 = vmatprep.subr.mxu0 0.0
        %1120 = vmatpush1.msra.mxu0 0.0
        %1121 = vmatprep.subr.mxu0 0.0
        %1122 = vmatpush1.msra.mxu0 0.0
        %1123 = vmatprep.subr.mxu0 0.0
        %1124 = vmatpush1.msra.mxu0 0.0
        %1125 = vmatprep.subr.mxu0 0.0
        %1126 = vmatpush1.msra.mxu0 0.0
        %1127 = vmatprep.subr.mxu0 0.0
        %1128 = vmatpush1.msra.mxu0 0.0
        %1129 = vmatprep.subr.mxu0 0.0
        %1130 = vmatpush1.msra.mxu0 0.0
        %1131 = vmatprep.subr.mxu0 0.0
        %1132 = vmatpush1.msra.mxu0 0.0
        %1133 = vmatprep.subr.mxu0 0.0
        %1134 = vmatpush1.msra.mxu0 0.0
        %1135 = vmatprep.subr.mxu0 0.0
        %1136 = vmatpush1.msra.mxu0 0.0
        %1137 = vmatprep.subr.mxu0 0.0
        %1138 = vmatpush1.msra.mxu0 0.0
        %1139 = vmatprep.subr.mxu0 0.0
        %1140 = vmatpush1.msra.mxu0 0.0
        %1141 = vmatprep.subr.mxu0 0.0
        %1142 = vmatpush1.msra.mxu0 0.0
        %1143 = vmatprep.subr.mxu0 0.0
        %1144 = vmatpush1.msra.mxu0 0.0
        %1145 = vmatprep.subr.mxu0 0.0
        %1146 = vmatpush1.msra.mxu0 %v1110
        %1147 = vmatprep.subr.mxu0 0.0
        %1148 = vmatpush2.msra.mxu0 0.0
        %1149 = vmatprep.subr.mxu0 0.0
        %1150 = vmatpush2.msra.mxu0 0.0
        %1151 = vmatprep.subr.mxu0 0.0
        %1152 = vmatpush2.msra.mxu0 0.0
        %1153 = vmatprep.subr.mxu0 0.0
        %1154 = vmatpush2.msra.mxu0 0.0
        %1155 = vmatprep.subr.mxu0 0.0
        %1156 = vmatpush2.msra.mxu0 0.0
        %1157 = vmatprep.subr.mxu0 0.0
        %1158 = vmatpush2.msra.mxu0 0.0
        %1159 = vmatprep.subr.mxu0 0.0
        %1160 = vmatpush2.msra.mxu0 0.0
        %1161 = vmatprep.subr.mxu0 0.0
        %1162 = vmatpush2.msra.mxu0 0.0
        %1163 = vmatprep.subr.mxu0 0.0
        %1164 = vmatpush2.msra.mxu0 0.0
        %1165 = vmatprep.subr.mxu0 0.0
        %1166 = vmatpush2.msra.mxu0 0.0
        %1167 = vmatprep.subr.mxu0 0.0
        %1168 = vmatpush2.msra.mxu0 0.0
        %1169 = vmatprep.subr.mxu0 0.0
        %1170 = vmatpush2.msra.mxu0 0.0
        %1171 = vmatprep.subr.mxu0 0.0
        %1172 = vmatpush2.msra.mxu0 0.0
        %1173 = vmatprep.subr.mxu0 0.0
        %1174 = vmatpush2.msra.mxu0 0.0
        %1175 = vmatprep.subr.mxu0 0.0
        %1176 = vmatpush2.msra.mxu0 0.0
        %1177 = vmatprep.subr.mxu0 0.0
        %1178 = vmatpush2.msra.mxu0 0.0
        %1179 = vmatprep.mubr.f32.mxu0 0.0
        %1180 = vmatmul.mubr.f32.gmra.mxu0 %v1113
        %v1181 = vpop.f32.mrf.mxu0
        %v1182 = vadd.f32 0.0, %v1181
        %v1183 = vpop.f32.mrf.mxu0
        %1184 = vdwg.mxu0
        %v1185 = vld [vmem:[#allocation9] sm:$0xff]
        %v1186 = vld [vmem:[#allocation9 + $0x8] sm:$0xff]
        %v1188 = vsel %vm1021, %v1182, 0
        %1190 = vmatprep.subr.mxu0 0.0
        %1191 = vmatpush1.msra.mxu0 0.0
        %1192 = vmatprep.subr.mxu0 0.0
        %1193 = vmatpush1.msra.mxu0 0.0
        %1194 = vmatprep.subr.mxu0 0.0
        %1195 = vmatpush1.msra.mxu0 0.0
        %1196 = vmatprep.subr.mxu0 0.0
        %1197 = vmatpush1.msra.mxu0 0.0
        %1198 = vmatprep.subr.mxu0 0.0
        %1199 = vmatpush1.msra.mxu0 0.0
        %1200 = vmatprep.subr.mxu0 0.0
        %1201 = vmatpush1.msra.mxu0 0.0
        %1202 = vmatprep.subr.mxu0 0.0
        %1203 = vmatpush1.msra.mxu0 0.0
        %1204 = vmatprep.subr.mxu0 0.0
        %1205 = vmatpush1.msra.mxu0 0.0
        %1206 = vmatprep.subr.mxu0 0.0
        %1207 = vmatpush1.msra.mxu0 0.0
        %1208 = vmatprep.subr.mxu0 0.0
        %1209 = vmatpush1.msra.mxu0 0.0
        %1210 = vmatprep.subr.mxu0 0.0
        %1211 = vmatpush1.msra.mxu0 0.0
        %1212 = vmatprep.subr.mxu0 0.0
        %1213 = vmatpush1.msra.mxu0 0.0
        %1214 = vmatprep.subr.mxu0 0.0
        %1215 = vmatpush1.msra.mxu0 0.0
        %1216 = vmatprep.subr.mxu0 0.0
        %1217 = vmatpush1.msra.mxu0 0.0
        %1218 = vmatprep.subr.mxu0 0.0
        %1219 = vmatpush1.msra.mxu0 %v1186
        %1220 = vmatprep.subr.mxu0 0.0
        %1221 = vmatpush1.msra.mxu0 %v1185
        %1222 = vmatprep.subr.mxu0 0.0
        %1223 = vmatpush2.msra.mxu0 0.0
        %1224 = vmatprep.subr.mxu0 0.0
        %1225 = vmatpush2.msra.mxu0 0.0
        %1226 = vmatprep.subr.mxu0 0.0
        %1227 = vmatpush2.msra.mxu0 0.0
        %1228 = vmatprep.subr.mxu0 0.0
        %1229 = vmatpush2.msra.mxu0 0.0
        %1230 = vmatprep.subr.mxu0 0.0
        %1231 = vmatpush2.msra.mxu0 0.0
        %1232 = vmatprep.subr.mxu0 0.0
        %1233 = vmatpush2.msra.mxu0 0.0
        %1234 = vmatprep.subr.mxu0 0.0
        %1235 = vmatpush2.msra.mxu0 0.0
        %1236 = vmatprep.subr.mxu0 0.0
        %1237 = vmatpush2.msra.mxu0 0.0
        %1238 = vmatprep.subr.mxu0 0.0
        %1239 = vmatpush2.msra.mxu0 0.0
        %1240 = vmatprep.subr.mxu0 0.0
        %1241 = vmatpush2.msra.mxu0 0.0
        %1242 = vmatprep.subr.mxu0 0.0
        %1243 = vmatpush2.msra.mxu0 0.0
        %1244 = vmatprep.subr.mxu0 0.0
        %1245 = vmatpush2.msra.mxu0 0.0
        %1246 = vmatprep.subr.mxu0 0.0
        %1247 = vmatpush2.msra.mxu0 0.0
        %1248 = vmatprep.subr.mxu0 0.0
        %1249 = vmatpush2.msra.mxu0 0.0
        %1250 = vmatprep.subr.mxu0 0.0
        %1251 = vmatpush2.msra.mxu0 0.0
        %1252 = vmatprep.subr.mxu0 0.0
        %1253 = vmatpush2.msra.mxu0 0.0
        %1254 = vmatprep.mubr.f32.mxu0 0.0
        %1255 = vmatmul.mubr.f32.gmra.mxu0 %v1188
        %v1256 = vpop.f32.mrf.mxu0
        %v1257 = vadd.f32 0.0, %v1256
        %v1258 = vpop.f32.mrf.mxu0
        %1259 = vdwg.mxu0
        %v1261 = vlaneseq
        %v1262 = vshrl.u32 %v1261, 7
        %v1263 = vsub.s32 0, %v1262
        %v1264 = vrot.slane %v1017, %v1263
        %v1266 = vadd.f32 %v1264, %v1257
        %1267 = vrot.lane.b32.xlu0 %v1015, 112
        %v1268 = vpop.permute.xlu0 %1267
        %1269 = vrot.lane.b32.xlu0 %v1012, 80
        %v1270 = vpop.permute.xlu0 %1269
        %v1271 = vsel %vm1021, %v1268, 0
        %v1273 = vsel %vm1021, %v1270, 0
        %1275 = vmatprep.subr.mxu0 0.0
        %1276 = vmatpush1.xpose.msra.mxu0 0.0
        %1277 = vmatprep.subr.mxu0 0.0
        %1278 = vmatpush1.xpose.msra.mxu0 0.0
        %1279 = vmatprep.subr.mxu0 0.0
        %1280 = vmatpush1.xpose.msra.mxu0 0.0
        %1281 = vmatprep.subr.mxu0 0.0
        %1282 = vmatpush1.xpose.msra.mxu0 0.0
        %1283 = vmatprep.subr.mxu0 0.0
        %1284 = vmatpush1.xpose.msra.mxu0 0.0
        %1285 = vmatprep.subr.mxu0 0.0
        %1286 = vmatpush1.xpose.msra.mxu0 0.0
        %1287 = vmatprep.subr.mxu0 0.0
        %1288 = vmatpush1.xpose.msra.mxu0 0.0
        %1289 = vmatprep.subr.mxu0 0.0
        %1290 = vmatpush1.xpose.msra.mxu0 0.0
        %1291 = vmatprep.subr.mxu0 0.0
        %1292 = vmatpush1.xpose.msra.mxu0 0.0
        %1293 = vmatprep.subr.mxu0 0.0
        %1294 = vmatpush1.xpose.msra.mxu0 0.0
        %1295 = vmatprep.subr.mxu0 0.0
        %1296 = vmatpush1.xpose.msra.mxu0 0.0
        %1297 = vmatprep.subr.mxu0 0.0
        %1298 = vmatpush1.xpose.msra.mxu0 0.0
        %1299 = vmatprep.subr.mxu0 0.0
        %1300 = vmatpush1.xpose.msra.mxu0 0.0
        %1301 = vmatprep.subr.mxu0 0.0
        %1302 = vmatpush1.xpose.msra.mxu0 0.0
        %1303 = vmatprep.subr.mxu0 0.0
        %1304 = vmatpush1.xpose.msra.mxu0 0.0
        %1305 = vmatprep.subr.mxu0 0.0
        %1306 = vmatpush1.xpose.msra.mxu0 %v1273
        %1307 = vmatprep.subr.mxu0 0.0
        %1308 = vmatpush2.xpose.msra.mxu0 0.0
        %1309 = vmatprep.subr.mxu0 0.0
        %1310 = vmatpush2.xpose.msra.mxu0 0.0
        %1311 = vmatprep.subr.mxu0 0.0
        %1312 = vmatpush2.xpose.msra.mxu0 0.0
        %1313 = vmatprep.subr.mxu0 0.0
        %1314 = vmatpush2.xpose.msra.mxu0 0.0
        %1315 = vmatprep.subr.mxu0 0.0
        %1316 = vmatpush2.xpose.msra.mxu0 0.0
        %1317 = vmatprep.subr.mxu0 0.0
        %1318 = vmatpush2.xpose.msra.mxu0 0.0
        %1319 = vmatprep.subr.mxu0 0.0
        %1320 = vmatpush2.xpose.msra.mxu0 0.0
        %1321 = vmatprep.subr.mxu0 0.0
        %1322 = vmatpush2.xpose.msra.mxu0 0.0
        %1323 = vmatprep.subr.mxu0 0.0
        %1324 = vmatpush2.xpose.msra.mxu0 0.0
        %1325 = vmatprep.subr.mxu0 0.0
        %1326 = vmatpush2.xpose.msra.mxu0 0.0
        %1327 = vmatprep.subr.mxu0 0.0
        %1328 = vmatpush2.xpose.msra.mxu0 0.0
        %1329 = vmatprep.subr.mxu0 0.0
        %1330 = vmatpush2.xpose.msra.mxu0 0.0
        %1331 = vmatprep.subr.mxu0 0.0
        %1332 = vmatpush2.xpose.msra.mxu0 0.0
        %1333 = vmatprep.subr.mxu0 0.0
        %1334 = vmatpush2.xpose.msra.mxu0 0.0
        %1335 = vmatprep.subr.mxu0 0.0
        %1336 = vmatpush2.xpose.msra.mxu0 0.0
        %1337 = vmatprep.subr.mxu0 0.0
        %1338 = vmatpush2.xpose.msra.mxu0 0.0
        %1339 = vmatprep.mubr.f32.mxu0 0.0
        %1340 = vmatmul.mubr.f32.gmra.mxu0 %v1271
        %v1341 = vpop.f32.mrf.mxu0
        %v1342 = vadd.f32 %v1016, %v1341
        %v1343 = vpop.f32.mrf.mxu0
        %1344 = vdwg.mxu0
        %v1345 = vsel %vm1097, %v1342, -inf
        %1346 = vmax.xlane.f32.xlu0 %v1345
        %v1347 = vpop.xlane.xlu0 %1346
        %v1348 = vsub.f32 %v1342, %v1347
        %v1349 = vmul.f32 %v1348, 1.442695
        %v1350 = vpow.pop %v1349
        %v1351 = vsel %vm1097, %v1350, 0.0
        %1352 = vadd.xlane.f32.xlu0 %v1351
        %v1353 = vpop.xlane.xlu0 %1352
        %v1354 = vrcp.pop %v1353
        %v1355 = vmul.f32 %v1350, %v1354
        %1356 = vrot.lane.b32.xlu0 %v1012, 48
        %v1357 = vpop.permute.xlu0 %1356
        %v1360 = vsel %vm1097, %v1355, 0
        %1362 = vmatprep.subr.mxu0 0.0
        %1363 = vmatpush1.msra.mxu0 0.0
        %1364 = vmatprep.subr.mxu0 0.0
        %1365 = vmatpush1.msra.mxu0 0.0
        %1366 = vmatprep.subr.mxu0 0.0
        %1367 = vmatpush1.msra.mxu0 0.0
        %1368 = vmatprep.subr.mxu0 0.0
        %1369 = vmatpush1.msra.mxu0 0.0
        %1370 = vmatprep.subr.mxu0 0.0
        %1371 = vmatpush1.msra.mxu0 0.0
        %1372 = vmatprep.subr.mxu0 0.0
        %1373 = vmatpush1.msra.mxu0 0.0
        %1374 = vmatprep.subr.mxu0 0.0
        %1375 = vmatpush1.msra.mxu0 0.0
        %1376 = vmatprep.subr.mxu0 0.0
        %1377 = vmatpush1.msra.mxu0 0.0
        %1378 = vmatprep.subr.mxu0 0.0
        %1379 = vmatpush1.msra.mxu0 0.0
        %1380 = vmatprep.subr.mxu0 0.0
        %1381 = vmatpush1.msra.mxu0 0.0
        %1382 = vmatprep.subr.mxu0 0.0
        %1383 = vmatpush1.msra.mxu0 0.0
        %1384 = vmatprep.subr.mxu0 0.0
        %1385 = vmatpush1.msra.mxu0 0.0
        %1386 = vmatprep.subr.mxu0 0.0
        %1387 = vmatpush1.msra.mxu0 0.0
        %1388 = vmatprep.subr.mxu0 0.0
        %1389 = vmatpush1.msra.mxu0 0.0
        %1390 = vmatprep.subr.mxu0 0.0
        %1391 = vmatpush1.msra.mxu0 0.0
        %1392 = vmatprep.subr.mxu0 0.0
        %1393 = vmatpush1.msra.mxu0 %v1357
        %1394 = vmatprep.subr.mxu0 0.0
        %1395 = vmatpush2.msra.mxu0 0.0
        %1396 = vmatprep.subr.mxu0 0.0
        %1397 = vmatpush2.msra.mxu0 0.0
        %1398 = vmatprep.subr.mxu0 0.0
        %1399 = vmatpush2.msra.mxu0 0.0
        %1400 = vmatprep.subr.mxu0 0.0
        %1401 = vmatpush2.msra.mxu0 0.0
        %1402 = vmatprep.subr.mxu0 0.0
        %1403 = vmatpush2.msra.mxu0 0.0
        %1404 = vmatprep.subr.mxu0 0.0
        %1405 = vmatpush2.msra.mxu0 0.0
        %1406 = vmatprep.subr.mxu0 0.0
        %1407 = vmatpush2.msra.mxu0 0.0
        %1408 = vmatprep.subr.mxu0 0.0
        %1409 = vmatpush2.msra.mxu0 0.0
        %1410 = vmatprep.subr.mxu0 0.0
        %1411 = vmatpush2.msra.mxu0 0.0
        %1412 = vmatprep.subr.mxu0 0.0
        %1413 = vmatpush2.msra.mxu0 0.0
        %1414 = vmatprep.subr.mxu0 0.0
        %1415 = vmatpush2.msra.mxu0 0.0
        %1416 = vmatprep.subr.mxu0 0.0
        %1417 = vmatpush2.msra.mxu0 0.0
        %1418 = vmatprep.subr.mxu0 0.0
        %1419 = vmatpush2.msra.mxu0 0.0
        %1420 = vmatprep.subr.mxu0 0.0
        %1421 = vmatpush2.msra.mxu0 0.0
        %1422 = vmatprep.subr.mxu0 0.0
        %1423 = vmatpush2.msra.mxu0 0.0
        %1424 = vmatprep.subr.mxu0 0.0
        %1425 = vmatpush2.msra.mxu0 0.0
        %1426 = vmatprep.mubr.f32.mxu0 0.0
        %1427 = vmatmul.mubr.f32.gmra.mxu0 %v1360
        %v1428 = vpop.f32.mrf.mxu0
        %v1429 = vadd.f32 0.0, %v1428
        %v1430 = vpop.f32.mrf.mxu0
        %1431 = vdwg.mxu0
        %v1432 = vld [vmem:[#allocation9 + $0x10] sm:$0xff]
        %v1433 = vld [vmem:[#allocation9 + $0x18] sm:$0xff]
        %v1435 = vsel %vm1021, %v1429, 0
        %1437 = vmatprep.subr.mxu0 0.0
        %1438 = vmatpush1.msra.mxu0 0.0
        %1439 = vmatprep.subr.mxu0 0.0
        %1440 = vmatpush1.msra.mxu0 0.0
        %1441 = vmatprep.subr.mxu0 0.0
        %1442 = vmatpush1.msra.mxu0 0.0
        %1443 = vmatprep.subr.mxu0 0.0
        %1444 = vmatpush1.msra.mxu0 0.0
        %1445 = vmatprep.subr.mxu0 0.0
        %1446 = vmatpush1.msra.mxu0 0.0
        %1447 = vmatprep.subr.mxu0 0.0
        %1448 = vmatpush1.msra.mxu0 0.0
        %1449 = vmatprep.subr.mxu0 0.0
        %1450 = vmatpush1.msra.mxu0 0.0
        %1451 = vmatprep.subr.mxu0 0.0
        %1452 = vmatpush1.msra.mxu0 0.0
        %1453 = vmatprep.subr.mxu0 0.0
        %1454 = vmatpush1.msra.mxu0 0.0
        %1455 = vmatprep.subr.mxu0 0.0
        %1456 = vmatpush1.msra.mxu0 0.0
        %1457 = vmatprep.subr.mxu0 0.0
        %1458 = vmatpush1.msra.mxu0 0.0
        %1459 = vmatprep.subr.mxu0 0.0
        %1460 = vmatpush1.msra.mxu0 0.0
        %1461 = vmatprep.subr.mxu0 0.0
        %1462 = vmatpush1.msra.mxu0 0.0
        %1463 = vmatprep.subr.mxu0 0.0
        %1464 = vmatpush1.msra.mxu0 0.0
        %1465 = vmatprep.subr.mxu0 0.0
        %1466 = vmatpush1.msra.mxu0 %v1433
        %1467 = vmatprep.subr.mxu0 0.0
        %1468 = vmatpush1.msra.mxu0 %v1432
        %1469 = vmatprep.subr.mxu0 0.0
        %1470 = vmatpush2.msra.mxu0 0.0
        %1471 = vmatprep.subr.mxu0 0.0
        %1472 = vmatpush2.msra.mxu0 0.0
        %1473 = vmatprep.subr.mxu0 0.0
        %1474 = vmatpush2.msra.mxu0 0.0
        %1475 = vmatprep.subr.mxu0 0.0
        %1476 = vmatpush2.msra.mxu0 0.0
        %1477 = vmatprep.subr.mxu0 0.0
        %1478 = vmatpush2.msra.mxu0 0.0
        %1479 = vmatprep.subr.mxu0 0.0
        %1480 = vmatpush2.msra.mxu0 0.0
        %1481 = vmatprep.subr.mxu0 0.0
        %1482 = vmatpush2.msra.mxu0 0.0
        %1483 = vmatprep.subr.mxu0 0.0
        %1484 = vmatpush2.msra.mxu0 0.0
        %1485 = vmatprep.subr.mxu0 0.0
        %1486 = vmatpush2.msra.mxu0 0.0
        %1487 = vmatprep.subr.mxu0 0.0
        %1488 = vmatpush2.msra.mxu0 0.0
        %1489 = vmatprep.subr.mxu0 0.0
        %1490 = vmatpush2.msra.mxu0 0.0
        %1491 = vmatprep.subr.mxu0 0.0
        %1492 = vmatpush2.msra.mxu0 0.0
        %1493 = vmatprep.subr.mxu0 0.0
        %1494 = vmatpush2.msra.mxu0 0.0
        %1495 = vmatprep.subr.mxu0 0.0
        %1496 = vmatpush2.msra.mxu0 0.0
        %1497 = vmatprep.subr.mxu0 0.0
        %1498 = vmatpush2.msra.mxu0 0.0
        %1499 = vmatprep.subr.mxu0 0.0
        %1500 = vmatpush2.msra.mxu0 0.0
        %1501 = vmatprep.mubr.f32.mxu0 0.0
        %1502 = vmatmul.mubr.f32.gmra.mxu0 %v1435
        %v1503 = vpop.f32.mrf.mxu0
        %v1504 = vadd.f32 0.0, %v1503
        %v1505 = vpop.f32.mrf.mxu0
        %1506 = vdwg.mxu0
        %v1507 = vadd.f32 %v1266, %v1504
        %v1508 = vadd.f32 %v903, %v1507
        %v1509 = vsel %vm904, %v1508, 0.0
        %1510 = vadd.xlane.f32.xlu0 %v1509
        %v1511 = vpop.xlane.xlu0 %1510
        %v1512 = vmul.f32 %v1511, %v908
        %v1513 = vsub.f32 %v1508, %v1512
        %v1514 = vmul.f32 %v1513, %v1513
        %v1515 = vsel %vm904, %v1514, 0.0
        %1516 = vadd.xlane.f32.xlu0 %v1515
        %v1517 = vpop.xlane.xlu0 %1516
        %v1518 = vmul.f32 %v1517, %v908
        %v1519 = vadd.f32 %v1518, 1e-05
        %v1520 = vrsqrt.pop %v1519
        %v1521 = vmul.f32 %v1513, %v1520
        %v1522 = vld [vmem:[%s5] sm:$0x1]
        %v1523 = vlaneseq
        %v1524 = vshrl.u32 %v1523, 7
        %v1525 = vsub.s32 0, %v1524
        %v1526 = vrot.slane %v1522, %v1525
        %v1527 = vmul.f32 %v1521, %v1526
        %v1528 = vld [vmem:[%s5 + $0x1] sm:$0x1]
        %v1529 = vlaneseq
        %v1530 = vshrl.u32 %v1529, 7
        %v1531 = vsub.s32 0, %v1530
        %v1532 = vrot.slane %v1528, %v1531
        %v1533 = vadd.f32 %v1527, %v1532
        %v1534 = vld [vmem:[#allocation12] sm:$0xff]
        %v1535 = vld [vmem:[#allocation12 + $0x8] sm:$0xff]
        %v1536 = vld [vmem:[#allocation12 + $0x10] sm:$0xff]
        %v1537 = vld [vmem:[#allocation12 + $0x18] sm:$0xff]
        %v1538 = vld [vmem:[#allocation13] sm:$0x1]
        %v1540 = vlaneseq
        %v1541 = vshrl.u32 %v1540, 7
        %v1542 = vsub.s32 0, %v1541
        %v1543 = vrot.slane %v1538, %v1542
        %v1546 = vsel %vm904, %v1533, 0
        %1548 = vmatprep.subr.mxu0 0.0
        %1549 = vmatpush1.msra.mxu0 0.0
        %1550 = vmatprep.subr.mxu0 0.0
        %1551 = vmatpush1.msra.mxu0 0.0
        %1552 = vmatprep.subr.mxu0 0.0
        %1553 = vmatpush1.msra.mxu0 0.0
        %1554 = vmatprep.subr.mxu0 0.0
        %1555 = vmatpush1.msra.mxu0 0.0
        %1556 = vmatprep.subr.mxu0 0.0
        %1557 = vmatpush1.msra.mxu0 0.0
        %1558 = vmatprep.subr.mxu0 0.0
        %1559 = vmatpush1.msra.mxu0 0.0
        %1560 = vmatprep.subr.mxu0 0.0
        %1561 = vmatpush1.msra.mxu0 0.0
        %1562 = vmatprep.subr.mxu0 0.0
        %1563 = vmatpush1.msra.mxu0 0.0
        %1564 = vmatprep.subr.mxu0 0.0
        %1565 = vmatpush1.msra.mxu0 0.0
        %1566 = vmatprep.subr.mxu0 0.0
        %1567 = vmatpush1.msra.mxu0 0.0
        %1568 = vmatprep.subr.mxu0 0.0
        %1569 = vmatpush1.msra.mxu0 0.0
        %1570 = vmatprep.subr.mxu0 0.0
        %1571 = vmatpush1.msra.mxu0 0.0
        %1572 = vmatprep.subr.mxu0 0.0
        %1573 = vmatpush1.msra.mxu0 %v1537
        %1574 = vmatprep.subr.mxu0 0.0
        %1575 = vmatpush1.msra.mxu0 %v1536
        %1576 = vmatprep.subr.mxu0 0.0
        %1577 = vmatpush1.msra.mxu0 %v1535
        %1578 = vmatprep.subr.mxu0 0.0
        %1579 = vmatpush1.msra.mxu0 %v1534
        %1580 = vmatprep.subr.mxu0 0.0
        %1581 = vmatpush2.msra.mxu0 0.0
        %1582 = vmatprep.subr.mxu0 0.0
        %1583 = vmatpush2.msra.mxu0 0.0
        %1584 = vmatprep.subr.mxu0 0.0
        %1585 = vmatpush2.msra.mxu0 0.0
        %1586 = vmatprep.subr.mxu0 0.0
        %1587 = vmatpush2.msra.mxu0 0.0
        %1588 = vmatprep.subr.mxu0 0.0
        %1589 = vmatpush2.msra.mxu0 0.0
        %1590 = vmatprep.subr.mxu0 0.0
        %1591 = vmatpush2.msra.mxu0 0.0
        %1592 = vmatprep.subr.mxu0 0.0
        %1593 = vmatpush2.msra.mxu0 0.0
        %1594 = vmatprep.subr.mxu0 0.0
        %1595 = vmatpush2.msra.mxu0 0.0
        %1596 = vmatprep.subr.mxu0 0.0
        %1597 = vmatpush2.msra.mxu0 0.0
        %1598 = vmatprep.subr.mxu0 0.0
        %1599 = vmatpush2.msra.mxu0 0.0
        %1600 = vmatprep.subr.mxu0 0.0
        %1601 = vmatpush2.msra.mxu0 0.0
        %1602 = vmatprep.subr.mxu0 0.0
        %1603 = vmatpush2.msra.mxu0 0.0
        %1604 = vmatprep.subr.mxu0 0.0
        %1605 = vmatpush2.msra.mxu0 0.0
        %1606 = vmatprep.subr.mxu0 0.0
        %1607 = vmatpush2.msra.mxu0 0.0
        %1608 = vmatprep.subr.mxu0 0.0
        %1609 = vmatpush2.msra.mxu0 0.0
        %1610 = vmatprep.subr.mxu0 0.0
        %1611 = vmatpush2.msra.mxu0 0.0
        %1612 = vmatprep.mubr.f32.mxu0 0.0
        %1613 = vmatmul.mubr.f32.gmra.mxu0 %v1546
        %v1614 = vpop.f32.mrf.mxu0
        %v1615 = vadd.f32 %v1543, %v1614
        %v1616 = vpop.f32.mrf.mxu0
        %1617 = vdwg.mxu0
        %v1618 = vmul.f32 %v1615, 0.25
        %v1619 = vld [vmem:[%s772] sm:$0xff]
        %v1620 = vld [vmem:[#allocation15] sm:$0xff]
        %v1621 = vld [vmem:[#allocation15 + $0x8] sm:$0xff]
        %v1622 = vld [vmem:[#allocation15 + $0x10] sm:$0xff]
        %v1623 = vld [vmem:[#allocation15 + $0x18] sm:$0xff]
        %v1624 = vld [vmem:[#allocation16] sm:$0x1]
        %v1626 = vlaneseq
        %v1627 = vshrl.u32 %v1626, 7
        %v1628 = vsub.s32 0, %v1627
        %v1629 = vrot.slane %v1624, %v1628
        %v1632 = vsel %vm904, %v1619, 0
        %1634 = vmatprep.subr.mxu0 0.0
        %1635 = vmatpush1.msra.mxu0 0.0
        %1636 = vmatprep.subr.mxu0 0.0
        %1637 = vmatpush1.msra.mxu0 0.0
        %1638 = vmatprep.subr.mxu0 0.0
        %1639 = vmatpush1.msra.mxu0 0.0
        %1640 = vmatprep.subr.mxu0 0.0
        %1641 = vmatpush1.msra.mxu0 0.0
        %1642 = vmatprep.subr.mxu0 0.0
        %1643 = vmatpush1.msra.mxu0 0.0
        %1644 = vmatprep.subr.mxu0 0.0
        %1645 = vmatpush1.msra.mxu0 0.0
        %1646 = vmatprep.subr.mxu0 0.0
        %1647 = vmatpush1.msra.mxu0 0.0
        %1648 = vmatprep.subr.mxu0 0.0
        %1649 = vmatpush1.msra.mxu0 0.0
        %1650 = vmatprep.subr.mxu0 0.0
        %1651 = vmatpush1.msra.mxu0 0.0
        %1652 = vmatprep.subr.mxu0 0.0
        %1653 = vmatpush1.msra.mxu0 0.0
        %1654 = vmatprep.subr.mxu0 0.0
        %1655 = vmatpush1.msra.mxu0 0.0
        %1656 = vmatprep.subr.mxu0 0.0
        %1657 = vmatpush1.msra.mxu0 0.0
        %1658 = vmatprep.subr.mxu0 0.0
        %1659 = vmatpush1.msra.mxu0 %v1623
        %1660 = vmatprep.subr.mxu0 0.0
        %1661 = vmatpush1.msra.mxu0 %v1622
        %1662 = vmatprep.subr.mxu0 0.0
        %1663 = vmatpush1.msra.mxu0 %v1621
        %1664 = vmatprep.subr.mxu0 0.0
        %1665 = vmatpush1.msra.mxu0 %v1620
        %1666 = vmatprep.subr.mxu0 0.0
        %1667 = vmatpush2.msra.mxu0 0.0
        %1668 = vmatprep.subr.mxu0 0.0
        %1669 = vmatpush2.msra.mxu0 0.0
        %1670 = vmatprep.subr.mxu0 0.0
        %1671 = vmatpush2.msra.mxu0 0.0
        %1672 = vmatprep.subr.mxu0 0.0
        %1673 = vmatpush2.msra.mxu0 0.0
        %1674 = vmatprep.subr.mxu0 0.0
        %1675 = vmatpush2.msra.mxu0 0.0
        %1676 = vmatprep.subr.mxu0 0.0
        %1677 = vmatpush2.msra.mxu0 0.0
        %1678 = vmatprep.subr.mxu0 0.0
        %1679 = vmatpush2.msra.mxu0 0.0
        %1680 = vmatprep.subr.mxu0 0.0
        %1681 = vmatpush2.msra.mxu0 0.0
        %1682 = vmatprep.subr.mxu0 0.0
        %1683 = vmatpush2.msra.mxu0 0.0
        %1684 = vmatprep.subr.mxu0 0.0
        %1685 = vmatpush2.msra.mxu0 0.0
        %1686 = vmatprep.subr.mxu0 0.0
        %1687 = vmatpush2.msra.mxu0 0.0
        %1688 = vmatprep.subr.mxu0 0.0
        %1689 = vmatpush2.msra.mxu0 0.0
        %1690 = vmatprep.subr.mxu0 0.0
        %1691 = vmatpush2.msra.mxu0 0.0
        %1692 = vmatprep.subr.mxu0 0.0
        %1693 = vmatpush2.msra.mxu0 0.0
        %1694 = vmatprep.subr.mxu0 0.0
        %1695 = vmatpush2.msra.mxu0 0.0
        %1696 = vmatprep.subr.mxu0 0.0
        %1697 = vmatpush2.msra.mxu0 0.0
        %1698 = vmatprep.mubr.f32.mxu0 0.0
        %1699 = vmatmul.mubr.f32.gmra.mxu0 %v1632
        %v1700 = vpop.f32.mrf.mxu0
        %v1701 = vadd.f32 %v1629, %v1700
        %v1702 = vpop.f32.mrf.mxu0
        %1703 = vdwg.mxu0
        %v1704 = vld [vmem:[%s898] sm:$0xff]
        %v1705 = vld [vmem:[#allocation19] sm:$0x1]
        %v1707 = vsel %vm1021, %v1618, 0
        %v1710 = vsel %vm1021, %v1701, 0
        %1712 = vmatprep.subr.mxu0 0.0
        %1713 = vmatpush1.xpose.msra.mxu0 0.0
        %1714 = vmatprep.subr.mxu0 0.0
        %1715 = vmatpush1.xpose.msra.mxu0 0.0
        %1716 = vmatprep.subr.mxu0 0.0
        %1717 = vmatpush1.xpose.msra.mxu0 0.0
        %1718 = vmatprep.subr.mxu0 0.0
        %1719 = vmatpush1.xpose.msra.mxu0 0.0
        %1720 = vmatprep.subr.mxu0 0.0
        %1721 = vmatpush1.xpose.msra.mxu0 0.0
        %1722 = vmatprep.subr.mxu0 0.0
        %1723 = vmatpush1.xpose.msra.mxu0 0.0
        %1724 = vmatprep.subr.mxu0 0.0
        %1725 = vmatpush1.xpose.msra.mxu0 0.0
        %1726 = vmatprep.subr.mxu0 0.0
        %1727 = vmatpush1.xpose.msra.mxu0 0.0
        %1728 = vmatprep.subr.mxu0 0.0
        %1729 = vmatpush1.xpose.msra.mxu0 0.0
        %1730 = vmatprep.subr.mxu0 0.0
        %1731 = vmatpush1.xpose.msra.mxu0 0.0
        %1732 = vmatprep.subr.mxu0 0.0
        %1733 = vmatpush1.xpose.msra.mxu0 0.0
        %1734 = vmatprep.subr.mxu0 0.0
        %1735 = vmatpush1.xpose.msra.mxu0 0.0
        %1736 = vmatprep.subr.mxu0 0.0
        %1737 = vmatpush1.xpose.msra.mxu0 0.0
        %1738 = vmatprep.subr.mxu0 0.0
        %1739 = vmatpush1.xpose.msra.mxu0 0.0
        %1740 = vmatprep.subr.mxu0 0.0
        %1741 = vmatpush1.xpose.msra.mxu0 0.0
        %1742 = vmatprep.subr.mxu0 0.0
        %1743 = vmatpush1.xpose.msra.mxu0 %v1710
        %1744 = vmatprep.subr.mxu0 0.0
        %1745 = vmatpush2.xpose.msra.mxu0 0.0
        %1746 = vmatprep.subr.mxu0 0.0
        %1747 = vmatpush2.xpose.msra.mxu0 0.0
        %1748 = vmatprep.subr.mxu0 0.0
        %1749 = vmatpush2.xpose.msra.mxu0 0.0
        %1750 = vmatprep.subr.mxu0 0.0
        %1751 = vmatpush2.xpose.msra.mxu0 0.0
        %1752 = vmatprep.subr.mxu0 0.0
        %1753 = vmatpush2.xpose.msra.mxu0 0.0
        %1754 = vmatprep.subr.mxu0 0.0
        %1755 = vmatpush2.xpose.msra.mxu0 0.0
        %1756 = vmatprep.subr.mxu0 0.0
        %1757 = vmatpush2.xpose.msra.mxu0 0.0
        %1758 = vmatprep.subr.mxu0 0.0
        %1759 = vmatpush2.xpose.msra.mxu0 0.0
        %1760 = vmatprep.subr.mxu0 0.0
        %1761 = vmatpush2.xpose.msra.mxu0 0.0
        %1762 = vmatprep.subr.mxu0 0.0
        %1763 = vmatpush2.xpose.msra.mxu0 0.0
        %1764 = vmatprep.subr.mxu0 0.0
        %1765 = vmatpush2.xpose.msra.mxu0 0.0
        %1766 = vmatprep.subr.mxu0 0.0
        %1767 = vmatpush2.xpose.msra.mxu0 0.0
        %1768 = vmatprep.subr.mxu0 0.0
        %1769 = vmatpush2.xpose.msra.mxu0 0.0
        %1770 = vmatprep.subr.mxu0 0.0
        %1771 = vmatpush2.xpose.msra.mxu0 0.0
        %1772 = vmatprep.subr.mxu0 0.0
        %1773 = vmatpush2.xpose.msra.mxu0 0.0
        %1774 = vmatprep.subr.mxu0 0.0
        %1775 = vmatpush2.xpose.msra.mxu0 0.0
        %1776 = vmatprep.mubr.f32.mxu0 0.0
        %1777 = vmatmul.mubr.f32.gmra.mxu0 %v1707
        %v1778 = vpop.f32.mrf.mxu0
        %v1779 = vadd.f32 %v1704, %v1778
        %v1780 = vpop.f32.mrf.mxu0
        %1781 = vdwg.mxu0
        %v1782 = vsel %vm1097, %v1779, -inf
        %1783 = vmax.xlane.f32.xlu0 %v1782
        %v1784 = vpop.xlane.xlu0 %1783
        %v1785 = vsub.f32 %v1779, %v1784
        %v1786 = vmul.f32 %v1785, 1.442695
        %v1787 = vpow.pop %v1786
        %v1788 = vsel %vm1097, %v1787, 0.0
        %1789 = vadd.xlane.f32.xlu0 %v1788
        %v1790 = vpop.xlane.xlu0 %1789
        %v1791 = vrcp.pop %v1790
        %v1792 = vmul.f32 %v1787, %v1791
        %1793 = vrot.lane.b32.xlu0 %v1701, 96
        %v1794 = vpop.permute.xlu0 %1793
        %v1797 = vsel %vm1097, %v1792, 0
        %1799 = vmatprep.subr.mxu0 0.0
        %1800 = vmatpush1.msra.mxu0 0.0
        %1801 = vmatprep.subr.mxu0 0.0
        %1802 = vmatpush1.msra.mxu0 0.0
        %1803 = vmatprep.subr.mxu0 0.0
        %1804 = vmatpush1.msra.mxu0 0.0
        %1805 = vmatprep.subr.mxu0 0.0
        %1806 = vmatpush1.msra.mxu0 0.0
        %1807 = vmatprep.subr.mxu0 0.0
        %1808 = vmatpush1.msra.mxu0 0.0
        %1809 = vmatprep.subr.mxu0 0.0
        %1810 = vmatpush1.msra.mxu0 0.0
        %1811 = vmatprep.subr.mxu0 0.0
        %1812 = vmatpush1.msra.mxu0 0.0
        %1813 = vmatprep.subr.mxu0 0.0
        %1814 = vmatpush1.msra.mxu0 0.0
        %1815 = vmatprep.subr.mxu0 0.0
        %1816 = vmatpush1.msra.mxu0 0.0
        %1817 = vmatprep.subr.mxu0 0.0
        %1818 = vmatpush1.msra.mxu0 0.0
        %1819 = vmatprep.subr.mxu0 0.0
        %1820 = vmatpush1.msra.mxu0 0.0
        %1821 = vmatprep.subr.mxu0 0.0
        %1822 = vmatpush1.msra.mxu0 0.0
        %1823 = vmatprep.subr.mxu0 0.0
        %1824 = vmatpush1.msra.mxu0 0.0
        %1825 = vmatprep.subr.mxu0 0.0
        %1826 = vmatpush1.msra.mxu0 0.0
        %1827 = vmatprep.subr.mxu0 0.0
        %1828 = vmatpush1.msra.mxu0 0.0
        %1829 = vmatprep.subr.mxu0 0.0
        %1830 = vmatpush1.msra.mxu0 %v1794
        %1831 = vmatprep.subr.mxu0 0.0
        %1832 = vmatpush2.msra.mxu0 0.0
        %1833 = vmatprep.subr.mxu0 0.0
        %1834 = vmatpush2.msra.mxu0 0.0
        %1835 = vmatprep.subr.mxu0 0.0
        %1836 = vmatpush2.msra.mxu0 0.0
        %1837 = vmatprep.subr.mxu0 0.0
        %1838 = vmatpush2.msra.mxu0 0.0
        %1839 = vmatprep.subr.mxu0 0.0
        %1840 = vmatpush2.msra.mxu0 0.0
        %1841 = vmatprep.subr.mxu0 0.0
        %1842 = vmatpush2.msra.mxu0 0.0
        %1843 = vmatprep.subr.mxu0 0.0
        %1844 = vmatpush2.msra.mxu0 0.0
        %1845 = vmatprep.subr.mxu0 0.0
        %1846 = vmatpush2.msra.mxu0 0.0
        %1847 = vmatprep.subr.mxu0 0.0
        %1848 = vmatpush2.msra.mxu0 0.0
        %1849 = vmatprep.subr.mxu0 0.0
        %1850 = vmatpush2.msra.mxu0 0.0
        %1851 = vmatprep.subr.mxu0 0.0
        %1852 = vmatpush2.msra.mxu0 0.0
        %1853 = vmatprep.subr.mxu0 0.0
        %1854 = vmatpush2.msra.mxu0 0.0
        %1855 = vmatprep.subr.mxu0 0.0
        %1856 = vmatpush2.msra.mxu0 0.0
        %1857 = vmatprep.subr.mxu0 0.0
        %1858 = vmatpush2.msra.mxu0 0.0
        %1859 = vmatprep.subr.mxu0 0.0
        %1860 = vmatpush2.msra.mxu0 0.0
        %1861 = vmatprep.subr.mxu0 0.0
        %1862 = vmatpush2.msra.mxu0 0.0
        %1863 = vmatprep.mubr.f32.mxu0 0.0
        %1864 = vmatmul.mubr.f32.gmra.mxu0 %v1797
        %v1865 = vpop.f32.mrf.mxu0
        %v1866 = vadd.f32 0.0, %v1865
        %v1867 = vpop.f32.mrf.mxu0
        %1868 = vdwg.mxu0
        %v1869 = vld [vmem:[#allocation18] sm:$0xff]
        %v1870 = vld [vmem:[#allocation18 + $0x8] sm:$0xff]
        %v1872 = vsel %vm1021, %v1866, 0
        %1874 = vmatprep.subr.mxu0 0.0
        %1875 = vmatpush1.msra.mxu0 0.0
        %1876 = vmatprep.subr.mxu0 0.0
        %1877 = vmatpush1.msra.mxu0 0.0
        %1878 = vmatprep.subr.mxu0 0.0
        %1879 = vmatpush1.msra.mxu0 0.0
        %1880 = vmatprep.subr.mxu0 0.0
        %1881 = vmatpush1.msra.mxu0 0.0
        %1882 = vmatprep.subr.mxu0 0.0
        %1883 = vmatpush1.msra.mxu0 0.0
        %1884 = vmatprep.subr.mxu0 0.0
        %1885 = vmatpush1.msra.mxu0 0.0
        %1886 = vmatprep.subr.mxu0 0.0
        %1887 = vmatpush1.msra.mxu0 0.0
        %1888 = vmatprep.subr.mxu0 0.0
        %1889 = vmatpush1.msra.mxu0 0.0
        %1890 = vmatprep.subr.mxu0 0.0
        %1891 = vmatpush1.msra.mxu0 0.0
        %1892 = vmatprep.subr.mxu0 0.0
        %1893 = vmatpush1.msra.mxu0 0.0
        %1894 = vmatprep.subr.mxu0 0.0
        %1895 = vmatpush1.msra.mxu0 0.0
        %1896 = vmatprep.subr.mxu0 0.0
        %1897 = vmatpush1.msra.mxu0 0.0
        %1898 = vmatprep.subr.mxu0 0.0
        %1899 = vmatpush1.msra.mxu0 0.0
        %1900 = vmatprep.subr.mxu0 0.0
        %1901 = vmatpush1.msra.mxu0 0.0
        %1902 = vmatprep.subr.mxu0 0.0
        %1903 = vmatpush1.msra.mxu0 %v1870
        %1904 = vmatprep.subr.mxu0 0.0
        %1905 = vmatpush1.msra.mxu0 %v1869
        %1906 = vmatprep.subr.mxu0 0.0
        %1907 = vmatpush2.msra.mxu0 0.0
        %1908 = vmatprep.subr.mxu0 0.0
        %1909 = vmatpush2.msra.mxu0 0.0
        %1910 = vmatprep.subr.mxu0 0.0
        %1911 = vmatpush2.msra.mxu0 0.0
        %1912 = vmatprep.subr.mxu0 0.0
        %1913 = vmatpush2.msra.mxu0 0.0
        %1914 = vmatprep.subr.mxu0 0.0
        %1915 = vmatpush2.msra.mxu0 0.0
        %1916 = vmatprep.subr.mxu0 0.0
        %1917 = vmatpush2.msra.mxu0 0.0
        %1918 = vmatprep.subr.mxu0 0.0
        %1919 = vmatpush2.msra.mxu0 0.0
        %1920 = vmatprep.subr.mxu0 0.0
        %1921 = vmatpush2.msra.mxu0 0.0
        %1922 = vmatprep.subr.mxu0 0.0
        %1923 = vmatpush2.msra.mxu0 0.0
        %1924 = vmatprep.subr.mxu0 0.0
        %1925 = vmatpush2.msra.mxu0 0.0
        %1926 = vmatprep.subr.mxu0 0.0
        %1927 = vmatpush2.msra.mxu0 0.0
        %1928 = vmatprep.subr.mxu0 0.0
        %1929 = vmatpush2.msra.mxu0 0.0
        %1930 = vmatprep.subr.mxu0 0.0
        %1931 = vmatpush2.msra.mxu0 0.0
        %1932 = vmatprep.subr.mxu0 0.0
        %1933 = vmatpush2.msra.mxu0 0.0
        %1934 = vmatprep.subr.mxu0 0.0
        %1935 = vmatpush2.msra.mxu0 0.0
        %1936 = vmatprep.subr.mxu0 0.0
        %1937 = vmatpush2.msra.mxu0 0.0
        %1938 = vmatprep.mubr.f32.mxu0 0.0
        %1939 = vmatmul.mubr.f32.gmra.mxu0 %v1872
        %v1940 = vpop.f32.mrf.mxu0
        %v1941 = vadd.f32 0.0, %v1940
        %v1942 = vpop.f32.mrf.mxu0
        %1943 = vdwg.mxu0
        %v1945 = vlaneseq
        %v1946 = vshrl.u32 %v1945, 7
        %v1947 = vsub.s32 0, %v1946
        %v1948 = vrot.slane %v1705, %v1947
        %v1950 = vadd.f32 %v1948, %v1941
        %1951 = vrot.lane.b32.xlu0 %v1618, 112
        %v1952 = vpop.permute.xlu0 %1951
        %1953 = vrot.lane.b32.xlu0 %v1701, 112
        %v1954 = vpop.permute.xlu0 %1953
        %v1955 = vsel %vm1021, %v1952, 0
        %v1957 = vsel %vm1021, %v1954, 0
        %1959 = vmatprep.subr.mxu0 0.0
        %1960 = vmatpush1.xpose.msra.mxu0 0.0
        %1961 = vmatprep.subr.mxu0 0.0
        %1962 = vmatpush1.xpose.msra.mxu0 0.0
        %1963 = vmatprep.subr.mxu0 0.0
        %1964 = vmatpush1.xpose.msra.mxu0 0.0
        %1965 = vmatprep.subr.mxu0 0.0
        %1966 = vmatpush1.xpose.msra.mxu0 0.0
        %1967 = vmatprep.subr.mxu0 0.0
        %1968 = vmatpush1.xpose.msra.mxu0 0.0
        %1969 = vmatprep.subr.mxu0 0.0
        %1970 = vmatpush1.xpose.msra.mxu0 0.0
        %1971 = vmatprep.subr.mxu0 0.0
        %1972 = vmatpush1.xpose.msra.mxu0 0.0
        %1973 = vmatprep.subr.mxu0 0.0
        %1974 = vmatpush1.xpose.msra.mxu0 0.0
        %1975 = vmatprep.subr.mxu0 0.0
        %1976 = vmatpush1.xpose.msra.mxu0 0.0
        %1977 = vmatprep.subr.mxu0 0.0
        %1978 = vmatpush1.xpose.msra.mxu0 0.0
        %1979 = vmatprep.subr.mxu0 0.0
        %1980 = vmatpush1.xpose.msra.mxu0 0.0
        %1981 = vmatprep.subr.mxu0 0.0
        %1982 = vmatpush1.xpose.msra.mxu0 0.0
        %1983 = vmatprep.subr.mxu0 0.0
        %1984 = vmatpush1.xpose.msra.mxu0 0.0
        %1985 = vmatprep.subr.mxu0 0.0
        %1986 = vmatpush1.xpose.msra.mxu0 0.0
        %1987 = vmatprep.subr.mxu0 0.0
        %1988 = vmatpush1.xpose.msra.mxu0 0.0
        %1989 = vmatprep.subr.mxu0 0.0
        %1990 = vmatpush1.xpose.msra.mxu0 %v1957
        %1991 = vmatprep.subr.mxu0 0.0
        %1992 = vmatpush2.xpose.msra.mxu0 0.0
        %1993 = vmatprep.subr.mxu0 0.0
        %1994 = vmatpush2.xpose.msra.mxu0 0.0
        %1995 = vmatprep.subr.mxu0 0.0
        %1996 = vmatpush2.xpose.msra.mxu0 0.0
        %1997 = vmatprep.subr.mxu0 0.0
        %1998 = vmatpush2.xpose.msra.mxu0 0.0
        %1999 = vmatprep.subr.mxu0 0.0
        %2000 = vmatpush2.xpose.msra.mxu0 0.0
        %2001 = vmatprep.subr.mxu0 0.0
        %2002 = vmatpush2.xpose.msra.mxu0 0.0
        %2003 = vmatprep.subr.mxu0 0.0
        %2004 = vmatpush2.xpose.msra.mxu0 0.0
        %2005 = vmatprep.subr.mxu0 0.0
        %2006 = vmatpush2.xpose.msra.mxu0 0.0
        %2007 = vmatprep.subr.mxu0 0.0
        %2008 = vmatpush2.xpose.msra.mxu0 0.0
        %2009 = vmatprep.subr.mxu0 0.0
        %2010 = vmatpush2.xpose.msra.mxu0 0.0
        %2011 = vmatprep.subr.mxu0 0.0
        %2012 = vmatpush2.xpose.msra.mxu0 0.0
        %2013 = vmatprep.subr.mxu0 0.0
        %2014 = vmatpush2.xpose.msra.mxu0 0.0
        %2015 = vmatprep.subr.mxu0 0.0
        %2016 = vmatpush2.xpose.msra.mxu0 0.0
        %2017 = vmatprep.subr.mxu0 0.0
        %2018 = vmatpush2.xpose.msra.mxu0 0.0
        %2019 = vmatprep.subr.mxu0 0.0
        %2020 = vmatpush2.xpose.msra.mxu0 0.0
        %2021 = vmatprep.subr.mxu0 0.0
        %2022 = vmatpush2.xpose.msra.mxu0 0.0
        %2023 = vmatprep.mubr.f32.mxu0 0.0
        %2024 = vmatmul.mubr.f32.gmra.mxu0 %v1955
        %v2025 = vpop.f32.mrf.mxu0
        %v2026 = vadd.f32 %v1704, %v2025
        %v2027 = vpop.f32.mrf.mxu0
        %2028 = vdwg.mxu0
        %v2029 = vsel %vm1097, %v2026, -inf
        %2030 = vmax.xlane.f32.xlu0 %v2029
        %v2031 = vpop.xlane.xlu0 %2030
        %v2032 = vsub.f32 %v2026, %v2031
        %v2033 = vmul.f32 %v2032, 1.442695
        %v2034 = vpow.pop %v2033
        %v2035 = vsel %vm1097, %v2034, 0.0
        %2036 = vadd.xlane.f32.xlu0 %v2035
        %v2037 = vpop.xlane.xlu0 %2036
        %v2038 = vrcp.pop %v2037
        %v2039 = vmul.f32 %v2034, %v2038
        %2040 = vrot.lane.b32.xlu0 %v1701, 80
        %v2041 = vpop.permute.xlu0 %2040
        %v2044 = vsel %vm1097, %v2039, 0
        %2046 = vmatprep.subr.mxu0 0.0
        %2047 = vmatpush1.msra.mxu0 0.0
        %2048 = vmatprep.subr.mxu0 0.0
        %2049 = vmatpush1.msra.mxu0 0.0
        %2050 = vmatprep.subr.mxu0 0.0
        %2051 = vmatpush1.msra.mxu0 0.0
        %2052 = vmatprep.subr.mxu0 0.0
        %2053 = vmatpush1.msra.mxu0 0.0
        %2054 = vmatprep.subr.mxu0 0.0
        %2055 = vmatpush1.msra.mxu0 0.0
        %2056 = vmatprep.subr.mxu0 0.0
        %2057 = vmatpush1.msra.mxu0 0.0
        %2058 = vmatprep.subr.mxu0 0.0
        %2059 = vmatpush1.msra.mxu0 0.0
        %2060 = vmatprep.subr.mxu0 0.0
        %2061 = vmatpush1.msra.mxu0 0.0
        %2062 = vmatprep.subr.mxu0 0.0
        %2063 = vmatpush1.msra.mxu0 0.0
        %2064 = vmatprep.subr.mxu0 0.0
        %2065 = vmatpush1.msra.mxu0 0.0
        %2066 = vmatprep.subr.mxu0 0.0
        %2067 = vmatpush1.msra.mxu0 0.0
        %2068 = vmatprep.subr.mxu0 0.0
        %2069 = vmatpush1.msra.mxu0 0.0
        %2070 = vmatprep.subr.mxu0 0.0
        %2071 = vmatpush1.msra.mxu0 0.0
        %2072 = vmatprep.subr.mxu0 0.0
        %2073 = vmatpush1.msra.mxu0 0.0
        %2074 = vmatprep.subr.mxu0 0.0
        %2075 = vmatpush1.msra.mxu0 0.0
        %2076 = vmatprep.subr.mxu0 0.0
        %2077 = vmatpush1.msra.mxu0 %v2041
        %2078 = vmatprep.subr.mxu0 0.0
        %2079 = vmatpush2.msra.mxu0 0.0
        %2080 = vmatprep.subr.mxu0 0.0
        %2081 = vmatpush2.msra.mxu0 0.0
        %2082 = vmatprep.subr.mxu0 0.0
        %2083 = vmatpush2.msra.mxu0 0.0
        %2084 = vmatprep.subr.mxu0 0.0
        %2085 = vmatpush2.msra.mxu0 0.0
        %2086 = vmatprep.subr.mxu0 0.0
        %2087 = vmatpush2.msra.mxu0 0.0
        %2088 = vmatprep.subr.mxu0 0.0
        %2089 = vmatpush2.msra.mxu0 0.0
        %2090 = vmatprep.subr.mxu0 0.0
        %2091 = vmatpush2.msra.mxu0 0.0
        %2092 = vmatprep.subr.mxu0 0.0
        %2093 = vmatpush2.msra.mxu0 0.0
        %2094 = vmatprep.subr.mxu0 0.0
        %2095 = vmatpush2.msra.mxu0 0.0
        %2096 = vmatprep.subr.mxu0 0.0
        %2097 = vmatpush2.msra.mxu0 0.0
        %2098 = vmatprep.subr.mxu0 0.0
        %2099 = vmatpush2.msra.mxu0 0.0
        %2100 = vmatprep.subr.mxu0 0.0
        %2101 = vmatpush2.msra.mxu0 0.0
        %2102 = vmatprep.subr.mxu0 0.0
        %2103 = vmatpush2.msra.mxu0 0.0
        %2104 = vmatprep.subr.mxu0 0.0
        %2105 = vmatpush2.msra.mxu0 0.0
        %2106 = vmatprep.subr.mxu0 0.0
        %2107 = vmatpush2.msra.mxu0 0.0
        %2108 = vmatprep.subr.mxu0 0.0
        %2109 = vmatpush2.msra.mxu0 0.0
        %2110 = vmatprep.mubr.f32.mxu0 0.0
        %2111 = vmatmul.mubr.f32.gmra.mxu0 %v2044
        %v2112 = vpop.f32.mrf.mxu0
        %v2113 = vadd.f32 0.0, %v2112
        %v2114 = vpop.f32.mrf.mxu0
        %2115 = vdwg.mxu0
        %v2116 = vld [vmem:[#allocation18 + $0x10] sm:$0xff]
        %v2117 = vld [vmem:[#allocation18 + $0x18] sm:$0xff]
        %v2119 = vsel %vm1021, %v2113, 0
        %2121 = vmatprep.subr.mxu0 0.0
        %2122 = vmatpush1.msra.mxu0 0.0
        %2123 = vmatprep.subr.mxu0 0.0
        %2124 = vmatpush1.msra.mxu0 0.0
        %2125 = vmatprep.subr.mxu0 0.0
        %2126 = vmatpush1.msra.mxu0 0.0
        %2127 = vmatprep.subr.mxu0 0.0
        %2128 = vmatpush1.msra.mxu0 0.0
        %2129 = vmatprep.subr.mxu0 0.0
        %2130 = vmatpush1.msra.mxu0 0.0
        %2131 = vmatprep.subr.mxu0 0.0
        %2132 = vmatpush1.msra.mxu0 0.0
        %2133 = vmatprep.subr.mxu0 0.0
        %2134 = vmatpush1.msra.mxu0 0.0
        %2135 = vmatprep.subr.mxu0 0.0
        %2136 = vmatpush1.msra.mxu0 0.0
        %2137 = vmatprep.subr.mxu0 0.0
        %2138 = vmatpush1.msra.mxu0 0.0
        %2139 = vmatprep.subr.mxu0 0.0
        %2140 = vmatpush1.msra.mxu0 0.0
        %2141 = vmatprep.subr.mxu0 0.0
        %2142 = vmatpush1.msra.mxu0 0.0
        %2143 = vmatprep.subr.mxu0 0.0
        %2144 = vmatpush1.msra.mxu0 0.0
        %2145 = vmatprep.subr.mxu0 0.0
        %2146 = vmatpush1.msra.mxu0 0.0
        %2147 = vmatprep.subr.mxu0 0.0
        %2148 = vmatpush1.msra.mxu0 0.0
        %2149 = vmatprep.subr.mxu0 0.0
        %2150 = vmatpush1.msra.mxu0 %v2117
        %2151 = vmatprep.subr.mxu0 0.0
        %2152 = vmatpush1.msra.mxu0 %v2116
        %2153 = vmatprep.subr.mxu0 0.0
        %2154 = vmatpush2.msra.mxu0 0.0
        %2155 = vmatprep.subr.mxu0 0.0
        %2156 = vmatpush2.msra.mxu0 0.0
        %2157 = vmatprep.subr.mxu0 0.0
        %2158 = vmatpush2.msra.mxu0 0.0
        %2159 = vmatprep.subr.mxu0 0.0
        %2160 = vmatpush2.msra.mxu0 0.0
        %2161 = vmatprep.subr.mxu0 0.0
        %2162 = vmatpush2.msra.mxu0 0.0
        %2163 = vmatprep.subr.mxu0 0.0
        %2164 = vmatpush2.msra.mxu0 0.0
        %2165 = vmatprep.subr.mxu0 0.0
        %2166 = vmatpush2.msra.mxu0 0.0
        %2167 = vmatprep.subr.mxu0 0.0
        %2168 = vmatpush2.msra.mxu0 0.0
        %2169 = vmatprep.subr.mxu0 0.0
        %2170 = vmatpush2.msra.mxu0 0.0
        %2171 = vmatprep.subr.mxu0 0.0
        %2172 = vmatpush2.msra.mxu0 0.0
        %2173 = vmatprep.subr.mxu0 0.0
        %2174 = vmatpush2.msra.mxu0 0.0
        %2175 = vmatprep.subr.mxu0 0.0
        %2176 = vmatpush2.msra.mxu0 0.0
        %2177 = vmatprep.subr.mxu0 0.0
        %2178 = vmatpush2.msra.mxu0 0.0
        %2179 = vmatprep.subr.mxu0 0.0
        %2180 = vmatpush2.msra.mxu0 0.0
        %2181 = vmatprep.subr.mxu0 0.0
        %2182 = vmatpush2.msra.mxu0 0.0
        %2183 = vmatprep.subr.mxu0 0.0
        %2184 = vmatpush2.msra.mxu0 0.0
        %2185 = vmatprep.mubr.f32.mxu0 0.0
        %2186 = vmatmul.mubr.f32.gmra.mxu0 %v2119
        %v2187 = vpop.f32.mrf.mxu0
        %v2188 = vadd.f32 0.0, %v2187
        %v2189 = vpop.f32.mrf.mxu0
        %2190 = vdwg.mxu0
        %v2191 = vadd.f32 %v1950, %v2188
        %v2192 = vadd.f32 %v1508, %v2191
        %v2193 = vsel %vm904, %v2192, 0.0
        %2194 = vadd.xlane.f32.xlu0 %v2193
        %v2195 = vpop.xlane.xlu0 %2194
        %v2196 = vmul.f32 %v2195, %v908
        %v2197 = vsub.f32 %v2192, %v2196
        %v2198 = vmul.f32 %v2197, %v2197
        %v2199 = vsel %vm904, %v2198, 0.0
        %2200 = vadd.xlane.f32.xlu0 %v2199
        %v2201 = vpop.xlane.xlu0 %2200
        %v2202 = vmul.f32 %v2201, %v908
        %v2203 = vadd.f32 %v2202, 1e-05
        %v2204 = vrsqrt.pop %v2203
        %v2205 = vmul.f32 %v2197, %v2204
        %v2206 = vld [vmem:[%s6] sm:$0x1]
        %v2207 = vlaneseq
        %v2208 = vshrl.u32 %v2207, 7
        %v2209 = vsub.s32 0, %v2208
        %v2210 = vrot.slane %v2206, %v2209
        %v2211 = vmul.f32 %v2205, %v2210
        %v2212 = vld [vmem:[%s6 + $0x1] sm:$0x1]
        %v2213 = vlaneseq
        %v2214 = vshrl.u32 %v2213, 7
        %v2215 = vsub.s32 0, %v2214
        %v2216 = vrot.slane %v2212, %v2215
        %v2217 = vadd.f32 %v2211, %v2216
        %v2218 = vld [vmem:[%s17] sm:$0xff]
        %v2219 = vld [vmem:[%s17 + $0x8] sm:$0xff]
        %v2220 = vld [vmem:[%s17 + $0x10] sm:$0xff]
        %v2221 = vld [vmem:[%s17 + $0x18] sm:$0xff]
        %v2222 = vld [vmem:[#allocation21] sm:$0x1]
        %v2224 = vlaneseq
        %v2225 = vshrl.u32 %v2224, 7
        %v2226 = vsub.s32 0, %v2225
        %v2227 = vrot.slane %v2222, %v2226
        %v2230 = vsel %vm904, %v2217, 0
        %2232 = vmatprep.subr.mxu0 0.0
        %2233 = vmatpush1.msra.mxu0 0.0
        %2234 = vmatprep.subr.mxu0 0.0
        %2235 = vmatpush1.msra.mxu0 0.0
        %2236 = vmatprep.subr.mxu0 0.0
        %2237 = vmatpush1.msra.mxu0 0.0
        %2238 = vmatprep.subr.mxu0 0.0
        %2239 = vmatpush1.msra.mxu0 0.0
        %2240 = vmatprep.subr.mxu0 0.0
        %2241 = vmatpush1.msra.mxu0 0.0
        %2242 = vmatprep.subr.mxu0 0.0
        %2243 = vmatpush1.msra.mxu0 0.0
        %2244 = vmatprep.subr.mxu0 0.0
        %2245 = vmatpush1.msra.mxu0 0.0
        %2246 = vmatprep.subr.mxu0 0.0
        %2247 = vmatpush1.msra.mxu0 0.0
        %2248 = vmatprep.subr.mxu0 0.0
        %2249 = vmatpush1.msra.mxu0 0.0
        %2250 = vmatprep.subr.mxu0 0.0
        %2251 = vmatpush1.msra.mxu0 0.0
        %2252 = vmatprep.subr.mxu0 0.0
        %2253 = vmatpush1.msra.mxu0 0.0
        %2254 = vmatprep.subr.mxu0 0.0
        %2255 = vmatpush1.msra.mxu0 0.0
        %2256 = vmatprep.subr.mxu0 0.0
        %2257 = vmatpush1.msra.mxu0 %v2221
        %2258 = vmatprep.subr.mxu0 0.0
        %2259 = vmatpush1.msra.mxu0 %v2220
        %2260 = vmatprep.subr.mxu0 0.0
        %2261 = vmatpush1.msra.mxu0 %v2219
        %2262 = vmatprep.subr.mxu0 0.0
        %2263 = vmatpush1.msra.mxu0 %v2218
        %2264 = vmatprep.subr.mxu0 0.0
        %2265 = vmatpush2.msra.mxu0 0.0
        %2266 = vmatprep.subr.mxu0 0.0
        %2267 = vmatpush2.msra.mxu0 0.0
        %2268 = vmatprep.subr.mxu0 0.0
        %2269 = vmatpush2.msra.mxu0 0.0
        %2270 = vmatprep.subr.mxu0 0.0
        %2271 = vmatpush2.msra.mxu0 0.0
        %2272 = vmatprep.subr.mxu0 0.0
        %2273 = vmatpush2.msra.mxu0 0.0
        %2274 = vmatprep.subr.mxu0 0.0
        %2275 = vmatpush2.msra.mxu0 0.0
        %2276 = vmatprep.subr.mxu0 0.0
        %2277 = vmatpush2.msra.mxu0 0.0
        %2278 = vmatprep.subr.mxu0 0.0
        %2279 = vmatpush2.msra.mxu0 0.0
        %2280 = vmatprep.subr.mxu0 0.0
        %2281 = vmatpush2.msra.mxu0 0.0
        %2282 = vmatprep.subr.mxu0 0.0
        %2283 = vmatpush2.msra.mxu0 0.0
        %2284 = vmatprep.subr.mxu0 0.0
        %2285 = vmatpush2.msra.mxu0 0.0
        %2286 = vmatprep.subr.mxu0 0.0
        %2287 = vmatpush2.msra.mxu0 0.0
        %2288 = vmatprep.subr.mxu0 0.0
        %2289 = vmatpush2.msra.mxu0 0.0
        %2290 = vmatprep.subr.mxu0 0.0
        %2291 = vmatpush2.msra.mxu0 0.0
        %2292 = vmatprep.subr.mxu0 0.0
        %2293 = vmatpush2.msra.mxu0 0.0
        %2294 = vmatprep.subr.mxu0 0.0
        %2295 = vmatpush2.msra.mxu0 0.0
        %2296 = vmatprep.mubr.f32.mxu0 0.0
        %2297 = vmatmul.mubr.f32.gmra.mxu0 %v2230
        %v2298 = vpop.f32.mrf.mxu0
        %v2299 = vadd.f32 %v2227, %v2298
        %v2300 = vpop.f32.mrf.mxu0
        %2301 = vdwg.mxu0
        %v2302 = vmax.f32 %v2299, 0.0
        %v2303 = vld [vmem:[%s19] sm:$0xff]
        %v2304 = vld [vmem:[%s19 + $0x8] sm:$0xff]
        %v2305 = vld [vmem:[%s19 + $0x10] sm:$0xff]
        %v2306 = vld [vmem:[%s19 + $0x18] sm:$0xff]
        %v2307 = vld [vmem:[%s19 + $0x20] sm:$0xff]
        %v2308 = vld [vmem:[%s19 + $0x28] sm:$0xff]
        %v2309 = vld [vmem:[%s19 + $0x30] sm:$0xff]
        %v2310 = vld [vmem:[%s19 + $0x38] sm:$0xff]
        %v2311 = vld [vmem:[#allocation22] sm:$0x1]
        %v2313 = vlaneseq
        %v2314 = vshrl.u32 %v2313, 7
        %v2315 = vsub.s32 0, %v2314
        %v2316 = vrot.slane %v2311, %v2315
        %vm2318 = vcmask 523264
        %v2320 = vsel %vm2318, %v2302, 0
        %2322 = vmatprep.subr.mxu0 0.0
        %2323 = vmatpush1.msra.mxu0 0.0
        %2324 = vmatprep.subr.mxu0 0.0
        %2325 = vmatpush1.msra.mxu0 0.0
        %2326 = vmatprep.subr.mxu0 0.0
        %2327 = vmatpush1.msra.mxu0 0.0
        %2328 = vmatprep.subr.mxu0 0.0
        %2329 = vmatpush1.msra.mxu0 0.0
        %2330 = vmatprep.subr.mxu0 0.0
        %2331 = vmatpush1.msra.mxu0 0.0
        %2332 = vmatprep.subr.mxu0 0.0
        %2333 = vmatpush1.msra.mxu0 0.0
        %2334 = vmatprep.subr.mxu0 0.0
        %2335 = vmatpush1.msra.mxu0 0.0
        %2336 = vmatprep.subr.mxu0 0.0
        %2337 = vmatpush1.msra.mxu0 0.0
        %2338 = vmatprep.subr.mxu0 0.0
        %2339 = vmatpush1.msra.mxu0 %v2310
        %2340 = vmatprep.subr.mxu0 0.0
        %2341 = vmatpush1.msra.mxu0 %v2309
        %2342 = vmatprep.subr.mxu0 0.0
        %2343 = vmatpush1.msra.mxu0 %v2308
        %2344 = vmatprep.subr.mxu0 0.0
        %2345 = vmatpush1.msra.mxu0 %v2307
        %2346 = vmatprep.subr.mxu0 0.0
        %2347 = vmatpush1.msra.mxu0 %v2306
        %2348 = vmatprep.subr.mxu0 0.0
        %2349 = vmatpush1.msra.mxu0 %v2305
        %2350 = vmatprep.subr.mxu0 0.0
        %2351 = vmatpush1.msra.mxu0 %v2304
        %2352 = vmatprep.subr.mxu0 0.0
        %2353 = vmatpush1.msra.mxu0 %v2303
        %2354 = vmatprep.subr.mxu0 0.0
        %2355 = vmatpush2.msra.mxu0 0.0
        %2356 = vmatprep.subr.mxu0 0.0
        %2357 = vmatpush2.msra.mxu0 0.0
        %2358 = vmatprep.subr.mxu0 0.0
        %2359 = vmatpush2.msra.mxu0 0.0
        %2360 = vmatprep.subr.mxu0 0.0
        %2361 = vmatpush2.msra.mxu0 0.0
        %2362 = vmatprep.subr.mxu0 0.0
        %2363 = vmatpush2.msra.mxu0 0.0
        %2364 = vmatprep.subr.mxu0 0.0
        %2365 = vmatpush2.msra.mxu0 0.0
        %2366 = vmatprep.subr.mxu0 0.0
        %2367 = vmatpush2.msra.mxu0 0.0
        %2368 = vmatprep.subr.mxu0 0.0
        %2369 = vmatpush2.msra.mxu0 0.0
        %2370 = vmatprep.subr.mxu0 0.0
        %2371 = vmatpush2.msra.mxu0 0.0
        %2372 = vmatprep.subr.mxu0 0.0
        %2373 = vmatpush2.msra.mxu0 0.0
        %2374 = vmatprep.subr.mxu0 0.0
        %2375 = vmatpush2.msra.mxu0 0.0
        %2376 = vmatprep.subr.mxu0 0.0
        %2377 = vmatpush2.msra.mxu0 0.0
        %2378 = vmatprep.subr.mxu0 0.0
        %2379 = vmatpush2.msra.mxu0 0.0
        %2380 = vmatprep.subr.mxu0 0.0
        %2381 = vmatpush2.msra.mxu0 0.0
        %2382 = vmatprep.subr.mxu0 0.0
        %2383 = vmatpush2.msra.mxu0 0.0
        %2384 = vmatprep.subr.mxu0 0.0
        %2385 = vmatpush2.msra.mxu0 0.0
        %2386 = vmatprep.mubr.f32.mxu0 0.0
        %2387 = vmatmul.mubr.f32.gmra.mxu0 %v2320
        %v2388 = vpop.f32.mrf.mxu0
        %v2389 = vadd.f32 %v2316, %v2388
        %v2390 = vpop.f32.mrf.mxu0
        %2391 = vdwg.mxu0
        %v2392 = vadd.f32 %v2192, %v2389
        %2393 = vst.msk [vmem:[%s902] sm:$0xff] %vm904, %v2392
        %p2394 = scmp.lt.s32.totalorder %s44, 1
        %s2395 = scalar_select %p2394, %s44, 1
        %s2396 = smul.addr %s2395, 8
        %s2397 = scalar_lea.vmem %s21, %s2396
        // Predicated region
        $region161: #{decoder_forward.3} parent=103 // pred_check
          %p2398 = pneg %p523
        $region162: #{decoder_forward.3} parent=103 // pred_check_branch
          %2400 = sbr.rel (%p2398) target = $region164
        $region163: #{decoder_forward.3} parent=103 // pred_region
          _
        $region164: #{decoder_forward.3} parent=103 // pred_fallthru
          _
      $region104: #{decoder_forward.3} parent=5 // pred_fallthru
        _
      %p2401 = scmp.le.s32.totalorder 2, %s39
      // Predicated region
      $region165: #{decoder_forward.3} parent=5 // pred_check
        %p2402 = pneg %p2401
      $region166: #{decoder_forward.3} parent=5 // pred_check_branch
        %2404 = sbr.rel (%p2402) target = $region168
      $region167: #{decoder_forward.3} parent=5 // pred_region
        %s2405 = ssub.s32 %s39, 2
        // Predicated region
        $region169: #{decoder_forward.3} parent=167 // pred_check
          %p2406 = pneg %p529
        $region170: #{decoder_forward.3} parent=167 // pred_check_branch
          %2408 = sbr.rel (%p2406) target = $region172
        $region171: #{decoder_forward.3} parent=167 // pred_region
          %p2409 = scmp.lt.s32.totalorder %s45, 1
          %s2410 = scalar_select %p2409, %s45, 1
          %s2411 = smul.addr %s2410, 8
          %s2412 = scalar_lea.vmem %s21, %s2411
        $region172: #{decoder_forward.3} parent=167 // pred_fallthru
          _
      $region168: #{decoder_forward.3} parent=5 // pred_fallthru
        _
    $region6: #{decoder_forward.3} parent=1 // loop_footer
      %s43 = sadd.s32 1, %s39
    $region7: #{decoder_forward.3} parent=1 // loop_footer_branch
      %38 = sbr.rel target = $region3
    $region8: #{decoder_forward.3} parent=1 // loop_exit
      _
    %2413 = vsyncpa [#allocation3], 1
    %s2414 = scalar_lea.sflag [#allocation3], 1
    %2415 = vsyncpa %s2414, 1
    %2416 = vsyncpa [#allocation5], 1
    %s2417 = scalar_lea.sflag [#allocation5], 1
    %2418 = vsyncpa %s2417, 1
    %2419 = vsyncpa [#allocation8], 1
    %2420 = vsyncpa [#allocation11], 1
    %2421 = vsyncpa [#allocation14], 1
    %2422 = vsyncpa [#allocation17], 1
    %2423 = vsyncpa [#allocation20], 1
    %2424 = vsyncpa [#allocation23], 1

// kernel: decoder_forward.4
$region0: #{decoder_forward.4}
  #allocation0 [shape = 'u32[]', space=smem, size = 0x4, offset = 0x4, fixed_abs, tag = 'smem constant byte address 0x4 - core index']
  #allocation1 [shape = 'u32[144,128]{1,0:T(1,128)}', space=vmem, size = 0x12000, scoped, tag = 'internal scratch']
  %s0 = inlined_call_operand.vmem [shape: f32[2,8,32], index: 0, kind: input, shape index: {}]
  %s1 = inlined_call_operand.vmem [shape: f32[2,8,32], index: 1, kind: input, shape index: {}]
  %s2 = inlined_call_operand.vmem [shape: f32[2,8,8], index: 2, kind: input, shape index: {}]
  %s3 = inlined_call_operand.vmem [shape: f32[2,8,8], index: 3, kind: input, shape index: {}]
  %s4 = inlined_call_operand.vmem [shape: f32[2,32], index: 4, kind: input, shape index: {}, may-alias: {4,5,6}]
  %s5 = inlined_call_operand.vmem [shape: f32[2,32], index: 5, kind: input, shape index: {}, may-alias: {4,5,6}]
  %s6 = inlined_call_operand.vmem [shape: f32[2,32], index: 6, kind: input, shape index: {}, may-alias: {4,5,6}]
  %s7 = inlined_call_operand.vmem [shape: f32[32,96], index: 7, kind: input, shape index: {}]
  %s8 = inlined_call_operand.vmem [shape: f32[1,96], index: 8, kind: input, shape index: {}]
  %s9 = inlined_call_operand.vmem [shape: f32[32,32], index: 9, kind: input, shape index: {}]
  %s10 = inlined_call_operand.vmem [shape: f32[1,32], index: 10, kind: input, shape index: {}]
  %s11 = inlined_call_operand.vmem [shape: f32[32,32], index: 11, kind: input, shape index: {}]
  %s12 = inlined_call_operand.vmem [shape: f32[1,32], index: 12, kind: input, shape index: {}]
  %s13 = inlined_call_operand.vmem [shape: f32[32,64], index: 13, kind: input, shape index: {}]
  %s14 = inlined_call_operand.vmem [shape: f32[1,64], index: 14, kind: input, shape index: {}]
  %s15 = inlined_call_operand.vmem [shape: f32[32,32], index: 15, kind: input, shape index: {}]
  %s16 = inlined_call_operand.vmem [shape: f32[1,32], index: 16, kind: input, shape index: {}]
  %s17 = inlined_call_operand.vmem [shape: f32[32,64], index: 17, kind: input, shape index: {}]
  %s18 = inlined_call_operand.vmem [shape: f32[1,64], index: 18, kind: input, shape index: {}]
  %s19 = inlined_call_operand.vmem [shape: f32[64,32], index: 19, kind: input, shape index: {}]
  %s20 = inlined_call_operand.vmem [shape: f32[1,32], index: 20, kind: input, shape index: {}]
  %s21 = inlined_call_operand.vmem [shape: f32[2,8,32], index: 21, kind: output, shape index: {}]
  %s22 = sld [smem:[#allocation0]]
  $region117: #{decoder_forward.4} parent=0
    _
  %s24 = ssub.s32 1, %s22
  %s25 = scalar_select 0, %s24, %s22
  loop: start=0, step=1, limit=4
  $region2: #{decoder_forward.4} parent=0 // loop_pre_header
    _
  $region3: #{decoder_forward.4} parent=0 // loop_header
    %s27 = sphi 0, %s31
    %p28 = scmp.ge.s32.totalorder %s27, 4
    %s37 = sphi 0, %s39
    %s40 = sphi 0, %s37
    %s41 = sphi 0, %s40
    %s57 = sphi 0, %s41
    %s63 = sphi 0, %s65
    %s66 = sphi 0, %s63
    %s67 = sphi 0, %s66
    %s83 = sphi 0, %s67
    %s89 = sphi 0, %s91
    %s92 = sphi 0, %s89
    %s93 = sphi 0, %s92
    %s109 = sphi 0, %s93
    %s115 = sphi 0, %s117
    %s118 = sphi 0, %s115
    %s119 = sphi 0, %s118
    %s135 = sphi 0, %s119
    %s139 = sphi 0, %s139
    %s141 = sphi 0, %s139
    %s142 = sphi 0, %s141
    %s156 = sphi 0, %s142
    %s160 = sphi 0, %s160
    %s162 = sphi 0, %s160
    %s163 = sphi 0, %s162
    %s177 = sphi 0, %s163
    %s181 = sphi 0, %s181
    %s183 = sphi 0, %s181
    %s184 = sphi 0, %s183
    %s198 = sphi 0, %s184
    %s202 = sphi 0, %s202
    %s204 = sphi 0, %s202
    %s205 = sphi 0, %s204
    %s219 = sphi 0, %s205
    %s223 = sphi 0, %s223
    %s225 = sphi 0, %s223
    %s226 = sphi 0, %s225
    %s240 = sphi 0, %s226
    %s244 = sphi 0, %s244
    %s246 = sphi 0, %s244
    %s247 = sphi 0, %s246
    %s261 = sphi 0, %s247
    %s265 = sphi 0, %s265
    %s267 = sphi 0, %s265
    %s268 = sphi 0, %s267
    %s282 = sphi 0, %s268
    %s286 = sphi 0, %s286
    %s288 = sphi 0, %s286
    %s289 = sphi 0, %s288
    %s303 = sphi 0, %s289
    %s307 = sphi 0, %s307
    %s309 = sphi 0, %s307
    %s310 = sphi 0, %s309
    %s324 = sphi 0, %s310
    %s328 = sphi 0, %s328
    %s330 = sphi 0, %s328
    %s331 = sphi 0, %s330
    %s345 = sphi 0, %s331
    %s349 = sphi 0, %s349
    %s351 = sphi 0, %s349
    %s352 = sphi 0, %s351
    %s366 = sphi 0, %s352
    %s370 = sphi 0, %s370
    %s372 = sphi 0, %s370
    %s373 = sphi 0, %s372
    %s387 = sphi 0, %s373
    %s391 = sphi 0, %s391
    %s393 = sphi 0, %s391
    %s394 = sphi 0, %s393
    %s408 = sphi 0, %s394
    %s412 = sphi 0, %s412
    %s414 = sphi 0, %s412
    %s415 = sphi 0, %s414
    %s429 = sphi 0, %s415
    %s433 = sphi 0, %s433
    %s435 = sphi 0, %s433
    %s436 = sphi 0, %s435
    %s450 = sphi 0, %s436
    %s454 = sphi 0, %s454
    %s456 = sphi 0, %s454
    %s457 = sphi 0, %s456
    %s471 = sphi 0, %s457
    %s475 = sphi 0, %s475
    %s477 = sphi 0, %s475
    %s478 = sphi 0, %s477
    %s492 = sphi 0, %s478
    %s498 = sphi 0, %s500
    %s501 = sphi 0, %s498
    %s502 = sphi 0, %s501
    %s518 = sphi 0, %s502
  $region4: #{decoder_forward.4} parent=0 // loop_header_branch
    %30 = sbr.rel (%p28) target = $region8
  $region5: #{decoder_forward.4} parent=0 // loop_body
    %s32 = ssub.s32 %s27, 1
    %s33 = ssub.s32 %s27, 2
    %s34 = sadd.s32 %s27, 1
    %s35 = ssub.s32 %s27, %s34
    %p36 = scmp.eq.s32.totalorder %s35, 0
    %s38 = sadd.s32 %s37, 1
    %s39 = scalar_select %p36, %s37, %s38
    %p42 = pneg %p36
    %p43 = scmp.eq.s32.totalorder %s27, 1
    %p44 = por %p42, %p43
    %p45 = scmp.ne.s32.totalorder %s37, %s40
    %p46 = scmp.eq.s32.totalorder %s27, 0
    %p47 = por %p45, %p46
    %p48 = scmp.ne.s32.totalorder %s37, %s40
    %p49 = scmp.eq.s32.totalorder %s32, 1
    %p50 = por %p48, %p49
    %p51 = scmp.ne.s32.totalorder %s40, %s41
    %p52 = scmp.eq.s32.totalorder %s32, 0
    %p53 = por %p51, %p52
    %p54 = scmp.ne.s32.totalorder %s40, %s41
    %p55 = scmp.eq.s32.totalorder %s33, 1
    %p56 = por %p54, %p55
    %p58 = scmp.ne.s32.totalorder %s41, %s57
    %p59 = scmp.eq.s32.totalorder %s33, 0
    %p60 = por %p58, %p59
    %s61 = ssub.s32 %s27, %s34
    %p62 = scmp.eq.s32.totalorder %s61, 0
    %s64 = sadd.s32 %s63, 1
    %s65 = scalar_select %p62, %s63, %s64
    %p68 = pneg %p62
    %p69 = scmp.eq.s32.totalorder %s27, 1
    %p70 = por %p68, %p69
    %p71 = scmp.ne.s32.totalorder %s63, %s66
    %p72 = scmp.eq.s32.totalorder %s27, 0
    %p73 = por %p71, %p72
    %p74 = scmp.ne.s32.totalorder %s63, %s66
    %p75 = scmp.eq.s32.totalorder %s32, 1
    %p76 = por %p74, %p75
    %p77 = scmp.ne.s32.totalorder %s66, %s67
    %p78 = scmp.eq.s32.totalorder %s32, 0
    %p79 = por %p77, %p78
    %p80 = scmp.ne.s32.totalorder %s66, %s67
    %p81 = scmp.eq.s32.totalorder %s33, 1
    %p82 = por %p80, %p81
    %p84 = scmp.ne.s32.totalorder %s67, %s83
    %p85 = scmp.eq.s32.totalorder %s33, 0
    %p86 = por %p84, %p85
    %s87 = ssub.s32 %s27, %s34
    %p88 = scmp.eq.s32.totalorder %s87, 0
    %s90 = sadd.s32 %s89, 1
    %s91 = scalar_select %p88, %s89, %s90
    %p94 = pneg %p88
    %p95 = scmp.eq.s32.totalorder %s27, 1
    %p96 = por %p94, %p95
    %p97 = scmp.ne.s32.totalorder %s89, %s92
    %p98 = scmp.eq.s32.totalorder %s27, 0
    %p99 = por %p97, %p98
    %p100 = scmp.ne.s32.totalorder %s89, %s92
    %p101 = scmp.eq.s32.totalorder %s32, 1
    %p102 = por %p100, %p101
    %p103 = scmp.ne.s32.totalorder %s92, %s93
    %p104 = scmp.eq.s32.totalorder %s32, 0
    %p105 = por %p103, %p104
    %p106 = scmp.ne.s32.totalorder %s92, %s93
    %p107 = scmp.eq.s32.totalorder %s33, 1
    %p108 = por %p106, %p107
    %p110 = scmp.ne.s32.totalorder %s93, %s109
    %p111 = scmp.eq.s32.totalorder %s33, 0
    %p112 = por %p110, %p111
    %s113 = ssub.s32 %s27, %s34
    %p114 = scmp.eq.s32.totalorder %s113, 0
    %s116 = sadd.s32 %s115, 1
    %s117 = scalar_select %p114, %s115, %s116
    %p120 = pneg %p114
    %p121 = scmp.eq.s32.totalorder %s27, 1
    %p122 = por %p120, %p121
    %p123 = scmp.ne.s32.totalorder %s115, %s118
    %p124 = scmp.eq.s32.totalorder %s27, 0
    %p125 = por %p123, %p124
    %p126 = scmp.ne.s32.totalorder %s115, %s118
    %p127 = scmp.eq.s32.totalorder %s32, 1
    %p128 = por %p126, %p127
    %p129 = scmp.ne.s32.totalorder %s118, %s119
    %p130 = scmp.eq.s32.totalorder %s32, 0
    %p131 = por %p129, %p130
    %p132 = scmp.ne.s32.totalorder %s118, %s119
    %p133 = scmp.eq.s32.totalorder %s33, 1
    %p134 = por %p132, %p133
    %p136 = scmp.ne.s32.totalorder %s119, %s135
    %p137 = scmp.eq.s32.totalorder %s33, 0
    %p138 = por %p136, %p137
    %s140 = sadd.s32 %s139, 1
    %p143 = scmp.eq.s32.totalorder %s27, 1
    %p144 = scmp.ne.s32.totalorder %s139, %s141
    %p145 = scmp.eq.s32.totalorder %s27, 0
    %p146 = por %p144, %p145
    %p147 = scmp.ne.s32.totalorder %s139, %s141
    %p148 = scmp.eq.s32.totalorder %s32, 1
    %p149 = por %p147, %p148
    %p150 = scmp.ne.s32.totalorder %s141, %s142
    %p151 = scmp.eq.s32.totalorder %s32, 0
    %p152 = por %p150, %p151
    %p153 = scmp.ne.s32.totalorder %s141, %s142
    %p154 = scmp.eq.s32.totalorder %s33, 1
    %p155 = por %p153, %p154
    %p157 = scmp.ne.s32.totalorder %s142, %s156
    %p158 = scmp.eq.s32.totalorder %s33, 0
    %p159 = por %p157, %p158
    %s161 = sadd.s32 %s160, 1
    %p164 = scmp.eq.s32.totalorder %s27, 1
    %p165 = scmp.ne.s32.totalorder %s160, %s162
    %p166 = scmp.eq.s32.totalorder %s27, 0
    %p167 = por %p165, %p166
    %p168 = scmp.ne.s32.totalorder %s160, %s162
    %p169 = scmp.eq.s32.totalorder %s32, 1
    %p170 = por %p168, %p169
    %p171 = scmp.ne.s32.totalorder %s162, %s163
    %p172 = scmp.eq.s32.totalorder %s32, 0
    %p173 = por %p171, %p172
    %p174 = scmp.ne.s32.totalorder %s162, %s163
    %p175 = scmp.eq.s32.totalorder %s33, 1
    %p176 = por %p174, %p175
    %p178 = scmp.ne.s32.totalorder %s163, %s177
    %p179 = scmp.eq.s32.totalorder %s33, 0
    %p180 = por %p178, %p179
    %s182 = sadd.s32 %s181, 1
    %p185 = scmp.eq.s32.totalorder %s27, 1
    %p186 = scmp.ne.s32.totalorder %s181, %s183
    %p187 = scmp.eq.s32.totalorder %s27, 0
    %p188 = por %p186, %p187
    %p189 = scmp.ne.s32.totalorder %s181, %s183
    %p190 = scmp.eq.s32.totalorder %s32, 1
    %p191 = por %p189, %p190
    %p192 = scmp.ne.s32.totalorder %s183, %s184
    %p193 = scmp.eq.s32.totalorder %s32, 0
    %p194 = por %p192, %p193
    %p195 = scmp.ne.s32.totalorder %s183, %s184
    %p196 = scmp.eq.s32.totalorder %s33, 1
    %p197 = por %p195, %p196
    %p199 = scmp.ne.s32.totalorder %s184, %s198
    %p200 = scmp.eq.s32.totalorder %s33, 0
    %p201 = por %p199, %p200
    %s203 = sadd.s32 %s202, 1
    %p206 = scmp.eq.s32.totalorder %s27, 1
    %p207 = scmp.ne.s32.totalorder %s202, %s204
    %p208 = scmp.eq.s32.totalorder %s27, 0
    %p209 = por %p207, %p208
    %p210 = scmp.ne.s32.totalorder %s202, %s204
    %p211 = scmp.eq.s32.totalorder %s32, 1
    %p212 = por %p210, %p211
    %p213 = scmp.ne.s32.totalorder %s204, %s205
    %p214 = scmp.eq.s32.totalorder %s32, 0
    %p215 = por %p213, %p214
    %p216 = scmp.ne.s32.totalorder %s204, %s205
    %p217 = scmp.eq.s32.totalorder %s33, 1
    %p218 = por %p216, %p217
    %p220 = scmp.ne.s32.totalorder %s205, %s219
    %p221 = scmp.eq.s32.totalorder %s33, 0
    %p222 = por %p220, %p221
    %s224 = sadd.s32 %s223, 1
    %p227 = scmp.eq.s32.totalorder %s27, 1
    %p228 = scmp.ne.s32.totalorder %s223, %s225
    %p229 = scmp.eq.s32.totalorder %s27, 0
    %p230 = por %p228, %p229
    %p231 = scmp.ne.s32.totalorder %s223, %s225
    %p232 = scmp.eq.s32.totalorder %s32, 1
    %p233 = por %p231, %p232
    %p234 = scmp.ne.s32.totalorder %s225, %s226
    %p235 = scmp.eq.s32.totalorder %s32, 0
    %p236 = por %p234, %p235
    %p237 = scmp.ne.s32.totalorder %s225, %s226
    %p238 = scmp.eq.s32.totalorder %s33, 1
    %p239 = por %p237, %p238
    %p241 = scmp.ne.s32.totalorder %s226, %s240
    %p242 = scmp.eq.s32.totalorder %s33, 0
    %p243 = por %p241, %p242
    %s245 = sadd.s32 %s244, 1
    %p248 = scmp.eq.s32.totalorder %s27, 1
    %p249 = scmp.ne.s32.totalorder %s244, %s246
    %p250 = scmp.eq.s32.totalorder %s27, 0
    %p251 = por %p249, %p250
    %p252 = scmp.ne.s32.totalorder %s244, %s246
    %p253 = scmp.eq.s32.totalorder %s32, 1
    %p254 = por %p252, %p253
    %p255 = scmp.ne.s32.totalorder %s246, %s247
    %p256 = scmp.eq.s32.totalorder %s32, 0
    %p257 = por %p255, %p256
    %p258 = scmp.ne.s32.totalorder %s246, %s247
    %p259 = scmp.eq.s32.totalorder %s33, 1
    %p260 = por %p258, %p259
    %p262 = scmp.ne.s32.totalorder %s247, %s261
    %p263 = scmp.eq.s32.totalorder %s33, 0
    %p264 = por %p262, %p263
    %s266 = sadd.s32 %s265, 1
    %p269 = scmp.eq.s32.totalorder %s27, 1
    %p270 = scmp.ne.s32.totalorder %s265, %s267
    %p271 = scmp.eq.s32.totalorder %s27, 0
    %p272 = por %p270, %p271
    %p273 = scmp.ne.s32.totalorder %s265, %s267
    %p274 = scmp.eq.s32.totalorder %s32, 1
    %p275 = por %p273, %p274
    %p276 = scmp.ne.s32.totalorder %s267, %s268
    %p277 = scmp.eq.s32.totalorder %s32, 0
    %p278 = por %p276, %p277
    %p279 = scmp.ne.s32.totalorder %s267, %s268
    %p280 = scmp.eq.s32.totalorder %s33, 1
    %p281 = por %p279, %p280
    %p283 = scmp.ne.s32.totalorder %s268, %s282
    %p284 = scmp.eq.s32.totalorder %s33, 0
    %p285 = por %p283, %p284
    %s287 = sadd.s32 %s286, 1
    %p290 = scmp.eq.s32.totalorder %s27, 1
    %p291 = scmp.ne.s32.totalorder %s286, %s288
    %p292 = scmp.eq.s32.totalorder %s27, 0
    %p293 = por %p291, %p292
    %p294 = scmp.ne.s32.totalorder %s286, %s288
    %p295 = scmp.eq.s32.totalorder %s32, 1
    %p296 = por %p294, %p295
    %p297 = scmp.ne.s32.totalorder %s288, %s289
    %p298 = scmp.eq.s32.totalorder %s32, 0
    %p299 = por %p297, %p298
    %p300 = scmp.ne.s32.totalorder %s288, %s289
    %p301 = scmp.eq.s32.totalorder %s33, 1
    %p302 = por %p300, %p301
    %p304 = scmp.ne.s32.totalorder %s289, %s303
    %p305 = scmp.eq.s32.totalorder %s33, 0
    %p306 = por %p304, %p305
    %s308 = sadd.s32 %s307, 1
    %p311 = scmp.eq.s32.totalorder %s27, 1
    %p312 = scmp.ne.s32.totalorder %s307, %s309
    %p313 = scmp.eq.s32.totalorder %s27, 0
    %p314 = por %p312, %p313
    %p315 = scmp.ne.s32.totalorder %s307, %s309
    %p316 = scmp.eq.s32.totalorder %s32, 1
    %p317 = por %p315, %p316
    %p318 = scmp.ne.s32.totalorder %s309, %s310
    %p319 = scmp.eq.s32.totalorder %s32, 0
    %p320 = por %p318, %p319
    %p321 = scmp.ne.s32.totalorder %s309, %s310
    %p322 = scmp.eq.s32.totalorder %s33, 1
    %p323 = por %p321, %p322
    %p325 = scmp.ne.s32.totalorder %s310, %s324
    %p326 = scmp.eq.s32.totalorder %s33, 0
    %p327 = por %p325, %p326
    %s329 = sadd.s32 %s328, 1
    %p332 = scmp.eq.s32.totalorder %s27, 1
    %p333 = scmp.ne.s32.totalorder %s328, %s330
    %p334 = scmp.eq.s32.totalorder %s27, 0
    %p335 = por %p333, %p334
    %p336 = scmp.ne.s32.totalorder %s328, %s330
    %p337 = scmp.eq.s32.totalorder %s32, 1
    %p338 = por %p336, %p337
    %p339 = scmp.ne.s32.totalorder %s330, %s331
    %p340 = scmp.eq.s32.totalorder %s32, 0
    %p341 = por %p339, %p340
    %p342 = scmp.ne.s32.totalorder %s330, %s331
    %p343 = scmp.eq.s32.totalorder %s33, 1
    %p344 = por %p342, %p343
    %p346 = scmp.ne.s32.totalorder %s331, %s345
    %p347 = scmp.eq.s32.totalorder %s33, 0
    %p348 = por %p346, %p347
    %s350 = sadd.s32 %s349, 1
    %p353 = scmp.eq.s32.totalorder %s27, 1
    %p354 = scmp.ne.s32.totalorder %s349, %s351
    %p355 = scmp.eq.s32.totalorder %s27, 0
    %p356 = por %p354, %p355
    %p357 = scmp.ne.s32.totalorder %s349, %s351
    %p358 = scmp.eq.s32.totalorder %s32, 1
    %p359 = por %p357, %p358
    %p360 = scmp.ne.s32.totalorder %s351, %s352
    %p361 = scmp.eq.s32.totalorder %s32, 0
    %p362 = por %p360, %p361
    %p363 = scmp.ne.s32.totalorder %s351, %s352
    %p364 = scmp.eq.s32.totalorder %s33, 1
    %p365 = por %p363, %p364
    %p367 = scmp.ne.s32.totalorder %s352, %s366
    %p368 = scmp.eq.s32.totalorder %s33, 0
    %p369 = por %p367, %p368
    %s371 = sadd.s32 %s370, 1
    %p374 = scmp.eq.s32.totalorder %s27, 1
    %p375 = scmp.ne.s32.totalorder %s370, %s372
    %p376 = scmp.eq.s32.totalorder %s27, 0
    %p377 = por %p375, %p376
    %p378 = scmp.ne.s32.totalorder %s370, %s372
    %p379 = scmp.eq.s32.totalorder %s32, 1
    %p380 = por %p378, %p379
    %p381 = scmp.ne.s32.totalorder %s372, %s373
    %p382 = scmp.eq.s32.totalorder %s32, 0
    %p383 = por %p381, %p382
    %p384 = scmp.ne.s32.totalorder %s372, %s373
    %p385 = scmp.eq.s32.totalorder %s33, 1
    %p386 = por %p384, %p385
    %p388 = scmp.ne.s32.totalorder %s373, %s387
    %p389 = scmp.eq.s32.totalorder %s33, 0
    %p390 = por %p388, %p389
    %s392 = sadd.s32 %s391, 1
    %p395 = scmp.eq.s32.totalorder %s27, 1
    %p396 = scmp.ne.s32.totalorder %s391, %s393
    %p397 = scmp.eq.s32.totalorder %s27, 0
    %p398 = por %p396, %p397
    %p399 = scmp.ne.s32.totalorder %s391, %s393
    %p400 = scmp.eq.s32.totalorder %s32, 1
    %p401 = por %p399, %p400
    %p402 = scmp.ne.s32.totalorder %s393, %s394
    %p403 = scmp.eq.s32.totalorder %s32, 0
    %p404 = por %p402, %p403
    %p405 = scmp.ne.s32.totalorder %s393, %s394
    %p406 = scmp.eq.s32.totalorder %s33, 1
    %p407 = por %p405, %p406
    %p409 = scmp.ne.s32.totalorder %s394, %s408
    %p410 = scmp.eq.s32.totalorder %s33, 0
    %p411 = por %p409, %p410
    %s413 = sadd.s32 %s412, 1
    %p416 = scmp.eq.s32.totalorder %s27, 1
    %p417 = scmp.ne.s32.totalorder %s412, %s414
    %p418 = scmp.eq.s32.totalorder %s27, 0
    %p419 = por %p417, %p418
    %p420 = scmp.ne.s32.totalorder %s412, %s414
    %p421 = scmp.eq.s32.totalorder %s32, 1
    %p422 = por %p420, %p421
    %p423 = scmp.ne.s32.totalorder %s414, %s415
    %p424 = scmp.eq.s32.totalorder %s32, 0
    %p425 = por %p423, %p424
    %p426 = scmp.ne.s32.totalorder %s414, %s415
    %p427 = scmp.eq.s32.totalorder %s33, 1
    %p428 = por %p426, %p427
    %p430 = scmp.ne.s32.totalorder %s415, %s429
    %p431 = scmp.eq.s32.totalorder %s33, 0
    %p432 = por %p430, %p431
    %s434 = sadd.s32 %s433, 1
    %p437 = scmp.eq.s32.totalorder %s27, 1
    %p438 = scmp.ne.s32.totalorder %s433, %s435
    %p439 = scmp.eq.s32.totalorder %s27, 0
    %p440 = por %p438, %p439
    %p441 = scmp.ne.s32.totalorder %s433, %s435
    %p442 = scmp.eq.s32.totalorder %s32, 1
    %p443 = por %p441, %p442
    %p444 = scmp.ne.s32.totalorder %s435, %s436
    %p445 = scmp.eq.s32.totalorder %s32, 0
    %p446 = por %p444, %p445
    %p447 = scmp.ne.s32.totalorder %s435, %s436
    %p448 = scmp.eq.s32.totalorder %s33, 1
    %p449 = por %p447, %p448
    %p451 = scmp.ne.s32.totalorder %s436, %s450
    %p452 = scmp.eq.s32.totalorder %s33, 0
    %p453 = por %p451, %p452
    %s455 = sadd.s32 %s454, 1
    %p458 = scmp.eq.s32.totalorder %s27, 1
    %p459 = scmp.ne.s32.totalorder %s454, %s456
    %p460 = scmp.eq.s32.totalorder %s27, 0
    %p461 = por %p459, %p460
    %p462 = scmp.ne.s32.totalorder %s454, %s456
    %p463 = scmp.eq.s32.totalorder %s32, 1
    %p464 = por %p462, %p463
    %p465 = scmp.ne.s32.totalorder %s456, %s457
    %p466 = scmp.eq.s32.totalorder %s32, 0
    %p467 = por %p465, %p466
    %p468 = scmp.ne.s32.totalorder %s456, %s457
    %p469 = scmp.eq.s32.totalorder %s33, 1
    %p470 = por %p468, %p469
    %p472 = scmp.ne.s32.totalorder %s457, %s471
    %p473 = scmp.eq.s32.totalorder %s33, 0
    %p474 = por %p472, %p473
    %s476 = sadd.s32 %s475, 1
    %p479 = scmp.eq.s32.totalorder %s27, 1
    %p480 = scmp.ne.s32.totalorder %s475, %s477
    %p481 = scmp.eq.s32.totalorder %s27, 0
    %p482 = por %p480, %p481
    %p483 = scmp.ne.s32.totalorder %s475, %s477
    %p484 = scmp.eq.s32.totalorder %s32, 1
    %p485 = por %p483, %p484
    %p486 = scmp.ne.s32.totalorder %s477, %s478
    %p487 = scmp.eq.s32.totalorder %s32, 0
    %p488 = por %p486, %p487
    %p489 = scmp.ne.s32.totalorder %s477, %s478
    %p490 = scmp.eq.s32.totalorder %s33, 1
    %p491 = por %p489, %p490
    %p493 = scmp.ne.s32.totalorder %s478, %s492
    %p494 = scmp.eq.s32.totalorder %s33, 0
    %p495 = por %p493, %p494
    %s496 = ssub.s32 %s27, %s34
    %p497 = scmp.eq.s32.totalorder %s496, 0
    %s499 = sadd.s32 %s498, 1
    %s500 = scalar_select %p497, %s498, %s499
    %p503 = pneg %p497
    %p504 = scmp.eq.s32.totalorder %s27, 1
    %p505 = por %p503, %p504
    %p506 = scmp.ne.s32.totalorder %s498, %s501
    %p507 = scmp.eq.s32.totalorder %s27, 0
    %p508 = por %p506, %p507
    %p509 = scmp.ne.s32.totalorder %s498, %s501
    %p510 = scmp.eq.s32.totalorder %s32, 1
    %p511 = por %p509, %p510
    %p512 = scmp.ne.s32.totalorder %s501, %s502
    %p513 = scmp.eq.s32.totalorder %s32, 0
    %p514 = por %p512, %p513
    %p515 = scmp.ne.s32.totalorder %s501, %s502
    %p516 = scmp.eq.s32.totalorder %s33, 1
    %p517 = por %p515, %p516
    %p519 = scmp.ne.s32.totalorder %s502, %s518
    %p520 = scmp.eq.s32.totalorder %s33, 0
    %p521 = por %p519, %p520
    %p522 = scmp.le.s32.totalorder 1, %s27
    %p523 = scmp.lt.s32.totalorder %s27, 3
    %p524 = pnand %p522, %p523
    %p525 = pneg %p524
    // Predicated region
    $region9: #{decoder_forward.4} parent=5 // pred_check
      _
    $region10: #{decoder_forward.4} parent=5 // pred_check_branch
      %527 = sbr.rel (%p524) target = $region12
    $region11: #{decoder_forward.4} parent=5 // pred_region
      %s528 = ssub.s32 %s27, 1
      // Predicated region
      $region13: #{decoder_forward.4} parent=11 // pred_check
        %p529 = pneg %p152
      $region14: #{decoder_forward.4} parent=11 // pred_check_branch
        %531 = sbr.rel (%p529) target = $region16
      $region15: #{decoder_forward.4} parent=11 // pred_region
        _
      $region16: #{decoder_forward.4} parent=11 // pred_fallthru
        _
      // Predicated region
      $region17: #{decoder_forward.4} parent=11 // pred_check
        %p532 = pneg %p173
      $region18: #{decoder_forward.4} parent=11 // pred_check_branch
        %534 = sbr.rel (%p532) target = $region20
      $region19: #{decoder_forward.4} parent=11 // pred_region
        _
      $region20: #{decoder_forward.4} parent=11 // pred_fallthru
        _
      // Predicated region
      $region21: #{decoder_forward.4} parent=11 // pred_check
        %p535 = pneg %p194
      $region22: #{decoder_forward.4} parent=11 // pred_check_branch
        %537 = sbr.rel (%p535) target = $region24
      $region23: #{decoder_forward.4} parent=11 // pred_region
        _
      $region24: #{decoder_forward.4} parent=11 // pred_fallthru
        _
      // Predicated region
      $region25: #{decoder_forward.4} parent=11 // pred_check
        %p538 = pneg %p215
      $region26: #{decoder_forward.4} parent=11 // pred_check_branch
        %540 = sbr.rel (%p538) target = $region28
      $region27: #{decoder_forward.4} parent=11 // pred_region
        _
      $region28: #{decoder_forward.4} parent=11 // pred_fallthru
        _
      // Predicated region
      $region29: #{decoder_forward.4} parent=11 // pred_check
        %p541 = pneg %p236
      $region30: #{decoder_forward.4} parent=11 // pred_check_branch
        %543 = sbr.rel (%p541) target = $region32
      $region31: #{decoder_forward.4} parent=11 // pred_region
        _
      $region32: #{decoder_forward.4} parent=11 // pred_fallthru
        _
      // Predicated region
      $region33: #{decoder_forward.4} parent=11 // pred_check
        %p544 = pneg %p257
      $region34: #{decoder_forward.4} parent=11 // pred_check_branch
        %546 = sbr.rel (%p544) target = $region36
      $region35: #{decoder_forward.4} parent=11 // pred_region
        _
      $region36: #{decoder_forward.4} parent=11 // pred_fallthru
        _
      // Predicated region
      $region37: #{decoder_forward.4} parent=11 // pred_check
        %p547 = pneg %p278
      $region38: #{decoder_forward.4} parent=11 // pred_check_branch
        %549 = sbr.rel (%p547) target = $region40
      $region39: #{decoder_forward.4} parent=11 // pred_region
        _
      $region40: #{decoder_forward.4} parent=11 // pred_fallthru
        _
      // Predicated region
      $region41: #{decoder_forward.4} parent=11 // pred_check
        %p550 = pneg %p299
      $region42: #{decoder_forward.4} parent=11 // pred_check_branch
        %552 = sbr.rel (%p550) target = $region44
      $region43: #{decoder_forward.4} parent=11 // pred_region
        _
      $region44: #{decoder_forward.4} parent=11 // pred_fallthru
        _
      // Predicated region
      $region45: #{decoder_forward.4} parent=11 // pred_check
        %p553 = pneg %p320
      $region46: #{decoder_forward.4} parent=11 // pred_check_branch
        %555 = sbr.rel (%p553) target = $region48
      $region47: #{decoder_forward.4} parent=11 // pred_region
        _
      $region48: #{decoder_forward.4} parent=11 // pred_fallthru
        _
      // Predicated region
      $region49: #{decoder_forward.4} parent=11 // pred_check
        %p556 = pneg %p341
      $region50: #{decoder_forward.4} parent=11 // pred_check_branch
        %558 = sbr.rel (%p556) target = $region52
      $region51: #{decoder_forward.4} parent=11 // pred_region
        _
      $region52: #{decoder_forward.4} parent=11 // pred_fallthru
        _
      // Predicated region
      $region53: #{decoder_forward.4} parent=11 // pred_check
        %p559 = pneg %p362
      $region54: #{decoder_forward.4} parent=11 // pred_check_branch
        %561 = sbr.rel (%p559) target = $region56
      $region55: #{decoder_forward.4} parent=11 // pred_region
        _
      $region56: #{decoder_forward.4} parent=11 // pred_fallthru
        _
      // Predicated region
      $region57: #{decoder_forward.4} parent=11 // pred_check
        %p562 = pneg %p383
      $region58: #{decoder_forward.4} parent=11 // pred_check_branch
        %564 = sbr.rel (%p562) target = $region60
      $region59: #{decoder_forward.4} parent=11 // pred_region
        _
      $region60: #{decoder_forward.4} parent=11 // pred_fallthru
        _
      // Predicated region
      $region61: #{decoder_forward.4} parent=11 // pred_check
        %p565 = pneg %p404
      $region62: #{decoder_forward.4} parent=11 // pred_check_branch
        %567 = sbr.rel (%p565) target = $region64
      $region63: #{decoder_forward.4} parent=11 // pred_region
        _
      $region64: #{decoder_forward.4} parent=11 // pred_fallthru
        _
      // Predicated region
      $region65: #{decoder_forward.4} parent=11 // pred_check
        %p568 = pneg %p425
      $region66: #{decoder_forward.4} parent=11 // pred_check_branch
        %570 = sbr.rel (%p568) target = $region68
      $region67: #{decoder_forward.4} parent=11 // pred_region
        _
      $region68: #{decoder_forward.4} parent=11 // pred_fallthru
        _
      // Predicated region
      $region69: #{decoder_forward.4} parent=11 // pred_check
        %p571 = pneg %p446
      $region70: #{decoder_forward.4} parent=11 // pred_check_branch
        %573 = sbr.rel (%p571) target = $region72
      $region71: #{decoder_forward.4} parent=11 // pred_region
        _
      $region72: #{decoder_forward.4} parent=11 // pred_fallthru
        _
      // Predicated region
      $region73: #{decoder_forward.4} parent=11 // pred_check
        %p574 = pneg %p467
      $region74: #{decoder_forward.4} parent=11 // pred_check_branch
        %576 = sbr.rel (%p574) target = $region76
      $region75: #{decoder_forward.4} parent=11 // pred_region
        _
      $region76: #{decoder_forward.4} parent=11 // pred_fallthru
        _
      // Predicated region
      $region77: #{decoder_forward.4} parent=11 // pred_check
        %p577 = pneg %p488
      $region78: #{decoder_forward.4} parent=11 // pred_check_branch
        %579 = sbr.rel (%p577) target = $region80
      $region79: #{decoder_forward.4} parent=11 // pred_region
        _
      $region80: #{decoder_forward.4} parent=11 // pred_fallthru
        _
    $region12: #{decoder_forward.4} parent=5 // pred_fallthru
      _
    %p580 = scmp.lt.s32.totalorder %s27, 2
    // Predicated region
    $region81: #{decoder_forward.4} parent=5 // pred_check
      %p581 = pneg %p580
    $region82: #{decoder_forward.4} parent=5 // pred_check_branch
      %583 = sbr.rel (%p581) target = $region84
    $region83: #{decoder_forward.4} parent=5 // pred_region
      // Predicated region
      $region85: #{decoder_forward.4} parent=83 // pred_check
        %p584 = pneg %p47
      $region86: #{decoder_forward.4} parent=83 // pred_check_branch
        %586 = sbr.rel (%p584) target = $region88
      $region87: #{decoder_forward.4} parent=83 // pred_region
        %p587 = scmp.lt.s32.totalorder %s27, 1
        %s588 = scalar_select %p587, %s27, 1
        %s589 = smul.addr %s588, 8
        %s590 = scalar_lea.vmem %s0, %s589
      $region88: #{decoder_forward.4} parent=83 // pred_fallthru
        _
      // Predicated region
      $region89: #{decoder_forward.4} parent=83 // pred_check
        %p591 = pneg %p73
      $region90: #{decoder_forward.4} parent=83 // pred_check_branch
        %593 = sbr.rel (%p591) target = $region92
      $region91: #{decoder_forward.4} parent=83 // pred_region
        %p594 = scmp.lt.s32.totalorder %s27, 1
        %s595 = scalar_select %p594, %s27, 1
        %s596 = smul.addr %s595, 8
        %s597 = scalar_lea.vmem %s1, %s596
      $region92: #{decoder_forward.4} parent=83 // pred_fallthru
        _
      // Predicated region
      $region93: #{decoder_forward.4} parent=83 // pred_check
        %p598 = pneg %p99
      $region94: #{decoder_forward.4} parent=83 // pred_check_branch
        %600 = sbr.rel (%p598) target = $region96
      $region95: #{decoder_forward.4} parent=83 // pred_region
        %p601 = scmp.lt.s32.totalorder %s27, 1
        %s602 = scalar_select %p601, %s27, 1
        %s603 = smul.addr %s602, 8
        %s604 = scalar_lea.vmem %s2, %s603
      $region96: #{decoder_forward.4} parent=83 // pred_fallthru
        _
      // Predicated region
      $region97: #{decoder_forward.4} parent=83 // pred_check
        %p605 = pneg %p125
      $region98: #{decoder_forward.4} parent=83 // pred_check_branch
        %607 = sbr.rel (%p605) target = $region100
      $region99: #{decoder_forward.4} parent=83 // pred_region
        %p608 = scmp.lt.s32.totalorder %s27, 1
        %s609 = scalar_select %p608, %s27, 1
        %s610 = smul.addr %s609, 8
        %s611 = scalar_lea.vmem %s3, %s610
      $region100: #{decoder_forward.4} parent=83 // pred_fallthru
        _
    $region84: #{decoder_forward.4} parent=5 // pred_fallthru
      _
    %p612 = scmp.le.s32.totalorder 1, %s27
    %p613 = scmp.lt.s32.totalorder %s27, 3
    %p614 = pnand %p612, %p613
    %p615 = pneg %p614
    // Predicated region
    $region101: #{decoder_forward.4} parent=5 // pred_check
      _
    $region102: #{decoder_forward.4} parent=5 // pred_check_branch
      %617 = sbr.rel (%p614) target = $region104
    $region103: #{decoder_forward.4} parent=5 // pred_region
      %s618 = ssub.s32 %s27, 1
      %p619 = scmp.lt.s32.totalorder %s32, 1
      %s620 = scalar_select %p619, %s32, 1
      %s621 = smul.addr %s620, 8
      %s622 = scalar_lea.vmem %s0, %s621
      %p623 = pneg %p53
      %p624 = pneg %p50
      %p625 = scmp.lt.s32.totalorder %s32, 1
      %s626 = scalar_select %p625, %s32, 1
      %s627 = smul.addr %s626, 8
      %s628 = scalar_lea.vmem %s1, %s627
      %p629 = pneg %p79
      %p630 = pneg %p76
      %p631 = scmp.lt.s32.totalorder %s32, 1
      %s632 = scalar_select %p631, %s32, 1
      %s633 = smul.addr %s632, 8
      %s634 = scalar_lea.vmem %s2, %s633
      %p635 = pneg %p105
      %p636 = pneg %p102
      %p637 = scmp.lt.s32.totalorder %s32, 1
      %s638 = scalar_select %p637, %s32, 1
      %s639 = smul.addr %s638, 8
      %s640 = scalar_lea.vmem %s3, %s639
      %p641 = pneg %p131
      %p642 = pneg %p128
      %p643 = pneg %p152
      %p644 = pneg %p149
      %p645 = pneg %p173
      %p646 = pneg %p170
      %p647 = pneg %p194
      %p648 = pneg %p191
      %p649 = pneg %p215
      %p650 = pneg %p212
      %p651 = pneg %p236
      %p652 = pneg %p233
      %p653 = pneg %p257
      %p654 = pneg %p254
      %p655 = pneg %p278
      %p656 = pneg %p275
      %p657 = pneg %p299
      %p658 = pneg %p296
      %p659 = pneg %p320
      %p660 = pneg %p317
      %p661 = pneg %p341
      %p662 = pneg %p338
      %p663 = pneg %p362
      %p664 = pneg %p359
      %p665 = pneg %p383
      %p666 = pneg %p380
      %p667 = pneg %p404
      %p668 = pneg %p401
      %p669 = pneg %p425
      %p670 = pneg %p422
      %p671 = pneg %p446
      %p672 = pneg %p443
      %p673 = pneg %p467
      %p674 = pneg %p464
      %p675 = pneg %p488
      %p676 = pneg %p485
      %p677 = pneg %p514
      %p678 = pneg %p511
      %p679 = scmp.lt.s32.totalorder %s32, 1
      %s680 = scalar_select %p679, %s32, 1
      %s681 = smul.addr %s680, 8
      %s682 = scalar_lea.vmem %s21, %s681
      %p683 = scmp.lt.s32.totalorder %s32, 1
      %s684 = scalar_select %p683, %s32, 1
      %s685 = smul.addr %s684, 8
      %s686 = scalar_lea.vmem %s0, %s685
      %p687 = scmp.lt.s32.totalorder %s32, 1
      %s688 = scalar_select %p687, %s32, 1
      %s689 = smul.addr %s688, 8
      %s690 = scalar_lea.vmem %s1, %s689
      %p691 = scmp.lt.s32.totalorder %s32, 1
      %s692 = scalar_select %p691, %s32, 1
      %s693 = smul.addr %s692, 8
      %s694 = scalar_lea.vmem %s2, %s693
      %p695 = scmp.lt.s32.totalorder %s32, 1
      %s696 = scalar_select %p695, %s32, 1
      %s697 = smul.addr %s696, 8
      %s698 = scalar_lea.vmem %s3, %s697
      %p699 = scmp.lt.s32.totalorder %s32, 1
      %s700 = scalar_select %p699, %s32, 1
      %s701 = smul.addr %s700, 8
      %s702 = scalar_lea.vmem %s21, %s701
      %v703 = vld [vmem:[%s686] sm:$0xff]
      %vm704 = vcmask 261120
      %v705 = vsel %vm704, %v703, 0.0
      %706 = vadd.xlane.f32.xlu0 %v705
      %v707 = vpop.xlane.xlu0 %706
      %v708 = vrcp.pop 32.0
      %v709 = vmul.f32 %v707, %v708
      %v710 = vsub.f32 %v703, %v709
      %v711 = vmul.f32 %v710, %v710
      %v712 = vsel %vm704, %v711, 0.0
      %713 = vadd.xlane.f32.xlu0 %v712
      %v714 = vpop.xlane.xlu0 %713
      %v715 = vmul.f32 %v714, %v708
      %v716 = vadd.f32 %v715, 1e-05
      %v717 = vrsqrt.pop %v716
      %v718 = vmul.f32 %v710, %v717
      %v719 = vld [vmem:[%s4] sm:$0x1]
      %v720 = vlaneseq
      %v721 = vshrl.u32 %v720, 7
      %v722 = vsub.s32 0, %v721
      %v723 = vrot.slane %v719, %v722
      %v724 = vmul.f32 %v718, %v723
      %v725 = vld [vmem:[%s4 + $0x1] sm:$0x1]
      %v726 = vlaneseq
      %v727 = vshrl.u32 %v726, 7
      %v728 = vsub.s32 0, %v727
      %v729 = vrot.slane %v725, %v728
      %v730 = vadd.f32 %v724, %v729
      %v731 = vld [vmem:[%s7] sm:$0xff]
      %v732 = vld [vmem:[%s7 + $0x8] sm:$0xff]
      %v733 = vld [vmem:[%s7 + $0x10] sm:$0xff]
      %v734 = vld [vmem:[%s7 + $0x18] sm:$0xff]
      %v735 = vld [vmem:[%s8] sm:$0x1]
      %v737 = vlaneseq
      %v738 = vshrl.u32 %v737, 7
      %v739 = vsub.s32 0, %v738
      %v740 = vrot.slane %v735, %v739
      %v743 = vsel %vm704, %v730, 0
      %745 = vmatprep.subr.mxu0 0.0
      %746 = vmatpush1.msra.mxu0 0.0
      %747 = vmatprep.subr.mxu0 0.0
      %748 = vmatpush1.msra.mxu0 0.0
      %749 = vmatprep.subr.mxu0 0.0
      %750 = vmatpush1.msra.mxu0 0.0
      %751 = vmatprep.subr.mxu0 0.0
      %752 = vmatpush1.msra.mxu0 0.0
      %753 = vmatprep.subr.mxu0 0.0
      %754 = vmatpush1.msra.mxu0 0.0
      %755 = vmatprep.subr.mxu0 0.0
      %756 = vmatpush1.msra.mxu0 0.0
      %757 = vmatprep.subr.mxu0 0.0
      %758 = vmatpush1.msra.mxu0 0.0
      %759 = vmatprep.subr.mxu0 0.0
      %760 = vmatpush1.msra.mxu0 0.0
      %761 = vmatprep.subr.mxu0 0.0
      %762 = vmatpush1.msra.mxu0 0.0
      %763 = vmatprep.subr.mxu0 0.0
      %764 = vmatpush1.msra.mxu0 0.0
      %765 = vmatprep.subr.mxu0 0.0
      %766 = vmatpush1.msra.mxu0 0.0
      %767 = vmatprep.subr.mxu0 0.0
      %768 = vmatpush1.msra.mxu0 0.0
      %769 = vmatprep.subr.mxu0 0.0
      %770 = vmatpush1.msra.mxu0 %v734
      %771 = vmatprep.subr.mxu0 0.0
      %772 = vmatpush1.msra.mxu0 %v733
      %773 = vmatprep.subr.mxu0 0.0
      %774 = vmatpush1.msra.mxu0 %v732
      %775 = vmatprep.subr.mxu0 0.0
      %776 = vmatpush1.msra.mxu0 %v731
      %777 = vmatprep.subr.mxu0 0.0
      %778 = vmatpush2.msra.mxu0 0.0
      %779 = vmatprep.subr.mxu0 0.0
      %780 = vmatpush2.msra.mxu0 0.0
      %781 = vmatprep.subr.mxu0 0.0
      %782 = vmatpush2.msra.mxu0 0.0
      %783 = vmatprep.subr.mxu0 0.0
      %784 = vmatpush2.msra.mxu0 0.0
      %785 = vmatprep.subr.mxu0 0.0
      %786 = vmatpush2.msra.mxu0 0.0
      %787 = vmatprep.subr.mxu0 0.0
      %788 = vmatpush2.msra.mxu0 0.0
      %789 = vmatprep.subr.mxu0 0.0
      %790 = vmatpush2.msra.mxu0 0.0
      %791 = vmatprep.subr.mxu0 0.0
      %792 = vmatpush2.msra.mxu0 0.0
      %793 = vmatprep.subr.mxu0 0.0
      %794 = vmatpush2.msra.mxu0 0.0
      %795 = vmatprep.subr.mxu0 0.0
      %796 = vmatpush2.msra.mxu0 0.0
      %797 = vmatprep.subr.mxu0 0.0
      %798 = vmatpush2.msra.mxu0 0.0
      %799 = vmatprep.subr.mxu0 0.0
      %800 = vmatpush2.msra.mxu0 0.0
      %801 = vmatprep.subr.mxu0 0.0
      %802 = vmatpush2.msra.mxu0 0.0
      %803 = vmatprep.subr.mxu0 0.0
      %804 = vmatpush2.msra.mxu0 0.0
      %805 = vmatprep.subr.mxu0 0.0
      %806 = vmatpush2.msra.mxu0 0.0
      %807 = vmatprep.subr.mxu0 0.0
      %808 = vmatpush2.msra.mxu0 0.0
      %809 = vmatprep.mubr.f32.mxu0 0.0
      %810 = vmatmul.mubr.f32.gmra.mxu0 %v743
      %v811 = vpop.f32.mrf.mxu0
      %v812 = vadd.f32 %v740, %v811
      %v813 = vpop.f32.mrf.mxu0
      %814 = vdwg.mxu0
      %v815 = vmul.f32 %v812, 0.25
      %v816 = vld [vmem:[%s694] sm:$0xff]
      %v817 = vld [vmem:[%s10] sm:$0x1]
      %819 = vrot.lane.b32.xlu0 %v812, 96
      %v820 = vpop.permute.xlu0 %819
      %vm821 = vcmask 130048
      %v823 = vsel %vm821, %v815, 0
      %v825 = vsel %vm821, %v820, 0
      %827 = vmatprep.subr.mxu0 0.0
      %828 = vmatpush1.xpose.msra.mxu0 0.0
      %829 = vmatprep.subr.mxu0 0.0
      %830 = vmatpush1.xpose.msra.mxu0 0.0
      %831 = vmatprep.subr.mxu0 0.0
      %832 = vmatpush1.xpose.msra.mxu0 0.0
      %833 = vmatprep.subr.mxu0 0.0
      %834 = vmatpush1.xpose.msra.mxu0 0.0
      %835 = vmatprep.subr.mxu0 0.0
      %836 = vmatpush1.xpose.msra.mxu0 0.0
      %837 = vmatprep.subr.mxu0 0.0
      %838 = vmatpush1.xpose.msra.mxu0 0.0
      %839 = vmatprep.subr.mxu0 0.0
      %840 = vmatpush1.xpose.msra.mxu0 0.0
      %841 = vmatprep.subr.mxu0 0.0
      %842 = vmatpush1.xpose.msra.mxu0 0.0
      %843 = vmatprep.subr.mxu0 0.0
      %844 = vmatpush1.xpose.msra.mxu0 0.0
      %845 = vmatprep.subr.mxu0 0.0
      %846 = vmatpush1.xpose.msra.mxu0 0.0
      %847 = vmatprep.subr.mxu0 0.0
      %848 = vmatpush1.xpose.msra.mxu0 0.0
      %849 = vmatprep.subr.mxu0 0.0
      %850 = vmatpush1.xpose.msra.mxu0 0.0
      %851 = vmatprep.subr.mxu0 0.0
      %852 = vmatpush1.xpose.msra.mxu0 0.0
      %853 = vmatprep.subr.mxu0 0.0
      %854 = vmatpush1.xpose.msra.mxu0 0.0
      %855 = vmatprep.subr.mxu0 0.0
      %856 = vmatpush1.xpose.msra.mxu0 0.0
      %857 = vmatprep.subr.mxu0 0.0
      %858 = vmatpush1.xpose.msra.mxu0 %v825
      %859 = vmatprep.subr.mxu0 0.0
      %860 = vmatpush2.xpose.msra.mxu0 0.0
      %861 = vmatprep.subr.mxu0 0.0
      %862 = vmatpush2.xpose.msra.mxu0 0.0
      %863 = vmatprep.subr.mxu0 0.0
      %864 = vmatpush2.xpose.msra.mxu0 0.0
      %865 = vmatprep.subr.mxu0 0.0
      %866 = vmatpush2.xpose.msra.mxu0 0.0
      %867 = vmatprep.subr.mxu0 0.0
      %868 = vmatpush2.xpose.msra.mxu0 0.0
      %869 = vmatprep.subr.mxu0 0.0
      %870 = vmatpush2.xpose.msra.mxu0 0.0
      %871 = vmatprep.subr.mxu0 0.0
      %872 = vmatpush2.xpose.msra.mxu0 0.0
      %873 = vmatprep.subr.mxu0 0.0
      %874 = vmatpush2.xpose.msra.mxu0 0.0
      %875 = vmatprep.subr.mxu0 0.0
      %876 = vmatpush2.xpose.msra.mxu0 0.0
      %877 = vmatprep.subr.mxu0 0.0
      %878 = vmatpush2.xpose.msra.mxu0 0.0
      %879 = vmatprep.subr.mxu0 0.0
      %880 = vmatpush2.xpose.msra.mxu0 0.0
      %881 = vmatprep.subr.mxu0 0.0
      %882 = vmatpush2.xpose.msra.mxu0 0.0
      %883 = vmatprep.subr.mxu0 0.0
      %884 = vmatpush2.xpose.msra.mxu0 0.0
      %885 = vmatprep.subr.mxu0 0.0
      %886 = vmatpush2.xpose.msra.mxu0 0.0
      %887 = vmatprep.subr.mxu0 0.0
      %888 = vmatpush2.xpose.msra.mxu0 0.0
      %889 = vmatprep.subr.mxu0 0.0
      %890 = vmatpush2.xpose.msra.mxu0 0.0
      %891 = vmatprep.mubr.f32.mxu0 0.0
      %892 = vmatmul.mubr.f32.gmra.mxu0 %v823
      %v893 = vpop.f32.mrf.mxu0
      %v894 = vadd.f32 %v816, %v893
      %v895 = vpop.f32.mrf.mxu0
      %896 = vdwg.mxu0
      %vm897 = vcmask 64512
      %v898 = vsel %vm897, %v894, -inf
      %899 = vmax.xlane.f32.xlu0 %v898
      %v900 = vpop.xlane.xlu0 %899
      %v901 = vsub.f32 %v894, %v900
      %v902 = vmul.f32 %v901, 1.442695
      %v903 = vpow.pop %v902
      %v904 = vsel %vm897, %v903, 0.0
      %905 = vadd.xlane.f32.xlu0 %v904
      %v906 = vpop.xlane.xlu0 %905
      %v907 = vrcp.pop %v906
      %v908 = vmul.f32 %v903, %v907
      %909 = vrot.lane.b32.xlu0 %v812, 64
      %v910 = vpop.permute.xlu0 %909
      %v913 = vsel %vm897, %v908, 0
      %915 = vmatprep.subr.mxu0 0.0
      %916 = vmatpush1.msra.mxu0 0.0
      %917 = vmatprep.subr.mxu0 0.0
      %918 = vmatpush1.msra.mxu0 0.0
      %919 = vmatprep.subr.mxu0 0.0
      %920 = vmatpush1.msra.mxu0 0.0
      %921 = vmatprep.subr.mxu0 0.0
      %922 = vmatpush1.msra.mxu0 0.0
      %923 = vmatprep.subr.mxu0 0.0
      %924 = vmatpush1.msra.mxu0 0.0
      %925 = vmatprep.subr.mxu0 0.0
      %926 = vmatpush1.msra.mxu0 0.0
      %927 = vmatprep.subr.mxu0 0.0
      %928 = vmatpush1.msra.mxu0 0.0
      %929 = vmatprep.subr.mxu0 0.0
      %930 = vmatpush1.msra.mxu0 0.0
      %931 = vmatprep.subr.mxu0 0.0
      %932 = vmatpush1.msra.mxu0 0.0
      %933 = vmatprep.subr.mxu0 0.0
      %934 = vmatpush1.msra.mxu0 0.0
      %935 = vmatprep.subr.mxu0 0.0
      %936 = vmatpush1.msra.mxu0 0.0
      %937 = vmatprep.subr.mxu0 0.0
      %938 = vmatpush1.msra.mxu0 0.0
      %939 = vmatprep.subr.mxu0 0.0
      %940 = vmatpush1.msra.mxu0 0.0
      %941 = vmatprep.subr.mxu0 0.0
      %942 = vmatpush1.msra.mxu0 0.0
      %943 = vmatprep.subr.mxu0 0.0
      %944 = vmatpush1.msra.mxu0 0.0
      %945 = vmatprep.subr.mxu0 0.0
      %946 = vmatpush1.msra.mxu0 %v910
      %947 = vmatprep.subr.mxu0 0.0
      %948 = vmatpush2.msra.mxu0 0.0
      %949 = vmatprep.subr.mxu0 0.0
      %950 = vmatpush2.msra.mxu0 0.0
      %951 = vmatprep.subr.mxu0 0.0
      %952 = vmatpush2.msra.mxu0 0.0
      %953 = vmatprep.subr.mxu0 0.0
      %954 = vmatpush2.msra.mxu0 0.0
      %955 = vmatprep.subr.mxu0 0.0
      %956 = vmatpush2.msra.mxu0 0.0
      %957 = vmatprep.subr.mxu0 0.0
      %958 = vmatpush2.msra.mxu0 0.0
      %959 = vmatprep.subr.mxu0 0.0
      %960 = vmatpush2.msra.mxu0 0.0
      %961 = vmatprep.subr.mxu0 0.0
      %962 = vmatpush2.msra.mxu0 0.0
      %963 = vmatprep.subr.mxu0 0.0
      %964 = vmatpush2.msra.mxu0 0.0
      %965 = vmatprep.subr.mxu0 0.0
      %966 = vmatpush2.msra.mxu0 0.0
      %967 = vmatprep.subr.mxu0 0.0
      %968 = vmatpush2.msra.mxu0 0.0
      %969 = vmatprep.subr.mxu0 0.0
      %970 = vmatpush2.msra.mxu0 0.0
      %971 = vmatprep.subr.mxu0 0.0
      %972 = vmatpush2.msra.mxu0 0.0
      %973 = vmatprep.subr.mxu0 0.0
      %974 = vmatpush2.msra.mxu0 0.0
      %975 = vmatprep.subr.mxu0 0.0
      %976 = vmatpush2.msra.mxu0 0.0
      %977 = vmatprep.subr.mxu0 0.0
      %978 = vmatpush2.msra.mxu0 0.0
      %979 = vmatprep.mubr.f32.mxu0 0.0
      %980 = vmatmul.mubr.f32.gmra.mxu0 %v913
      %v981 = vpop.f32.mrf.mxu0
      %v982 = vadd.f32 0.0, %v981
      %v983 = vpop.f32.mrf.mxu0
      %984 = vdwg.mxu0
      %v985 = vld [vmem:[%s9] sm:$0xff]
      %v986 = vld [vmem:[%s9 + $0x8] sm:$0xff]
      %v988 = vsel %vm821, %v982, 0
      %990 = vmatprep.subr.mxu0 0.0
      %991 = vmatpush1.msra.mxu0 0.0
      %992 = vmatprep.subr.mxu0 0.0
      %993 = vmatpush1.msra.mxu0 0.0
      %994 = vmatprep.subr.mxu0 0.0
      %995 = vmatpush1.msra.mxu0 0.0
      %996 = vmatprep.subr.mxu0 0.0
      %997 = vmatpush1.msra.mxu0 0.0
      %998 = vmatprep.subr.mxu0 0.0
      %999 = vmatpush1.msra.mxu0 0.0
      %1000 = vmatprep.subr.mxu0 0.0
      %1001 = vmatpush1.msra.mxu0 0.0
      %1002 = vmatprep.subr.mxu0 0.0
      %1003 = vmatpush1.msra.mxu0 0.0
      %1004 = vmatprep.subr.mxu0 0.0
      %1005 = vmatpush1.msra.mxu0 0.0
      %1006 = vmatprep.subr.mxu0 0.0
      %1007 = vmatpush1.msra.mxu0 0.0
      %1008 = vmatprep.subr.mxu0 0.0
      %1009 = vmatpush1.msra.mxu0 0.0
      %1010 = vmatprep.subr.mxu0 0.0
      %1011 = vmatpush1.msra.mxu0 0.0
      %1012 = vmatprep.subr.mxu0 0.0
      %1013 = vmatpush1.msra.mxu0 0.0
      %1014 = vmatprep.subr.mxu0 0.0
      %1015 = vmatpush1.msra.mxu0 0.0
      %1016 = vmatprep.subr.mxu0 0.0
      %1017 = vmatpush1.msra.mxu0 0.0
      %1018 = vmatprep.subr.mxu0 0.0
      %1019 = vmatpush1.msra.mxu0 %v986
      %1020 = vmatprep.subr.mxu0 0.0
      %1021 = vmatpush1.msra.mxu0 %v985
      %1022 = vmatprep.subr.mxu0 0.0
      %1023 = vmatpush2.msra.mxu0 0.0
      %1024 = vmatprep.subr.mxu0 0.0
      %1025 = vmatpush2.msra.mxu0 0.0
      %1026 = vmatprep.subr.mxu0 0.0
      %1027 = vmatpush2.msra.mxu0 0.0
      %1028 = vmatprep.subr.mxu0 0.0
      %1029 = vmatpush2.msra.mxu0 0.0
      %1030 = vmatprep.subr.mxu0 0.0
      %1031 = vmatpush2.msra.mxu0 0.0
      %1032 = vmatprep.subr.mxu0 0.0
      %1033 = vmatpush2.msra.mxu0 0.0
      %1034 = vmatprep.subr.mxu0 0.0
      %1035 = vmatpush2.msra.mxu0 0.0
      %1036 = vmatprep.subr.mxu0 0.0
      %1037 = vmatpush2.msra.mxu0 0.0
      %1038 = vmatprep.subr.mxu0 0.0
      %1039 = vmatpush2.msra.mxu0 0.0
      %1040 = vmatprep.subr.mxu0 0.0
      %1041 = vmatpush2.msra.mxu0 0.0
      %1042 = vmatprep.subr.mxu0 0.0
      %1043 = vmatpush2.msra.mxu0 0.0
      %1044 = vmatprep.subr.mxu0 0.0
      %1045 = vmatpush2.msra.mxu0 0.0
      %1046 = vmatprep.subr.mxu0 0.0
      %1047 = vmatpush2.msra.mxu0 0.0
      %1048 = vmatprep.subr.mxu0 0.0
      %1049 = vmatpush2.msra.mxu0 0.0
      %1050 = vmatprep.subr.mxu0 0.0
      %1051 = vmatpush2.msra.mxu0 0.0
      %1052 = vmatprep.subr.mxu0 0.0
      %1053 = vmatpush2.msra.mxu0 0.0
      %1054 = vmatprep.mubr.f32.mxu0 0.0
      %1055 = vmatmul.mubr.f32.gmra.mxu0 %v988
      %v1056 = vpop.f32.mrf.mxu0
      %v1057 = vadd.f32 0.0, %v1056
      %v1058 = vpop.f32.mrf.mxu0
      %1059 = vdwg.mxu0
      %v1061 = vlaneseq
      %v1062 = vshrl.u32 %v1061, 7
      %v1063 = vsub.s32 0, %v1062
      %v1064 = vrot.slane %v817, %v1063
      %v1066 = vadd.f32 %v1064, %v1057
      %1067 = vrot.lane.b32.xlu0 %v815, 112
      %v1068 = vpop.permute.xlu0 %1067
      %1069 = vrot.lane.b32.xlu0 %v812, 80
      %v1070 = vpop.permute.xlu0 %1069
      %v1071 = vsel %vm821, %v1068, 0
      %v1073 = vsel %vm821, %v1070, 0
      %1075 = vmatprep.subr.mxu0 0.0
      %1076 = vmatpush1.xpose.msra.mxu0 0.0
      %1077 = vmatprep.subr.mxu0 0.0
      %1078 = vmatpush1.xpose.msra.mxu0 0.0
      %1079 = vmatprep.subr.mxu0 0.0
      %1080 = vmatpush1.xpose.msra.mxu0 0.0
      %1081 = vmatprep.subr.mxu0 0.0
      %1082 = vmatpush1.xpose.msra.mxu0 0.0
      %1083 = vmatprep.subr.mxu0 0.0
      %1084 = vmatpush1.xpose.msra.mxu0 0.0
      %1085 = vmatprep.subr.mxu0 0.0
      %1086 = vmatpush1.xpose.msra.mxu0 0.0
      %1087 = vmatprep.subr.mxu0 0.0
      %1088 = vmatpush1.xpose.msra.mxu0 0.0
      %1089 = vmatprep.subr.mxu0 0.0
      %1090 = vmatpush1.xpose.msra.mxu0 0.0
      %1091 = vmatprep.subr.mxu0 0.0
      %1092 = vmatpush1.xpose.msra.mxu0 0.0
      %1093 = vmatprep.subr.mxu0 0.0
      %1094 = vmatpush1.xpose.msra.mxu0 0.0
      %1095 = vmatprep.subr.mxu0 0.0
      %1096 = vmatpush1.xpose.msra.mxu0 0.0
      %1097 = vmatprep.subr.mxu0 0.0
      %1098 = vmatpush1.xpose.msra.mxu0 0.0
      %1099 = vmatprep.subr.mxu0 0.0
      %1100 = vmatpush1.xpose.msra.mxu0 0.0
      %1101 = vmatprep.subr.mxu0 0.0
      %1102 = vmatpush1.xpose.msra.mxu0 0.0
      %1103 = vmatprep.subr.mxu0 0.0
      %1104 = vmatpush1.xpose.msra.mxu0 0.0
      %1105 = vmatprep.subr.mxu0 0.0
      %1106 = vmatpush1.xpose.msra.mxu0 %v1073
      %1107 = vmatprep.subr.mxu0 0.0
      %1108 = vmatpush2.xpose.msra.mxu0 0.0
      %1109 = vmatprep.subr.mxu0 0.0
      %1110 = vmatpush2.xpose.msra.mxu0 0.0
      %1111 = vmatprep.subr.mxu0 0.0
      %1112 = vmatpush2.xpose.msra.mxu0 0.0
      %1113 = vmatprep.subr.mxu0 0.0
      %1114 = vmatpush2.xpose.msra.mxu0 0.0
      %1115 = vmatprep.subr.mxu0 0.0
      %1116 = vmatpush2.xpose.msra.mxu0 0.0
      %1117 = vmatprep.subr.mxu0 0.0
      %1118 = vmatpush2.xpose.msra.mxu0 0.0
      %1119 = vmatprep.subr.mxu0 0.0
      %1120 = vmatpush2.xpose.msra.mxu0 0.0
      %1121 = vmatprep.subr.mxu0 0.0
      %1122 = vmatpush2.xpose.msra.mxu0 0.0
      %1123 = vmatprep.subr.mxu0 0.0
      %1124 = vmatpush2.xpose.msra.mxu0 0.0
      %1125 = vmatprep.subr.mxu0 0.0
      %1126 = vmatpush2.xpose.msra.mxu0 0.0
      %1127 = vmatprep.subr.mxu0 0.0
      %1128 = vmatpush2.xpose.msra.mxu0 0.0
      %1129 = vmatprep.subr.mxu0 0.0
      %1130 = vmatpush2.xpose.msra.mxu0 0.0
      %1131 = vmatprep.subr.mxu0 0.0
      %1132 = vmatpush2.xpose.msra.mxu0 0.0
      %1133 = vmatprep.subr.mxu0 0.0
      %1134 = vmatpush2.xpose.msra.mxu0 0.0
      %1135 = vmatprep.subr.mxu0 0.0
      %1136 = vmatpush2.xpose.msra.mxu0 0.0
      %1137 = vmatprep.subr.mxu0 0.0
      %1138 = vmatpush2.xpose.msra.mxu0 0.0
      %1139 = vmatprep.mubr.f32.mxu0 0.0
      %1140 = vmatmul.mubr.f32.gmra.mxu0 %v1071
      %v1141 = vpop.f32.mrf.mxu0
      %v1142 = vadd.f32 %v816, %v1141
      %v1143 = vpop.f32.mrf.mxu0
      %1144 = vdwg.mxu0
      %v1145 = vsel %vm897, %v1142, -inf
      %1146 = vmax.xlane.f32.xlu0 %v1145
      %v1147 = vpop.xlane.xlu0 %1146
      %v1148 = vsub.f32 %v1142, %v1147
      %v1149 = vmul.f32 %v1148, 1.442695
      %v1150 = vpow.pop %v1149
      %v1151 = vsel %vm897, %v1150, 0.0
      %1152 = vadd.xlane.f32.xlu0 %v1151
      %v1153 = vpop.xlane.xlu0 %1152
      %v1154 = vrcp.pop %v1153
      %v1155 = vmul.f32 %v1150, %v1154
      %1156 = vrot.lane.b32.xlu0 %v812, 48
      %v1157 = vpop.permute.xlu0 %1156
      %v1160 = vsel %vm897, %v1155, 0
      %1162 = vmatprep.subr.mxu0 0.0
      %1163 = vmatpush1.msra.mxu0 0.0
      %1164 = vmatprep.subr.mxu0 0.0
      %1165 = vmatpush1.msra.mxu0 0.0
      %1166 = vmatprep.subr.mxu0 0.0
      %1167 = vmatpush1.msra.mxu0 0.0
      %1168 = vmatprep.subr.mxu0 0.0
      %1169 = vmatpush1.msra.mxu0 0.0
      %1170 = vmatprep.subr.mxu0 0.0
      %1171 = vmatpush1.msra.mxu0 0.0
      %1172 = vmatprep.subr.mxu0 0.0
      %1173 = vmatpush1.msra.mxu0 0.0
      %1174 = vmatprep.subr.mxu0 0.0
      %1175 = vmatpush1.msra.mxu0 0.0
      %1176 = vmatprep.subr.mxu0 0.0
      %1177 = vmatpush1.msra.mxu0 0.0
      %1178 = vmatprep.subr.mxu0 0.0
      %1179 = vmatpush1.msra.mxu0 0.0
      %1180 = vmatprep.subr.mxu0 0.0
      %1181 = vmatpush1.msra.mxu0 0.0
      %1182 = vmatprep.subr.mxu0 0.0
      %1183 = vmatpush1.msra.mxu0 0.0
      %1184 = vmatprep.subr.mxu0 0.0
      %1185 = vmatpush1.msra.mxu0 0.0
      %1186 = vmatprep.subr.mxu0 0.0
      %1187 = vmatpush1.msra.mxu0 0.0
      %1188 = vmatprep.subr.mxu0 0.0
      %1189 = vmatpush1.msra.mxu0 0.0
      %1190 = vmatprep.subr.mxu0 0.0
      %1191 = vmatpush1.msra.mxu0 0.0
      %1192 = vmatprep.subr.mxu0 0.0
      %1193 = vmatpush1.msra.mxu0 %v1157
      %1194 = vmatprep.subr.mxu0 0.0
      %1195 = vmatpush2.msra.mxu0 0.0
      %1196 = vmatprep.subr.mxu0 0.0
      %1197 = vmatpush2.msra.mxu0 0.0
      %1198 = vmatprep.subr.mxu0 0.0
      %1199 = vmatpush2.msra.mxu0 0.0
      %1200 = vmatprep.subr.mxu0 0.0
      %1201 = vmatpush2.msra.mxu0 0.0
      %1202 = vmatprep.subr.mxu0 0.0
      %1203 = vmatpush2.msra.mxu0 0.0
      %1204 = vmatprep.subr.mxu0 0.0
      %1205 = vmatpush2.msra.mxu0 0.0
      %1206 = vmatprep.subr.mxu0 0.0
      %1207 = vmatpush2.msra.mxu0 0.0
      %1208 = vmatprep.subr.mxu0 0.0
      %1209 = vmatpush2.msra.mxu0 0.0
      %1210 = vmatprep.subr.mxu0 0.0
      %1211 = vmatpush2.msra.mxu0 0.0
      %1212 = vmatprep.subr.mxu0 0.0
      %1213 = vmatpush2.msra.mxu0 0.0
      %1214 = vmatprep.subr.mxu0 0.0
      %1215 = vmatpush2.msra.mxu0 0.0
      %1216 = vmatprep.subr.mxu0 0.0
      %1217 = vmatpush2.msra.mxu0 0.0
      %1218 = vmatprep.subr.mxu0 0.0
      %1219 = vmatpush2.msra.mxu0 0.0
      %1220 = vmatprep.subr.mxu0 0.0
      %1221 = vmatpush2.msra.mxu0 0.0
      %1222 = vmatprep.subr.mxu0 0.0
      %1223 = vmatpush2.msra.mxu0 0.0
      %1224 = vmatprep.subr.mxu0 0.0
      %1225 = vmatpush2.msra.mxu0 0.0
      %1226 = vmatprep.mubr.f32.mxu0 0.0
      %1227 = vmatmul.mubr.f32.gmra.mxu0 %v1160
      %v1228 = vpop.f32.mrf.mxu0
      %v1229 = vadd.f32 0.0, %v1228
      %v1230 = vpop.f32.mrf.mxu0
      %1231 = vdwg.mxu0
      %v1232 = vld [vmem:[%s9 + $0x10] sm:$0xff]
      %v1233 = vld [vmem:[%s9 + $0x18] sm:$0xff]
      %v1235 = vsel %vm821, %v1229, 0
      %1237 = vmatprep.subr.mxu0 0.0
      %1238 = vmatpush1.msra.mxu0 0.0
      %1239 = vmatprep.subr.mxu0 0.0
      %1240 = vmatpush1.msra.mxu0 0.0
      %1241 = vmatprep.subr.mxu0 0.0
      %1242 = vmatpush1.msra.mxu0 0.0
      %1243 = vmatprep.subr.mxu0 0.0
      %1244 = vmatpush1.msra.mxu0 0.0
      %1245 = vmatprep.subr.mxu0 0.0
      %1246 = vmatpush1.msra.mxu0 0.0
      %1247 = vmatprep.subr.mxu0 0.0
      %1248 = vmatpush1.msra.mxu0 0.0
      %1249 = vmatprep.subr.mxu0 0.0
      %1250 = vmatpush1.msra.mxu0 0.0
      %1251 = vmatprep.subr.mxu0 0.0
      %1252 = vmatpush1.msra.mxu0 0.0
      %1253 = vmatprep.subr.mxu0 0.0
      %1254 = vmatpush1.msra.mxu0 0.0
      %1255 = vmatprep.subr.mxu0 0.0
      %1256 = vmatpush1.msra.mxu0 0.0
      %1257 = vmatprep.subr.mxu0 0.0
      %1258 = vmatpush1.msra.mxu0 0.0
      %1259 = vmatprep.subr.mxu0 0.0
      %1260 = vmatpush1.msra.mxu0 0.0
      %1261 = vmatprep.subr.mxu0 0.0
      %1262 = vmatpush1.msra.mxu0 0.0
      %1263 = vmatprep.subr.mxu0 0.0
      %1264 = vmatpush1.msra.mxu0 0.0
      %1265 = vmatprep.subr.mxu0 0.0
      %1266 = vmatpush1.msra.mxu0 %v1233
      %1267 = vmatprep.subr.mxu0 0.0
      %1268 = vmatpush1.msra.mxu0 %v1232
      %1269 = vmatprep.subr.mxu0 0.0
      %1270 = vmatpush2.msra.mxu0 0.0
      %1271 = vmatprep.subr.mxu0 0.0
      %1272 = vmatpush2.msra.mxu0 0.0
      %1273 = vmatprep.subr.mxu0 0.0
      %1274 = vmatpush2.msra.mxu0 0.0
      %1275 = vmatprep.subr.mxu0 0.0
      %1276 = vmatpush2.msra.mxu0 0.0
      %1277 = vmatprep.subr.mxu0 0.0
      %1278 = vmatpush2.msra.mxu0 0.0
      %1279 = vmatprep.subr.mxu0 0.0
      %1280 = vmatpush2.msra.mxu0 0.0
      %1281 = vmatprep.subr.mxu0 0.0
      %1282 = vmatpush2.msra.mxu0 0.0
      %1283 = vmatprep.subr.mxu0 0.0
      %1284 = vmatpush2.msra.mxu0 0.0
      %1285 = vmatprep.subr.mxu0 0.0
      %1286 = vmatpush2.msra.mxu0 0.0
      %1287 = vmatprep.subr.mxu0 0.0
      %1288 = vmatpush2.msra.mxu0 0.0
      %1289 = vmatprep.subr.mxu0 0.0
      %1290 = vmatpush2.msra.mxu0 0.0
      %1291 = vmatprep.subr.mxu0 0.0
      %1292 = vmatpush2.msra.mxu0 0.0
      %1293 = vmatprep.subr.mxu0 0.0
      %1294 = vmatpush2.msra.mxu0 0.0
      %1295 = vmatprep.subr.mxu0 0.0
      %1296 = vmatpush2.msra.mxu0 0.0
      %1297 = vmatprep.subr.mxu0 0.0
      %1298 = vmatpush2.msra.mxu0 0.0
      %1299 = vmatprep.subr.mxu0 0.0
      %1300 = vmatpush2.msra.mxu0 0.0
      %1301 = vmatprep.mubr.f32.mxu0 0.0
      %1302 = vmatmul.mubr.f32.gmra.mxu0 %v1235
      %v1303 = vpop.f32.mrf.mxu0
      %v1304 = vadd.f32 0.0, %v1303
      %v1305 = vpop.f32.mrf.mxu0
      %1306 = vdwg.mxu0
      %v1307 = vadd.f32 %v1066, %v1304
      %v1308 = vadd.f32 %v703, %v1307
      %v1309 = vsel %vm704, %v1308, 0.0
      %1310 = vadd.xlane.f32.xlu0 %v1309
      %v1311 = vpop.xlane.xlu0 %1310
      %v1312 = vmul.f32 %v1311, %v708
      %v1313 = vsub.f32 %v1308, %v1312
      %v1314 = vmul.f32 %v1313, %v1313
      %v1315 = vsel %vm704, %v1314, 0.0
      %1316 = vadd.xlane.f32.xlu0 %v1315
      %v1317 = vpop.xlane.xlu0 %1316
      %v1318 = vmul.f32 %v1317, %v708
      %v1319 = vadd.f32 %v1318, 1e-05
      %v1320 = vrsqrt.pop %v1319
      %v1321 = vmul.f32 %v1313, %v1320
      %v1322 = vld [vmem:[%s5] sm:$0x1]
      %v1323 = vlaneseq
      %v1324 = vshrl.u32 %v1323, 7
      %v1325 = vsub.s32 0, %v1324
      %v1326 = vrot.slane %v1322, %v1325
      %v1327 = vmul.f32 %v1321, %v1326
      %v1328 = vld [vmem:[%s5 + $0x1] sm:$0x1]
      %v1329 = vlaneseq
      %v1330 = vshrl.u32 %v1329, 7
      %v1331 = vsub.s32 0, %v1330
      %v1332 = vrot.slane %v1328, %v1331
      %v1333 = vadd.f32 %v1327, %v1332
      %v1334 = vld [vmem:[%s11] sm:$0xff]
      %v1335 = vld [vmem:[%s11 + $0x8] sm:$0xff]
      %v1336 = vld [vmem:[%s11 + $0x10] sm:$0xff]
      %v1337 = vld [vmem:[%s11 + $0x18] sm:$0xff]
      %v1338 = vld [vmem:[%s12] sm:$0x1]
      %v1340 = vlaneseq
      %v1341 = vshrl.u32 %v1340, 7
      %v1342 = vsub.s32 0, %v1341
      %v1343 = vrot.slane %v1338, %v1342
      %v1346 = vsel %vm704, %v1333, 0
      %1348 = vmatprep.subr.mxu0 0.0
      %1349 = vmatpush1.msra.mxu0 0.0
      %1350 = vmatprep.subr.mxu0 0.0
      %1351 = vmatpush1.msra.mxu0 0.0
      %1352 = vmatprep.subr.mxu0 0.0
      %1353 = vmatpush1.msra.mxu0 0.0
      %1354 = vmatprep.subr.mxu0 0.0
      %1355 = vmatpush1.msra.mxu0 0.0
      %1356 = vmatprep.subr.mxu0 0.0
      %1357 = vmatpush1.msra.mxu0 0.0
      %1358 = vmatprep.subr.mxu0 0.0
      %1359 = vmatpush1.msra.mxu0 0.0
      %1360 = vmatprep.subr.mxu0 0.0
      %1361 = vmatpush1.msra.mxu0 0.0
      %1362 = vmatprep.subr.mxu0 0.0
      %1363 = vmatpush1.msra.mxu0 0.0
      %1364 = vmatprep.subr.mxu0 0.0
      %1365 = vmatpush1.msra.mxu0 0.0
      %1366 = vmatprep.subr.mxu0 0.0
      %1367 = vmatpush1.msra.mxu0 0.0
      %1368 = vmatprep.subr.mxu0 0.0
      %1369 = vmatpush1.msra.mxu0 0.0
      %1370 = vmatprep.subr.mxu0 0.0
      %1371 = vmatpush1.msra.mxu0 0.0
      %1372 = vmatprep.subr.mxu0 0.0
      %1373 = vmatpush1.msra.mxu0 %v1337
      %1374 = vmatprep.subr.mxu0 0.0
      %1375 = vmatpush1.msra.mxu0 %v1336
      %1376 = vmatprep.subr.mxu0 0.0
      %1377 = vmatpush1.msra.mxu0 %v1335
      %1378 = vmatprep.subr.mxu0 0.0
      %1379 = vmatpush1.msra.mxu0 %v1334
      %1380 = vmatprep.subr.mxu0 0.0
      %1381 = vmatpush2.msra.mxu0 0.0
      %1382 = vmatprep.subr.mxu0 0.0
      %1383 = vmatpush2.msra.mxu0 0.0
      %1384 = vmatprep.subr.mxu0 0.0
      %1385 = vmatpush2.msra.mxu0 0.0
      %1386 = vmatprep.subr.mxu0 0.0
      %1387 = vmatpush2.msra.mxu0 0.0
      %1388 = vmatprep.subr.mxu0 0.0
      %1389 = vmatpush2.msra.mxu0 0.0
      %1390 = vmatprep.subr.mxu0 0.0
      %1391 = vmatpush2.msra.mxu0 0.0
      %1392 = vmatprep.subr.mxu0 0.0
      %1393 = vmatpush2.msra.mxu0 0.0
      %1394 = vmatprep.subr.mxu0 0.0
      %1395 = vmatpush2.msra.mxu0 0.0
      %1396 = vmatprep.subr.mxu0 0.0
      %1397 = vmatpush2.msra.mxu0 0.0
      %1398 = vmatprep.subr.mxu0 0.0
      %1399 = vmatpush2.msra.mxu0 0.0
      %1400 = vmatprep.subr.mxu0 0.0
      %1401 = vmatpush2.msra.mxu0 0.0
      %1402 = vmatprep.subr.mxu0 0.0
      %1403 = vmatpush2.msra.mxu0 0.0
      %1404 = vmatprep.subr.mxu0 0.0
      %1405 = vmatpush2.msra.mxu0 0.0
      %1406 = vmatprep.subr.mxu0 0.0
      %1407 = vmatpush2.msra.mxu0 0.0
      %1408 = vmatprep.subr.mxu0 0.0
      %1409 = vmatpush2.msra.mxu0 0.0
      %1410 = vmatprep.subr.mxu0 0.0
      %1411 = vmatpush2.msra.mxu0 0.0
      %1412 = vmatprep.mubr.f32.mxu0 0.0
      %1413 = vmatmul.mubr.f32.gmra.mxu0 %v1346
      %v1414 = vpop.f32.mrf.mxu0
      %v1415 = vadd.f32 %v1343, %v1414
      %v1416 = vpop.f32.mrf.mxu0
      %1417 = vdwg.mxu0
      %v1418 = vmul.f32 %v1415, 0.25
      %v1419 = vld [vmem:[%s690] sm:$0xff]
      %v1420 = vld [vmem:[%s13] sm:$0xff]
      %v1421 = vld [vmem:[%s13 + $0x8] sm:$0xff]
      %v1422 = vld [vmem:[%s13 + $0x10] sm:$0xff]
      %v1423 = vld [vmem:[%s13 + $0x18] sm:$0xff]
      %v1424 = vld [vmem:[%s14] sm:$0x1]
      %v1426 = vlaneseq
      %v1427 = vshrl.u32 %v1426, 7
      %v1428 = vsub.s32 0, %v1427
      %v1429 = vrot.slane %v1424, %v1428
      %v1432 = vsel %vm704, %v1419, 0
      %1434 = vmatprep.subr.mxu0 0.0
      %1435 = vmatpush1.msra.mxu0 0.0
      %1436 = vmatprep.subr.mxu0 0.0
      %1437 = vmatpush1.msra.mxu0 0.0
      %1438 = vmatprep.subr.mxu0 0.0
      %1439 = vmatpush1.msra.mxu0 0.0
      %1440 = vmatprep.subr.mxu0 0.0
      %1441 = vmatpush1.msra.mxu0 0.0
      %1442 = vmatprep.subr.mxu0 0.0
      %1443 = vmatpush1.msra.mxu0 0.0
      %1444 = vmatprep.subr.mxu0 0.0
      %1445 = vmatpush1.msra.mxu0 0.0
      %1446 = vmatprep.subr.mxu0 0.0
      %1447 = vmatpush1.msra.mxu0 0.0
      %1448 = vmatprep.subr.mxu0 0.0
      %1449 = vmatpush1.msra.mxu0 0.0
      %1450 = vmatprep.subr.mxu0 0.0
      %1451 = vmatpush1.msra.mxu0 0.0
      %1452 = vmatprep.subr.mxu0 0.0
      %1453 = vmatpush1.msra.mxu0 0.0
      %1454 = vmatprep.subr.mxu0 0.0
      %1455 = vmatpush1.msra.mxu0 0.0
      %1456 = vmatprep.subr.mxu0 0.0
      %1457 = vmatpush1.msra.mxu0 0.0
      %1458 = vmatprep.subr.mxu0 0.0
      %1459 = vmatpush1.msra.mxu0 %v1423
      %1460 = vmatprep.subr.mxu0 0.0
      %1461 = vmatpush1.msra.mxu0 %v1422
      %1462 = vmatprep.subr.mxu0 0.0
      %1463 = vmatpush1.msra.mxu0 %v1421
      %1464 = vmatprep.subr.mxu0 0.0
      %1465 = vmatpush1.msra.mxu0 %v1420
      %1466 = vmatprep.subr.mxu0 0.0
      %1467 = vmatpush2.msra.mxu0 0.0
      %1468 = vmatprep.subr.mxu0 0.0
      %1469 = vmatpush2.msra.mxu0 0.0
      %1470 = vmatprep.subr.mxu0 0.0
      %1471 = vmatpush2.msra.mxu0 0.0
      %1472 = vmatprep.subr.mxu0 0.0
      %1473 = vmatpush2.msra.mxu0 0.0
      %1474 = vmatprep.subr.mxu0 0.0
      %1475 = vmatpush2.msra.mxu0 0.0
      %1476 = vmatprep.subr.mxu0 0.0
      %1477 = vmatpush2.msra.mxu0 0.0
      %1478 = vmatprep.subr.mxu0 0.0
      %1479 = vmatpush2.msra.mxu0 0.0
      %1480 = vmatprep.subr.mxu0 0.0
      %1481 = vmatpush2.msra.mxu0 0.0
      %1482 = vmatprep.subr.mxu0 0.0
      %1483 = vmatpush2.msra.mxu0 0.0
      %1484 = vmatprep.subr.mxu0 0.0
      %1485 = vmatpush2.msra.mxu0 0.0
      %1486 = vmatprep.subr.mxu0 0.0
      %1487 = vmatpush2.msra.mxu0 0.0
      %1488 = vmatprep.subr.mxu0 0.0
      %1489 = vmatpush2.msra.mxu0 0.0
      %1490 = vmatprep.subr.mxu0 0.0
      %1491 = vmatpush2.msra.mxu0 0.0
      %1492 = vmatprep.subr.mxu0 0.0
      %1493 = vmatpush2.msra.mxu0 0.0
      %1494 = vmatprep.subr.mxu0 0.0
      %1495 = vmatpush2.msra.mxu0 0.0
      %1496 = vmatprep.subr.mxu0 0.0
      %1497 = vmatpush2.msra.mxu0 0.0
      %1498 = vmatprep.mubr.f32.mxu0 0.0
      %1499 = vmatmul.mubr.f32.gmra.mxu0 %v1432
      %v1500 = vpop.f32.mrf.mxu0
      %v1501 = vadd.f32 %v1429, %v1500
      %v1502 = vpop.f32.mrf.mxu0
      %1503 = vdwg.mxu0
      %v1504 = vld [vmem:[%s698] sm:$0xff]
      %v1505 = vld [vmem:[%s16] sm:$0x1]
      %v1507 = vsel %vm821, %v1418, 0
      %v1510 = vsel %vm821, %v1501, 0
      %1512 = vmatprep.subr.mxu0 0.0
      %1513 = vmatpush1.xpose.msra.mxu0 0.0
      %1514 = vmatprep.subr.mxu0 0.0
      %1515 = vmatpush1.xpose.msra.mxu0 0.0
      %1516 = vmatprep.subr.mxu0 0.0
      %1517 = vmatpush1.xpose.msra.mxu0 0.0
      %1518 = vmatprep.subr.mxu0 0.0
      %1519 = vmatpush1.xpose.msra.mxu0 0.0
      %1520 = vmatprep.subr.mxu0 0.0
      %1521 = vmatpush1.xpose.msra.mxu0 0.0
      %1522 = vmatprep.subr.mxu0 0.0
      %1523 = vmatpush1.xpose.msra.mxu0 0.0
      %1524 = vmatprep.subr.mxu0 0.0
      %1525 = vmatpush1.xpose.msra.mxu0 0.0
      %1526 = vmatprep.subr.mxu0 0.0
      %1527 = vmatpush1.xpose.msra.mxu0 0.0
      %1528 = vmatprep.subr.mxu0 0.0
      %1529 = vmatpush1.xpose.msra.mxu0 0.0
      %1530 = vmatprep.subr.mxu0 0.0
      %1531 = vmatpush1.xpose.msra.mxu0 0.0
      %1532 = vmatprep.subr.mxu0 0.0
      %1533 = vmatpush1.xpose.msra.mxu0 0.0
      %1534 = vmatprep.subr.mxu0 0.0
      %1535 = vmatpush1.xpose.msra.mxu0 0.0
      %1536 = vmatprep.subr.mxu0 0.0
      %1537 = vmatpush1.xpose.msra.mxu0 0.0
      %1538 = vmatprep.subr.mxu0 0.0
      %1539 = vmatpush1.xpose.msra.mxu0 0.0
      %1540 = vmatprep.subr.mxu0 0.0
      %1541 = vmatpush1.xpose.msra.mxu0 0.0
      %1542 = vmatprep.subr.mxu0 0.0
      %1543 = vmatpush1.xpose.msra.mxu0 %v1510
      %1544 = vmatprep.subr.mxu0 0.0
      %1545 = vmatpush2.xpose.msra.mxu0 0.0
      %1546 = vmatprep.subr.mxu0 0.0
      %1547 = vmatpush2.xpose.msra.mxu0 0.0
      %1548 = vmatprep.subr.mxu0 0.0
      %1549 = vmatpush2.xpose.msra.mxu0 0.0
      %1550 = vmatprep.subr.mxu0 0.0
      %1551 = vmatpush2.xpose.msra.mxu0 0.0
      %1552 = vmatprep.subr.mxu0 0.0
      %1553 = vmatpush2.xpose.msra.mxu0 0.0
      %1554 = vmatprep.subr.mxu0 0.0
      %1555 = vmatpush2.xpose.msra.mxu0 0.0
      %1556 = vmatprep.subr.mxu0 0.0
      %1557 = vmatpush2.xpose.msra.mxu0 0.0
      %1558 = vmatprep.subr.mxu0 0.0
      %1559 = vmatpush2.xpose.msra.mxu0 0.0
      %1560 = vmatprep.subr.mxu0 0.0
      %1561 = vmatpush2.xpose.msra.mxu0 0.0
      %1562 = vmatprep.subr.mxu0 0.0
      %1563 = vmatpush2.xpose.msra.mxu0 0.0
      %1564 = vmatprep.subr.mxu0 0.0
      %1565 = vmatpush2.xpose.msra.mxu0 0.0
      %1566 = vmatprep.subr.mxu0 0.0
      %1567 = vmatpush2.xpose.msra.mxu0 0.0
      %1568 = vmatprep.subr.mxu0 0.0
      %1569 = vmatpush2.xpose.msra.mxu0 0.0
      %1570 = vmatprep.subr.mxu0 0.0
      %1571 = vmatpush2.xpose.msra.mxu0 0.0
      %1572 = vmatprep.subr.mxu0 0.0
      %1573 = vmatpush2.xpose.msra.mxu0 0.0
      %1574 = vmatprep.subr.mxu0 0.0
      %1575 = vmatpush2.xpose.msra.mxu0 0.0
      %1576 = vmatprep.mubr.f32.mxu0 0.0
      %1577 = vmatmul.mubr.f32.gmra.mxu0 %v1507
      %v1578 = vpop.f32.mrf.mxu0
      %v1579 = vadd.f32 %v1504, %v1578
      %v1580 = vpop.f32.mrf.mxu0
      %1581 = vdwg.mxu0
      %v1582 = vsel %vm897, %v1579, -inf
      %1583 = vmax.xlane.f32.xlu0 %v1582
      %v1584 = vpop.xlane.xlu0 %1583
      %v1585 = vsub.f32 %v1579, %v1584
      %v1586 = vmul.f32 %v1585, 1.442695
      %v1587 = vpow.pop %v1586
      %v1588 = vsel %vm897, %v1587, 0.0
      %1589 = vadd.xlane.f32.xlu0 %v1588
      %v1590 = vpop.xlane.xlu0 %1589
      %v1591 = vrcp.pop %v1590
      %v1592 = vmul.f32 %v1587, %v1591
      %1593 = vrot.lane.b32.xlu0 %v1501, 96
      %v1594 = vpop.permute.xlu0 %1593
      %v1597 = vsel %vm897, %v1592, 0
      %1599 = vmatprep.subr.mxu0 0.0
      %1600 = vmatpush1.msra.mxu0 0.0
      %1601 = vmatprep.subr.mxu0 0.0
      %1602 = vmatpush1.msra.mxu0 0.0
      %1603 = vmatprep.subr.mxu0 0.0
      %1604 = vmatpush1.msra.mxu0 0.0
      %1605 = vmatprep.subr.mxu0 0.0
      %1606 = vmatpush1.msra.mxu0 0.0
      %1607 = vmatprep.subr.mxu0 0.0
      %1608 = vmatpush1.msra.mxu0 0.0
      %1609 = vmatprep.subr.mxu0 0.0
      %1610 = vmatpush1.msra.mxu0 0.0
      %1611 = vmatprep.subr.mxu0 0.0
      %1612 = vmatpush1.msra.mxu0 0.0
      %1613 = vmatprep.subr.mxu0 0.0
      %1614 = vmatpush1.msra.mxu0 0.0
      %1615 = vmatprep.subr.mxu0 0.0
      %1616 = vmatpush1.msra.mxu0 0.0
      %1617 = vmatprep.subr.mxu0 0.0
      %1618 = vmatpush1.msra.mxu0 0.0
      %1619 = vmatprep.subr.mxu0 0.0
      %1620 = vmatpush1.msra.mxu0 0.0
      %1621 = vmatprep.subr.mxu0 0.0
      %1622 = vmatpush1.msra.mxu0 0.0
      %1623 = vmatprep.subr.mxu0 0.0
      %1624 = vmatpush1.msra.mxu0 0.0
      %1625 = vmatprep.subr.mxu0 0.0
      %1626 = vmatpush1.msra.mxu0 0.0
      %1627 = vmatprep.subr.mxu0 0.0
      %1628 = vmatpush1.msra.mxu0 0.0
      %1629 = vmatprep.subr.mxu0 0.0
      %1630 = vmatpush1.msra.mxu0 %v1594
      %1631 = vmatprep.subr.mxu0 0.0
      %1632 = vmatpush2.msra.mxu0 0.0
      %1633 = vmatprep.subr.mxu0 0.0
      %1634 = vmatpush2.msra.mxu0 0.0
      %1635 = vmatprep.subr.mxu0 0.0
      %1636 = vmatpush2.msra.mxu0 0.0
      %1637 = vmatprep.subr.mxu0 0.0
      %1638 = vmatpush2.msra.mxu0 0.0
      %1639 = vmatprep.subr.mxu0 0.0
      %1640 = vmatpush2.msra.mxu0 0.0
      %1641 = vmatprep.subr.mxu0 0.0
      %1642 = vmatpush2.msra.mxu0 0.0
      %1643 = vmatprep.subr.mxu0 0.0
      %1644 = vmatpush2.msra.mxu0 0.0
      %1645 = vmatprep.subr.mxu0 0.0
      %1646 = vmatpush2.msra.mxu0 0.0
      %1647 = vmatprep.subr.mxu0 0.0
      %1648 = vmatpush2.msra.mxu0 0.0
      %1649 = vmatprep.subr.mxu0 0.0
      %1650 = vmatpush2.msra.mxu0 0.0
      %1651 = vmatprep.subr.mxu0 0.0
      %1652 = vmatpush2.msra.mxu0 0.0
      %1653 = vmatprep.subr.mxu0 0.0
      %1654 = vmatpush2.msra.mxu0 0.0
      %1655 = vmatprep.subr.mxu0 0.0
      %1656 = vmatpush2.msra.mxu0 0.0
      %1657 = vmatprep.subr.mxu0 0.0
      %1658 = vmatpush2.msra.mxu0 0.0
      %1659 = vmatprep.subr.mxu0 0.0
      %1660 = vmatpush2.msra.mxu0 0.0
      %1661 = vmatprep.subr.mxu0 0.0
      %1662 = vmatpush2.msra.mxu0 0.0
      %1663 = vmatprep.mubr.f32.mxu0 0.0
      %1664 = vmatmul.mubr.f32.gmra.mxu0 %v1597
      %v1665 = vpop.f32.mrf.mxu0
      %v1666 = vadd.f32 0.0, %v1665
      %v1667 = vpop.f32.mrf.mxu0
      %1668 = vdwg.mxu0
      %v1669 = vld [vmem:[%s15] sm:$0xff]
      %v1670 = vld [vmem:[%s15 + $0x8] sm:$0xff]
      %v1672 = vsel %vm821, %v1666, 0
      %1674 = vmatprep.subr.mxu0 0.0
      %1675 = vmatpush1.msra.mxu0 0.0
      %1676 = vmatprep.subr.mxu0 0.0
      %1677 = vmatpush1.msra.mxu0 0.0
      %1678 = vmatprep.subr.mxu0 0.0
      %1679 = vmatpush1.msra.mxu0 0.0
      %1680 = vmatprep.subr.mxu0 0.0
      %1681 = vmatpush1.msra.mxu0 0.0
      %1682 = vmatprep.subr.mxu0 0.0
      %1683 = vmatpush1.msra.mxu0 0.0
      %1684 = vmatprep.subr.mxu0 0.0
      %1685 = vmatpush1.msra.mxu0 0.0
      %1686 = vmatprep.subr.mxu0 0.0
      %1687 = vmatpush1.msra.mxu0 0.0
      %1688 = vmatprep.subr.mxu0 0.0
      %1689 = vmatpush1.msra.mxu0 0.0
      %1690 = vmatprep.subr.mxu0 0.0
      %1691 = vmatpush1.msra.mxu0 0.0
      %1692 = vmatprep.subr.mxu0 0.0
      %1693 = vmatpush1.msra.mxu0 0.0
      %1694 = vmatprep.subr.mxu0 0.0
      %1695 = vmatpush1.msra.mxu0 0.0
      %1696 = vmatprep.subr.mxu0 0.0
      %1697 = vmatpush1.msra.mxu0 0.0
      %1698 = vmatprep.subr.mxu0 0.0
      %1699 = vmatpush1.msra.mxu0 0.0
      %1700 = vmatprep.subr.mxu0 0.0
      %1701 = vmatpush1.msra.mxu0 0.0
      %1702 = vmatprep.subr.mxu0 0.0
      %1703 = vmatpush1.msra.mxu0 %v1670
      %1704 = vmatprep.subr.mxu0 0.0
      %1705 = vmatpush1.msra.mxu0 %v1669
      %1706 = vmatprep.subr.mxu0 0.0
      %1707 = vmatpush2.msra.mxu0 0.0
      %1708 = vmatprep.subr.mxu0 0.0
      %1709 = vmatpush2.msra.mxu0 0.0
      %1710 = vmatprep.subr.mxu0 0.0
      %1711 = vmatpush2.msra.mxu0 0.0
      %1712 = vmatprep.subr.mxu0 0.0
      %1713 = vmatpush2.msra.mxu0 0.0
      %1714 = vmatprep.subr.mxu0 0.0
      %1715 = vmatpush2.msra.mxu0 0.0
      %1716 = vmatprep.subr.mxu0 0.0
      %1717 = vmatpush2.msra.mxu0 0.0
      %1718 = vmatprep.subr.mxu0 0.0
      %1719 = vmatpush2.msra.mxu0 0.0
      %1720 = vmatprep.subr.mxu0 0.0
      %1721 = vmatpush2.msra.mxu0 0.0
      %1722 = vmatprep.subr.mxu0 0.0
      %1723 = vmatpush2.msra.mxu0 0.0
      %1724 = vmatprep.subr.mxu0 0.0
      %1725 = vmatpush2.msra.mxu0 0.0
      %1726 = vmatprep.subr.mxu0 0.0
      %1727 = vmatpush2.msra.mxu0 0.0
      %1728 = vmatprep.subr.mxu0 0.0
      %1729 = vmatpush2.msra.mxu0 0.0
      %1730 = vmatprep.subr.mxu0 0.0
      %1731 = vmatpush2.msra.mxu0 0.0
      %1732 = vmatprep.subr.mxu0 0.0
      %1733 = vmatpush2.msra.mxu0 0.0
      %1734 = vmatprep.subr.mxu0 0.0
      %1735 = vmatpush2.msra.mxu0 0.0
      %1736 = vmatprep.subr.mxu0 0.0
      %1737 = vmatpush2.msra.mxu0 0.0
      %1738 = vmatprep.mubr.f32.mxu0 0.0
      %1739 = vmatmul.mubr.f32.gmra.mxu0 %v1672
      %v1740 = vpop.f32.mrf.mxu0
      %v1741 = vadd.f32 0.0, %v1740
      %v1742 = vpop.f32.mrf.mxu0
      %1743 = vdwg.mxu0
      %v1745 = vlaneseq
      %v1746 = vshrl.u32 %v1745, 7
      %v1747 = vsub.s32 0, %v1746
      %v1748 = vrot.slane %v1505, %v1747
      %v1750 = vadd.f32 %v1748, %v1741
      %1751 = vrot.lane.b32.xlu0 %v1418, 112
      %v1752 = vpop.permute.xlu0 %1751
      %1753 = vrot.lane.b32.xlu0 %v1501, 112
      %v1754 = vpop.permute.xlu0 %1753
      %v1755 = vsel %vm821, %v1752, 0
      %v1757 = vsel %vm821, %v1754, 0
      %1759 = vmatprep.subr.mxu0 0.0
      %1760 = vmatpush1.xpose.msra.mxu0 0.0
      %1761 = vmatprep.subr.mxu0 0.0
      %1762 = vmatpush1.xpose.msra.mxu0 0.0
      %1763 = vmatprep.subr.mxu0 0.0
      %1764 = vmatpush1.xpose.msra.mxu0 0.0
      %1765 = vmatprep.subr.mxu0 0.0
      %1766 = vmatpush1.xpose.msra.mxu0 0.0
      %1767 = vmatprep.subr.mxu0 0.0
      %1768 = vmatpush1.xpose.msra.mxu0 0.0
      %1769 = vmatprep.subr.mxu0 0.0
      %1770 = vmatpush1.xpose.msra.mxu0 0.0
      %1771 = vmatprep.subr.mxu0 0.0
      %1772 = vmatpush1.xpose.msra.mxu0 0.0
      %1773 = vmatprep.subr.mxu0 0.0
      %1774 = vmatpush1.xpose.msra.mxu0 0.0
      %1775 = vmatprep.subr.mxu0 0.0
      %1776 = vmatpush1.xpose.msra.mxu0 0.0
      %1777 = vmatprep.subr.mxu0 0.0
      %1778 = vmatpush1.xpose.msra.mxu0 0.0
      %1779 = vmatprep.subr.mxu0 0.0
      %1780 = vmatpush1.xpose.msra.mxu0 0.0
      %1781 = vmatprep.subr.mxu0 0.0
      %1782 = vmatpush1.xpose.msra.mxu0 0.0
      %1783 = vmatprep.subr.mxu0 0.0
      %1784 = vmatpush1.xpose.msra.mxu0 0.0
      %1785 = vmatprep.subr.mxu0 0.0
      %1786 = vmatpush1.xpose.msra.mxu0 0.0
      %1787 = vmatprep.subr.mxu0 0.0
      %1788 = vmatpush1.xpose.msra.mxu0 0.0
      %1789 = vmatprep.subr.mxu0 0.0
      %1790 = vmatpush1.xpose.msra.mxu0 %v1757
      %1791 = vmatprep.subr.mxu0 0.0
      %1792 = vmatpush2.xpose.msra.mxu0 0.0
      %1793 = vmatprep.subr.mxu0 0.0
      %1794 = vmatpush2.xpose.msra.mxu0 0.0
      %1795 = vmatprep.subr.mxu0 0.0
      %1796 = vmatpush2.xpose.msra.mxu0 0.0
      %1797 = vmatprep.subr.mxu0 0.0
      %1798 = vmatpush2.xpose.msra.mxu0 0.0
      %1799 = vmatprep.subr.mxu0 0.0
      %1800 = vmatpush2.xpose.msra.mxu0 0.0
      %1801 = vmatprep.subr.mxu0 0.0
      %1802 = vmatpush2.xpose.msra.mxu0 0.0
      %1803 = vmatprep.subr.mxu0 0.0
      %1804 = vmatpush2.xpose.msra.mxu0 0.0
      %1805 = vmatprep.subr.mxu0 0.0
      %1806 = vmatpush2.xpose.msra.mxu0 0.0
      %1807 = vmatprep.subr.mxu0 0.0
      %1808 = vmatpush2.xpose.msra.mxu0 0.0
      %1809 = vmatprep.subr.mxu0 0.0
      %1810 = vmatpush2.xpose.msra.mxu0 0.0
      %1811 = vmatprep.subr.mxu0 0.0
      %1812 = vmatpush2.xpose.msra.mxu0 0.0
      %1813 = vmatprep.subr.mxu0 0.0
      %1814 = vmatpush2.xpose.msra.mxu0 0.0
      %1815 = vmatprep.subr.mxu0 0.0
      %1816 = vmatpush2.xpose.msra.mxu0 0.0
      %1817 = vmatprep.subr.mxu0 0.0
      %1818 = vmatpush2.xpose.msra.mxu0 0.0
      %1819 = vmatprep.subr.mxu0 0.0
      %1820 = vmatpush2.xpose.msra.mxu0 0.0
      %1821 = vmatprep.subr.mxu0 0.0
      %1822 = vmatpush2.xpose.msra.mxu0 0.0
      %1823 = vmatprep.mubr.f32.mxu0 0.0
      %1824 = vmatmul.mubr.f32.gmra.mxu0 %v1755
      %v1825 = vpop.f32.mrf.mxu0
      %v1826 = vadd.f32 %v1504, %v1825
      %v1827 = vpop.f32.mrf.mxu0
      %1828 = vdwg.mxu0
      %v1829 = vsel %vm897, %v1826, -inf
      %1830 = vmax.xlane.f32.xlu0 %v1829
      %v1831 = vpop.xlane.xlu0 %1830
      %v1832 = vsub.f32 %v1826, %v1831
      %v1833 = vmul.f32 %v1832, 1.442695
      %v1834 = vpow.pop %v1833
      %v1835 = vsel %vm897, %v1834, 0.0
      %1836 = vadd.xlane.f32.xlu0 %v1835
      %v1837 = vpop.xlane.xlu0 %1836
      %v1838 = vrcp.pop %v1837
      %v1839 = vmul.f32 %v1834, %v1838
      %1840 = vrot.lane.b32.xlu0 %v1501, 80
      %v1841 = vpop.permute.xlu0 %1840
      %v1844 = vsel %vm897, %v1839, 0
      %1846 = vmatprep.subr.mxu0 0.0
      %1847 = vmatpush1.msra.mxu0 0.0
      %1848 = vmatprep.subr.mxu0 0.0
      %1849 = vmatpush1.msra.mxu0 0.0
      %1850 = vmatprep.subr.mxu0 0.0
      %1851 = vmatpush1.msra.mxu0 0.0
      %1852 = vmatprep.subr.mxu0 0.0
      %1853 = vmatpush1.msra.mxu0 0.0
      %1854 = vmatprep.subr.mxu0 0.0
      %1855 = vmatpush1.msra.mxu0 0.0
      %1856 = vmatprep.subr.mxu0 0.0
      %1857 = vmatpush1.msra.mxu0 0.0
      %1858 = vmatprep.subr.mxu0 0.0
      %1859 = vmatpush1.msra.mxu0 0.0
      %1860 = vmatprep.subr.mxu0 0.0
      %1861 = vmatpush1.msra.mxu0 0.0
      %1862 = vmatprep.subr.mxu0 0.0
      %1863 = vmatpush1.msra.mxu0 0.0
      %1864 = vmatprep.subr.mxu0 0.0
      %1865 = vmatpush1.msra.mxu0 0.0
      %1866 = vmatprep.subr.mxu0 0.0
      %1867 = vmatpush1.msra.mxu0 0.0
      %1868 = vmatprep.subr.mxu0 0.0
      %1869 = vmatpush1.msra.mxu0 0.0
      %1870 = vmatprep.subr.mxu0 0.0
      %1871 = vmatpush1.msra.mxu0 0.0
      %1872 = vmatprep.subr.mxu0 0.0
      %1873 = vmatpush1.msra.mxu0 0.0
      %1874 = vmatprep.subr.mxu0 0.0
      %1875 = vmatpush1.msra.mxu0 0.0
      %1876 = vmatprep.subr.mxu0 0.0
      %1877 = vmatpush1.msra.mxu0 %v1841
      %1878 = vmatprep.subr.mxu0 0.0
      %1879 = vmatpush2.msra.mxu0 0.0
      %1880 = vmatprep.subr.mxu0 0.0
      %1881 = vmatpush2.msra.mxu0 0.0
      %1882 = vmatprep.subr.mxu0 0.0
      %1883 = vmatpush2.msra.mxu0 0.0
      %1884 = vmatprep.subr.mxu0 0.0
      %1885 = vmatpush2.msra.mxu0 0.0
      %1886 = vmatprep.subr.mxu0 0.0
      %1887 = vmatpush2.msra.mxu0 0.0
      %1888 = vmatprep.subr.mxu0 0.0
      %1889 = vmatpush2.msra.mxu0 0.0
      %1890 = vmatprep.subr.mxu0 0.0
      %1891 = vmatpush2.msra.mxu0 0.0
      %1892 = vmatprep.subr.mxu0 0.0
      %1893 = vmatpush2.msra.mxu0 0.0
      %1894 = vmatprep.subr.mxu0 0.0
      %1895 = vmatpush2.msra.mxu0 0.0
      %1896 = vmatprep.subr.mxu0 0.0
      %1897 = vmatpush2.msra.mxu0 0.0
      %1898 = vmatprep.subr.mxu0 0.0
      %1899 = vmatpush2.msra.mxu0 0.0
      %1900 = vmatprep.subr.mxu0 0.0
      %1901 = vmatpush2.msra.mxu0 0.0
      %1902 = vmatprep.subr.mxu0 0.0
      %1903 = vmatpush2.msra.mxu0 0.0
      %1904 = vmatprep.subr.mxu0 0.0
      %1905 = vmatpush2.msra.mxu0 0.0
      %1906 = vmatprep.subr.mxu0 0.0
      %1907 = vmatpush2.msra.mxu0 0.0
      %1908 = vmatprep.subr.mxu0 0.0
      %1909 = vmatpush2.msra.mxu0 0.0
      %1910 = vmatprep.mubr.f32.mxu0 0.0
      %1911 = vmatmul.mubr.f32.gmra.mxu0 %v1844
      %v1912 = vpop.f32.mrf.mxu0
      %v1913 = vadd.f32 0.0, %v1912
      %v1914 = vpop.f32.mrf.mxu0
      %1915 = vdwg.mxu0
      %v1916 = vld [vmem:[%s15 + $0x10] sm:$0xff]
      %v1917 = vld [vmem:[%s15 + $0x18] sm:$0xff]
      %v1919 = vsel %vm821, %v1913, 0
      %1921 = vmatprep.subr.mxu0 0.0
      %1922 = vmatpush1.msra.mxu0 0.0
      %1923 = vmatprep.subr.mxu0 0.0
      %1924 = vmatpush1.msra.mxu0 0.0
      %1925 = vmatprep.subr.mxu0 0.0
      %1926 = vmatpush1.msra.mxu0 0.0
      %1927 = vmatprep.subr.mxu0 0.0
      %1928 = vmatpush1.msra.mxu0 0.0
      %1929 = vmatprep.subr.mxu0 0.0
      %1930 = vmatpush1.msra.mxu0 0.0
      %1931 = vmatprep.subr.mxu0 0.0
      %1932 = vmatpush1.msra.mxu0 0.0
      %1933 = vmatprep.subr.mxu0 0.0
      %1934 = vmatpush1.msra.mxu0 0.0
      %1935 = vmatprep.subr.mxu0 0.0
      %1936 = vmatpush1.msra.mxu0 0.0
      %1937 = vmatprep.subr.mxu0 0.0
      %1938 = vmatpush1.msra.mxu0 0.0
      %1939 = vmatprep.subr.mxu0 0.0
      %1940 = vmatpush1.msra.mxu0 0.0
      %1941 = vmatprep.subr.mxu0 0.0
      %1942 = vmatpush1.msra.mxu0 0.0
      %1943 = vmatprep.subr.mxu0 0.0
      %1944 = vmatpush1.msra.mxu0 0.0
      %1945 = vmatprep.subr.mxu0 0.0
      %1946 = vmatpush1.msra.mxu0 0.0
      %1947 = vmatprep.subr.mxu0 0.0
      %1948 = vmatpush1.msra.mxu0 0.0
      %1949 = vmatprep.subr.mxu0 0.0
      %1950 = vmatpush1.msra.mxu0 %v1917
      %1951 = vmatprep.subr.mxu0 0.0
      %1952 = vmatpush1.msra.mxu0 %v1916
      %1953 = vmatprep.subr.mxu0 0.0
      %1954 = vmatpush2.msra.mxu0 0.0
      %1955 = vmatprep.subr.mxu0 0.0
      %1956 = vmatpush2.msra.mxu0 0.0
      %1957 = vmatprep.subr.mxu0 0.0
      %1958 = vmatpush2.msra.mxu0 0.0
      %1959 = vmatprep.subr.mxu0 0.0
      %1960 = vmatpush2.msra.mxu0 0.0
      %1961 = vmatprep.subr.mxu0 0.0
      %1962 = vmatpush2.msra.mxu0 0.0
      %1963 = vmatprep.subr.mxu0 0.0
      %1964 = vmatpush2.msra.mxu0 0.0
      %1965 = vmatprep.subr.mxu0 0.0
      %1966 = vmatpush2.msra.mxu0 0.0
      %1967 = vmatprep.subr.mxu0 0.0
      %1968 = vmatpush2.msra.mxu0 0.0
      %1969 = vmatprep.subr.mxu0 0.0
      %1970 = vmatpush2.msra.mxu0 0.0
      %1971 = vmatprep.subr.mxu0 0.0
      %1972 = vmatpush2.msra.mxu0 0.0
      %1973 = vmatprep.subr.mxu0 0.0
      %1974 = vmatpush2.msra.mxu0 0.0
      %1975 = vmatprep.subr.mxu0 0.0
      %1976 = vmatpush2.msra.mxu0 0.0
      %1977 = vmatprep.subr.mxu0 0.0
      %1978 = vmatpush2.msra.mxu0 0.0
      %1979 = vmatprep.subr.mxu0 0.0
      %1980 = vmatpush2.msra.mxu0 0.0
      %1981 = vmatprep.subr.mxu0 0.0
      %1982 = vmatpush2.msra.mxu0 0.0
      %1983 = vmatprep.subr.mxu0 0.0
      %1984 = vmatpush2.msra.mxu0 0.0
      %1985 = vmatprep.mubr.f32.mxu0 0.0
      %1986 = vmatmul.mubr.f32.gmra.mxu0 %v1919
      %v1987 = vpop.f32.mrf.mxu0
      %v1988 = vadd.f32 0.0, %v1987
      %v1989 = vpop.f32.mrf.mxu0
      %1990 = vdwg.mxu0
      %v1991 = vadd.f32 %v1750, %v1988
      %v1992 = vadd.f32 %v1308, %v1991
      %v1993 = vsel %vm704, %v1992, 0.0
      %1994 = vadd.xlane.f32.xlu0 %v1993
      %v1995 = vpop.xlane.xlu0 %1994
      %v1996 = vmul.f32 %v1995, %v708
      %v1997 = vsub.f32 %v1992, %v1996
      %v1998 = vmul.f32 %v1997, %v1997
      %v1999 = vsel %vm704, %v1998, 0.0
      %2000 = vadd.xlane.f32.xlu0 %v1999
      %v2001 = vpop.xlane.xlu0 %2000
      %v2002 = vmul.f32 %v2001, %v708
      %v2003 = vadd.f32 %v2002, 1e-05
      %v2004 = vrsqrt.pop %v2003
      %v2005 = vmul.f32 %v1997, %v2004
      %v2006 = vld [vmem:[%s6] sm:$0x1]
      %v2007 = vlaneseq
      %v2008 = vshrl.u32 %v2007, 7
      %v2009 = vsub.s32 0, %v2008
      %v2010 = vrot.slane %v2006, %v2009
      %v2011 = vmul.f32 %v2005, %v2010
      %v2012 = vld [vmem:[%s6 + $0x1] sm:$0x1]
      %v2013 = vlaneseq
      %v2014 = vshrl.u32 %v2013, 7
      %v2015 = vsub.s32 0, %v2014
      %v2016 = vrot.slane %v2012, %v2015
      %v2017 = vadd.f32 %v2011, %v2016
      %v2018 = vld [vmem:[%s17] sm:$0xff]
      %v2019 = vld [vmem:[%s17 + $0x8] sm:$0xff]
      %v2020 = vld [vmem:[%s17 + $0x10] sm:$0xff]
      %v2021 = vld [vmem:[%s17 + $0x18] sm:$0xff]
      %v2022 = vld [vmem:[%s18] sm:$0x1]
      %v2024 = vlaneseq
      %v2025 = vshrl.u32 %v2024, 7
      %v2026 = vsub.s32 0, %v2025
      %v2027 = vrot.slane %v2022, %v2026
      %v2030 = vsel %vm704, %v2017, 0
      %2032 = vmatprep.subr.mxu0 0.0
      %2033 = vmatpush1.msra.mxu0 0.0
      %2034 = vmatprep.subr.mxu0 0.0
      %2035 = vmatpush1.msra.mxu0 0.0
      %2036 = vmatprep.subr.mxu0 0.0
      %2037 = vmatpush1.msra.mxu0 0.0
      %2038 = vmatprep.subr.mxu0 0.0
      %2039 = vmatpush1.msra.mxu0 0.0
      %2040 = vmatprep.subr.mxu0 0.0
      %2041 = vmatpush1.msra.mxu0 0.0
      %2042 = vmatprep.subr.mxu0 0.0
      %2043 = vmatpush1.msra.mxu0 0.0
      %2044 = vmatprep.subr.mxu0 0.0
      %2045 = vmatpush1.msra.mxu0 0.0
      %2046 = vmatprep.subr.mxu0 0.0
      %2047 = vmatpush1.msra.mxu0 0.0
      %2048 = vmatprep.subr.mxu0 0.0
      %2049 = vmatpush1.msra.mxu0 0.0
      %2050 = vmatprep.subr.mxu0 0.0
      %2051 = vmatpush1.msra.mxu0 0.0
      %2052 = vmatprep.subr.mxu0 0.0
      %2053 = vmatpush1.msra.mxu0 0.0
      %2054 = vmatprep.subr.mxu0 0.0
      %2055 = vmatpush1.msra.mxu0 0.0
      %2056 = vmatprep.subr.mxu0 0.0
      %2057 = vmatpush1.msra.mxu0 %v2021
      %2058 = vmatprep.subr.mxu0 0.0
      %2059 = vmatpush1.msra.mxu0 %v2020
      %2060 = vmatprep.subr.mxu0 0.0
      %2061 = vmatpush1.msra.mxu0 %v2019
      %2062 = vmatprep.subr.mxu0 0.0
      %2063 = vmatpush1.msra.mxu0 %v2018
      %2064 = vmatprep.subr.mxu0 0.0
      %2065 = vmatpush2.msra.mxu0 0.0
      %2066 = vmatprep.subr.mxu0 0.0
      %2067 = vmatpush2.msra.mxu0 0.0
      %2068 = vmatprep.subr.mxu0 0.0
      %2069 = vmatpush2.msra.mxu0 0.0
      %2070 = vmatprep.subr.mxu0 0.0
      %2071 = vmatpush2.msra.mxu0 0.0
      %2072 = vmatprep.subr.mxu0 0.0
      %2073 = vmatpush2.msra.mxu0 0.0
      %2074 = vmatprep.subr.mxu0 0.0
      %2075 = vmatpush2.msra.mxu0 0.0
      %2076 = vmatprep.subr.mxu0 0.0
      %2077 = vmatpush2.msra.mxu0 0.0
      %2078 = vmatprep.subr.mxu0 0.0
      %2079 = vmatpush2.msra.mxu0 0.0
      %2080 = vmatprep.subr.mxu0 0.0
      %2081 = vmatpush2.msra.mxu0 0.0
      %2082 = vmatprep.subr.mxu0 0.0
      %2083 = vmatpush2.msra.mxu0 0.0
      %2084 = vmatprep.subr.mxu0 0.0
      %2085 = vmatpush2.msra.mxu0 0.0
      %2086 = vmatprep.subr.mxu0 0.0
      %2087 = vmatpush2.msra.mxu0 0.0
      %2088 = vmatprep.subr.mxu0 0.0
      %2089 = vmatpush2.msra.mxu0 0.0
      %2090 = vmatprep.subr.mxu0 0.0
      %2091 = vmatpush2.msra.mxu0 0.0
      %2092 = vmatprep.subr.mxu0 0.0
      %2093 = vmatpush2.msra.mxu0 0.0
      %2094 = vmatprep.subr.mxu0 0.0
      %2095 = vmatpush2.msra.mxu0 0.0
      %2096 = vmatprep.mubr.f32.mxu0 0.0
      %2097 = vmatmul.mubr.f32.gmra.mxu0 %v2030
      %v2098 = vpop.f32.mrf.mxu0
      %v2099 = vadd.f32 %v2027, %v2098
      %v2100 = vpop.f32.mrf.mxu0
      %2101 = vdwg.mxu0
      %v2102 = vmax.f32 %v2099, 0.0
      %v2103 = vld [vmem:[%s19] sm:$0xff]
      %v2104 = vld [vmem:[%s19 + $0x8] sm:$0xff]
      %v2105 = vld [vmem:[%s19 + $0x10] sm:$0xff]
      %v2106 = vld [vmem:[%s19 + $0x18] sm:$0xff]
      %v2107 = vld [vmem:[%s19 + $0x20] sm:$0xff]
      %v2108 = vld [vmem:[%s19 + $0x28] sm:$0xff]
      %v2109 = vld [vmem:[%s19 + $0x30] sm:$0xff]
      %v2110 = vld [vmem:[%s19 + $0x38] sm:$0xff]
      %v2111 = vld [vmem:[%s20] sm:$0x1]
      %v2113 = vlaneseq
      %v2114 = vshrl.u32 %v2113, 7
      %v2115 = vsub.s32 0, %v2114
      %v2116 = vrot.slane %v2111, %v2115
      %vm2118 = vcmask 523264
      %v2120 = vsel %vm2118, %v2102, 0
      %2122 = vmatprep.subr.mxu0 0.0
      %2123 = vmatpush1.msra.mxu0 0.0
      %2124 = vmatprep.subr.mxu0 0.0
      %2125 = vmatpush1.msra.mxu0 0.0
      %2126 = vmatprep.subr.mxu0 0.0
      %2127 = vmatpush1.msra.mxu0 0.0
      %2128 = vmatprep.subr.mxu0 0.0
      %2129 = vmatpush1.msra.mxu0 0.0
      %2130 = vmatprep.subr.mxu0 0.0
      %2131 = vmatpush1.msra.mxu0 0.0
      %2132 = vmatprep.subr.mxu0 0.0
      %2133 = vmatpush1.msra.mxu0 0.0
      %2134 = vmatprep.subr.mxu0 0.0
      %2135 = vmatpush1.msra.mxu0 0.0
      %2136 = vmatprep.subr.mxu0 0.0
      %2137 = vmatpush1.msra.mxu0 0.0
      %2138 = vmatprep.subr.mxu0 0.0
      %2139 = vmatpush1.msra.mxu0 %v2110
      %2140 = vmatprep.subr.mxu0 0.0
      %2141 = vmatpush1.msra.mxu0 %v2109
      %2142 = vmatprep.subr.mxu0 0.0
      %2143 = vmatpush1.msra.mxu0 %v2108
      %2144 = vmatprep.subr.mxu0 0.0
      %2145 = vmatpush1.msra.mxu0 %v2107
      %2146 = vmatprep.subr.mxu0 0.0
      %2147 = vmatpush1.msra.mxu0 %v2106
      %2148 = vmatprep.subr.mxu0 0.0
      %2149 = vmatpush1.msra.mxu0 %v2105
      %2150 = vmatprep.subr.mxu0 0.0
      %2151 = vmatpush1.msra.mxu0 %v2104
      %2152 = vmatprep.subr.mxu0 0.0
      %2153 = vmatpush1.msra.mxu0 %v2103
      %2154 = vmatprep.subr.mxu0 0.0
      %2155 = vmatpush2.msra.mxu0 0.0
      %2156 = vmatprep.subr.mxu0 0.0
      %2157 = vmatpush2.msra.mxu0 0.0
      %2158 = vmatprep.subr.mxu0 0.0
      %2159 = vmatpush2.msra.mxu0 0.0
      %2160 = vmatprep.subr.mxu0 0.0
      %2161 = vmatpush2.msra.mxu0 0.0
      %2162 = vmatprep.subr.mxu0 0.0
      %2163 = vmatpush2.msra.mxu0 0.0
      %2164 = vmatprep.subr.mxu0 0.0
      %2165 = vmatpush2.msra.mxu0 0.0
      %2166 = vmatprep.subr.mxu0 0.0
      %2167 = vmatpush2.msra.mxu0 0.0
      %2168 = vmatprep.subr.mxu0 0.0
      %2169 = vmatpush2.msra.mxu0 0.0
      %2170 = vmatprep.subr.mxu0 0.0
      %2171 = vmatpush2.msra.mxu0 0.0
      %2172 = vmatprep.subr.mxu0 0.0
      %2173 = vmatpush2.msra.mxu0 0.0
      %2174 = vmatprep.subr.mxu0 0.0
      %2175 = vmatpush2.msra.mxu0 0.0
      %2176 = vmatprep.subr.mxu0 0.0
      %2177 = vmatpush2.msra.mxu0 0.0
      %2178 = vmatprep.subr.mxu0 0.0
      %2179 = vmatpush2.msra.mxu0 0.0
      %2180 = vmatprep.subr.mxu0 0.0
      %2181 = vmatpush2.msra.mxu0 0.0
      %2182 = vmatprep.subr.mxu0 0.0
      %2183 = vmatpush2.msra.mxu0 0.0
      %2184 = vmatprep.subr.mxu0 0.0
      %2185 = vmatpush2.msra.mxu0 0.0
      %2186 = vmatprep.mubr.f32.mxu0 0.0
      %2187 = vmatmul.mubr.f32.gmra.mxu0 %v2120
      %v2188 = vpop.f32.mrf.mxu0
      %v2189 = vadd.f32 %v2116, %v2188
      %v2190 = vpop.f32.mrf.mxu0
      %2191 = vdwg.mxu0
      %v2192 = vadd.f32 %v1992, %v2189
      %2193 = vst.msk [vmem:[%s702] sm:$0xff] %vm704, %v2192
      %p2194 = scmp.lt.s32.totalorder %s32, 1
      %s2195 = scalar_select %p2194, %s32, 1
      %s2196 = smul.addr %s2195, 8
      %s2197 = scalar_lea.vmem %s21, %s2196
      // Predicated region
      $region105: #{decoder_forward.4} parent=103 // pred_check
        %p2198 = pneg %p511
      $region106: #{decoder_forward.4} parent=103 // pred_check_branch
        %2200 = sbr.rel (%p2198) target = $region108
      $region107: #{decoder_forward.4} parent=103 // pred_region
        _
      $region108: #{decoder_forward.4} parent=103 // pred_fallthru
        _
    $region104: #{decoder_forward.4} parent=5 // pred_fallthru
      _
    %p2201 = scmp.le.s32.totalorder 2, %s27
    // Predicated region
    $region109: #{decoder_forward.4} parent=5 // pred_check
      %p2202 = pneg %p2201
    $region110: #{decoder_forward.4} parent=5 // pred_check_branch
      %2204 = sbr.rel (%p2202) target = $region112
    $region111: #{decoder_forward.4} parent=5 // pred_region
      %s2205 = ssub.s32 %s27, 2
      // Predicated region
      $region113: #{decoder_forward.4} parent=111 // pred_check
        %p2206 = pneg %p517
      $region114: #{decoder_forward.4} parent=111 // pred_check_branch
        %2208 = sbr.rel (%p2206) target = $region116
      $region115: #{decoder_forward.4} parent=111 // pred_region
        %p2209 = scmp.lt.s32.totalorder %s33, 1
        %s2210 = scalar_select %p2209, %s33, 1
        %s2211 = smul.addr %s2210, 8
        %s2212 = scalar_lea.vmem %s21, %s2211
      $region116: #{decoder_forward.4} parent=111 // pred_fallthru
        _
    $region112: #{decoder_forward.4} parent=5 // pred_fallthru
      _
  $region6: #{decoder_forward.4} parent=0 // loop_footer
    %s31 = sadd.s32 1, %s27
  $region7: #{decoder_forward.4} parent=0 // loop_footer_branch
    %26 = sbr.rel target = $region3
  $region8: #{decoder_forward.4} parent=0 // loop_exit
    _

</llo_original>
